<compile_context>
chip_gen: v7x
topology: tpu7x:2x2x1
jax: 0.10.0
libtpu: 0.0.40
codegen_flags: <defaults>
</compile_context>

<pallas_src>
import functools
import jax
import jax.numpy as jnp
from jax.experimental import pallas as pl
from jax.experimental.pallas import tpu as pltpu


# ----------------------------------------------------------------------------
# Pallas tiled matmul + bias (+ optional fused activation) kernels
# ----------------------------------------------------------------------------
def _matmul_bias_kernel_single_k(a_ref, b_ref, bias_ref, o_ref, *, activation):
    # One K step: no accumulator scratch, no read-modify-write.
    r = jnp.dot(a_ref[...], b_ref[...], preferred_element_type=jnp.float32)
    r = r + bias_ref[...]
    if activation == "relu":
        r = jnp.maximum(r, 0.0)
    elif activation == "tanh":
        r = jnp.tanh(r)
    o_ref[...] = r.astype(o_ref.dtype)


def _matmul_bias_kernel_multi_k(a_ref, b_ref, bias_ref, o_ref, acc_ref, *,
                                activation):
    @pl.when(pl.program_id(2) == 0)
    def _():
        acc_ref[...] = jnp.zeros_like(acc_ref)

    acc_ref[...] += jnp.dot(a_ref[...], b_ref[...],
                            preferred_element_type=jnp.float32)

    @pl.when(pl.program_id(2) == pl.num_programs(2) - 1)
    def _():
        r = acc_ref[...] + bias_ref[...]
        if activation == "relu":
            r = jnp.maximum(r, 0.0)
        elif activation == "tanh":
            r = jnp.tanh(r)
        o_ref[...] = r.astype(o_ref.dtype)


def _round_up(x, m):
    return (x + m - 1) // m * m


def pallas_matmul_bias(a, b, bias, activation=None):
    """a:(M,K), b:(K,N), bias:(N,) -> (M,N) bf16. bf16 MXU operands, f32 acc."""
    M, K = a.shape
    K2, N = b.shape
    assert K == K2

    # --- tile selection -----------------------------------------------------
    # K: a single full-K step whenever the padded K fits comfortably in VMEM
    # (max K in this model is 1152).  Otherwise fall back to 512-wide K tiles.
    pK128 = _round_up(K, 128)
    TK = pK128 if pK128 <= 1280 else 512
    pK = _round_up(K, TK)
    # N: lane-aligned, 128 or 256.
    pN128 = _round_up(N, 128)
    TN = pN128 if pN128 <= 256 else 256
    pN = _round_up(N, TN)
    # M: multiple of 16 (bf16 sublane packing); cap 512 for large M, else 256.
    pM16 = _round_up(M, 16)
    m_cap = 512 if pM16 >= 1024 else 256
    TM = pM16 if pM16 <= m_cap else m_cap
    pM = _round_up(M, TM)
    # v7x megacore: guarantee at least 2 parallel output blocks when possible.
    if (pM // TM) * (pN // TN) < 2 and TM >= 128 and TM % 32 == 0:
        TM //= 2

    # --- operand prep (edge-only pads, bf16 MXU operands, f32 bias) ----------
    a_bf = a if a.dtype == jnp.bfloat16 else a.astype(jnp.bfloat16)
    if pM != M or pK != K:
        a_bf = jnp.pad(a_bf, ((0, pM - M), (0, pK - K)))
    b_bf = b if b.dtype == jnp.bfloat16 else b.astype(jnp.bfloat16)
    if pK != K or pN != N:
        b_bf = jnp.pad(b_bf, ((0, pK - K), (0, pN - N)))
    bias_p = jnp.pad(bias.astype(jnp.float32), (0, pN - N)).reshape(1, pN)

    n_k = pK // TK
    if n_k == 1:
        kernel = functools.partial(_matmul_bias_kernel_single_k,
                                   activation=activation)
        out = pl.pallas_call(
            kernel,
            out_shape=jax.ShapeDtypeStruct((pM, pN), jnp.bfloat16),
            grid_spec=pltpu.PrefetchScalarGridSpec(
                num_scalar_prefetch=0,
                grid=(pM // TM, pN // TN),
                in_specs=[
                    pl.BlockSpec((TM, TK), lambda i, j: (i, 0)),
                    pl.BlockSpec((TK, TN), lambda i, j: (0, j)),
                    pl.BlockSpec((1, TN), lambda i, j: (0, j)),
                ],
                out_specs=pl.BlockSpec((TM, TN), lambda i, j: (i, j)),
            ),
            compiler_params=pltpu.CompilerParams(
                dimension_semantics=("parallel", "parallel")),
        )(a_bf, b_bf, bias_p)
    else:
        kernel = functools.partial(_matmul_bias_kernel_multi_k,
                                   activation=activation)
        out = pl.pallas_call(
            kernel,
            out_shape=jax.ShapeDtypeStruct((pM, pN), jnp.bfloat16),
            grid_spec=pltpu.PrefetchScalarGridSpec(
                num_scalar_prefetch=0,
                grid=(pM // TM, pN // TN, n_k),
                in_specs=[
                    pl.BlockSpec((TM, TK), lambda i, j, k: (i, k)),
                    pl.BlockSpec((TK, TN), lambda i, j, k: (k, j)),
                    pl.BlockSpec((1, TN), lambda i, j, k: (0, j)),
                ],
                out_specs=pl.BlockSpec((TM, TN), lambda i, j, k: (i, j)),
                scratch_shapes=[pltpu.VMEM((TM, TN), jnp.float32)],
            ),
            compiler_params=pltpu.CompilerParams(
                dimension_semantics=("parallel", "parallel", "arbitrary")),
        )(a_bf, b_bf, bias_p)

    if pM != M or pN != N:
        out = out[:M, :N]
    return out


def matmul_bias(a, w_mat, b, activation=None):
    """Route to the Pallas kernel only when the matmul can fill the MXU."""
    M, _ = a.shape
    N = w_mat.shape[1]
    if M >= 128 and N >= 32:
        return pallas_matmul_bias(a, w_mat, b, activation)   # bf16 out
    # Tiny / thin matmuls: plain XLA dot, f32 accumulate, f32 out.
    out = jnp.dot(a, w_mat, preferred_element_type=jnp.float32)
    out = out.astype(jnp.float32) + b
    if activation == "relu":
        out = jnp.maximum(out, 0.0)
    elif activation == "tanh":
        out = jnp.tanh(out)
    return out


# ----------------------------------------------------------------------------
# NHWC layer helpers built on the shared matmul
# ----------------------------------------------------------------------------
def conv2d(x, w_mat, b, k, stride=1, padding=0, pad_mode="zero", activation=None):
    """NHWC conv. x:(N,H,W,C); w_mat:(k*k*C, Cout) pre-packed in (ky,kx,cin) order."""
    N, H, W, C = x.shape
    x = x.astype(jnp.bfloat16)   # cast before im2col so pad/slice/cast fuse
    if padding > 0:
        pw = ((0, 0), (padding, padding), (padding, padding), (0, 0))
        x = jnp.pad(x, pw, mode="reflect" if pad_mode == "reflect" else "constant")
    Hp, Wp = x.shape[1], x.shape[2]
    Ho = (Hp - k) // stride + 1
    Wo = (Wp - k) // stride + 1
    cols = []
    for i in range(k):
        for j in range(k):
            cols.append(x[:, i:i + stride * Ho:stride, j:j + stride * Wo:stride, :])
    patches = jnp.concatenate(cols, axis=-1)              # (N,Ho,Wo,k*k*C) bf16
    a = patches.reshape(N * Ho * Wo, k * k * C)
    out = matmul_bias(a, w_mat, b, activation)            # (N*Ho*Wo, Cout)
    return out.reshape(N, Ho, Wo, -1)


def conv_transpose2d_s2k3(x, w_big, b_big):
    """Sub-pixel ConvTranspose2d(k=3, stride=2, padding=1, output_padding=1), NHWC.
    w_big:(4*Cin, 4*Cout) packed as (dy,dx,cin) x (ry,rx,cout); output (N,2H,2W,Cout)."""
    N, H, W, C = x.shape
    Cout = w_big.shape[1] // 4
    xp = jnp.pad(x.astype(jnp.bfloat16), ((0, 0), (0, 1), (0, 1), (0, 0)))
    cols = []
    for dy in range(2):
        for dx in range(2):
            cols.append(xp[:, dy:dy + H, dx:dx + W, :])
    a = jnp.concatenate(cols, axis=-1).reshape(N * H * W, 4 * C)
    out = matmul_bias(a, w_big, b_big)                    # (N*H*W, 4*Cout)
    out = out.reshape(N, H, W, 2, 2, Cout)
    out = out.transpose(0, 1, 3, 2, 4, 5).reshape(N, 2 * H, 2 * W, Cout)
    return out


def batch_norm(x, eps=1e-5):
    # nn.BatchNorm2d training mode, affine at init (gamma=1, beta=0), NHWC axes.
    xf = x.astype(jnp.float32)
    mean = xf.mean(axis=(0, 1, 2), keepdims=True)
    var = xf.var(axis=(0, 1, 2), keepdims=True)            # biased variance
    return ((xf - mean) * jax.lax.rsqrt(var + eps)).astype(x.dtype)


def relu(x):
    return jnp.maximum(x, jnp.zeros((), x.dtype))


def avg_pool_3s2p1(x):
    # nn.AvgPool2d(3, stride=2, padding=1, count_include_pad=False), NHWC.
    N, H, W, C = x.shape
    xp = jnp.pad(x, ((0, 0), (1, 1), (1, 1), (0, 0)))
    ones = jnp.pad(jnp.ones((1, H, W, 1), x.dtype), ((0, 0), (1, 1), (1, 1), (0, 0)))
    Ho = (H + 2 - 3) // 2 + 1
    Wo = (W + 2 - 3) // 2 + 1
    s = jnp.zeros((N, Ho, Wo, C), x.dtype)
    cnt = jnp.zeros((1, Ho, Wo, 1), x.dtype)
    for i in range(3):
        for j in range(3):
            s = s + xp[:, i:i + 2 * Ho:2, j:j + 2 * Wo:2, :]
            cnt = cnt + ones[:, i:i + 2 * Ho:2, j:j + 2 * Wo:2, :]
    return s / cnt


def style_mod(x, latent, w, b):
    """StyleMod: EqualizedLinear (use_wscale=False -> w_mul=1) + modulation.
    Thin (M=batch) matmul -> plain XLA dot by design; math in f32."""
    style = jnp.dot(latent, w.T, preferred_element_type=jnp.float32) + b
    Nb, C = x.shape[0], x.shape[-1]
    style = style.reshape(Nb, 1, 1, 2, C)
    out = x.astype(jnp.float32) * (style[..., 0, :] + 1.0) + style[..., 1, :]
    return out.astype(x.dtype)


def resnet_block(x, latent, p):
    h = conv2d(x, p["c1_w"], p["c1_b"], 3, padding=1, pad_mode="reflect")
    h = relu(batch_norm(h))
    h = conv2d(h, p["c2_w"], p["c2_b"], 3, padding=1, pad_mode="reflect")
    h = batch_norm(h)
    out = x.astype(h.dtype) + h
    out = style_mod(out, latent, p["style_w"], p["style_b"])
    return out


# ----------------------------------------------------------------------------
# Weight packing (done ONCE at init, not per forward / per conv call)
# ----------------------------------------------------------------------------
def _pack_conv(w, b):
    # PyTorch Conv2d weight (Cout,Cin,kh,kw) -> (kh*kw*Cin, Cout) matching NHWC im2col.
    cout, cin, kh, kw = w.shape
    w_mat = jnp.transpose(w, (2, 3, 1, 0)).reshape(kh * kw * cin, cout)
    return w_mat.astype(jnp.bfloat16), b.astype(jnp.float32)


def _pack_convT(w, b):
    # PyTorch ConvTranspose2d weight (Cin,Cout,3,3) -> sub-pixel matmul weight
    # (4*Cin, 4*Cout): K order (dy,dx,cin), N order (ry,rx,cout).
    cin, cout = w.shape[0], w.shape[1]
    wb = jnp.zeros((2, 2, cin, 2, 2, cout), jnp.float32)
    wb = wb.at[0, 0, :, 0, 0, :].set(w[:, :, 1, 1])   # even row, even col
    wb = wb.at[0, 1, :, 0, 1, :].set(w[:, :, 1, 0])   # even row, odd col
    wb = wb.at[0, 0, :, 0, 1, :].set(w[:, :, 1, 2])
    wb = wb.at[1, 0, :, 1, 0, :].set(w[:, :, 0, 1])   # odd row, even col
    wb = wb.at[0, 0, :, 1, 0, :].set(w[:, :, 2, 1])
    wb = wb.at[1, 1, :, 1, 1, :].set(w[:, :, 0, 0])   # odd row, odd col
    wb = wb.at[1, 0, :, 1, 1, :].set(w[:, :, 0, 2])
    wb = wb.at[0, 1, :, 1, 1, :].set(w[:, :, 2, 0])
    wb = wb.at[0, 0, :, 1, 1, :].set(w[:, :, 2, 2])
    return (wb.reshape(4 * cin, 4 * cout).astype(jnp.bfloat16),
            jnp.tile(b.astype(jnp.float32), 4))


# ----------------------------------------------------------------------------
# Model configuration (small but structurally faithful)
# ----------------------------------------------------------------------------
CFG = dict(
    input_nc=3, output_nc=3, ngf=16,
    n_downsample_global=2, n_blocks_global=2,
    n_local_enhancers=1, n_blocks_local=2,
    num_client=2, latent_size=2048,
)


def init_params(key):
    cfg = CFG
    keys = [key]

    def nxt():
        keys[0], sub = jax.random.split(keys[0])
        return sub

    def conv_p(cin, cout, k):
        fan = cin * k * k
        w = jax.random.normal(nxt(), (cout, cin, k, k), jnp.float32) * (0.5 / fan ** 0.5)
        b = jax.random.normal(nxt(), (cout,), jnp.float32) * 0.01
        return _pack_conv(w, b)

    def convT_p(cin, cout):
        fan = cin * 9
        w = jax.random.normal(nxt(), (cin, cout, 3, 3), jnp.float32) * (0.5 / fan ** 0.5)
        b = jax.random.normal(nxt(), (cout,), jnp.float32) * 0.01
        return _pack_convT(w, b)

    def style_p(channels, latent):
        # EqualizedLinear(latent, 2*channels, gain=1.0, use_wscale=False)
        return (jax.random.normal(nxt(), (2 * channels, latent), jnp.float32) * latent ** -0.5,
                jnp.zeros((2 * channels,), jnp.float32))

    latent = cfg["latent_size"]
    ngf = cfg["ngf"]
    n_le = cfg["n_local_enhancers"]
    nd = cfg["n_downsample_global"]
    params = {}

    # class_embedding: Linear(num_client, latent_size)
    params["emb_w"] = jax.random.normal(nxt(), (latent, cfg["num_client"]),
                                        jnp.float32) * cfg["num_client"] ** -0.5
    params["emb_b"] = jax.random.normal(nxt(), (latent,), jnp.float32) * 0.01

    # GlobalGenerator (ngf_global = ngf * 2**n_local_enhancers)
    ngf_g = ngf * 2 ** n_le
    g = {}
    g["d0_w"], g["d0_b"] = conv_p(cfg["input_nc"], ngf_g, 7)
    for i in range(nd):
        g[f"dd{i}_w"], g[f"dd{i}_b"] = conv_p(ngf_g * 2 ** i, ngf_g * 2 ** (i + 1), 3)
    dim = ngf_g * 2 ** nd
    for i in range(cfg["n_blocks_global"]):
        blk = {}
        blk["c1_w"], blk["c1_b"] = conv_p(dim, dim, 3)
        blk["c2_w"], blk["c2_b"] = conv_p(dim, dim, 3)
        blk["style_w"], blk["style_b"] = style_p(dim, latent)
        g[f"r{i}"] = blk
    for i in range(nd):
        mult = 2 ** (nd - i)
        g[f"u{i}_w"], g[f"u{i}_b"] = convT_p(ngf_g * mult, (ngf_g * mult) // 2)
    params["global"] = g

    # Local enhancer branches
    for n in range(1, n_le + 1):
        ngf_l = ngf * 2 ** (n_le - n)
        p1 = {}
        p1["c0_w"], p1["c0_b"] = conv_p(cfg["input_nc"], ngf_l, 7)
        p1["c1_w"], p1["c1_b"] = conv_p(ngf_l, ngf_l * 2, 3)
        p1["style_w"], p1["style_b"] = style_p(ngf_l * 2, latent)
        params[f"m{n}_1"] = p1

        p2 = {}
        dim_l = ngf_l * 2
        for i in range(cfg["n_blocks_local"]):
            blk = {}
            blk["c1_w"], blk["c1_b"] = conv_p(dim_l, dim_l, 3)
            blk["c2_w"], blk["c2_b"] = conv_p(dim_l, dim_l, 3)
            # local ResnetBlocks hard-code dlatent_size=2048 in the module
            blk["style_w"], blk["style_b"] = style_p(dim_l, 2048)
            p2[f"r{i}"] = blk
        p2["ct_w"], p2["ct_b"] = convT_p(dim_l, ngf_l)
        if n == n_le:
            p2["cf_w"], p2["cf_b"] = conv_p(ngf, cfg["output_nc"], 7)
        params[f"m{n}_2"] = p2

    return params


# ----------------------------------------------------------------------------
# Forward passes (NHWC + bf16 internally; NCHW f32 at the public boundary)
# ----------------------------------------------------------------------------
def global_generator_forward(x, latent, g):
    cfg = CFG
    nd = cfg["n_downsample_global"]
    h = conv2d(x, g["d0_w"], g["d0_b"], 7, padding=3, pad_mode="reflect")
    h = relu(batch_norm(h))
    for i in range(nd):
        h = conv2d(h, g[f"dd{i}_w"], g[f"dd{i}_b"], 3, stride=2, padding=1)
        h = relu(batch_norm(h))
    for i in range(cfg["n_blocks_global"]):
        h = resnet_block(h, latent, g[f"r{i}"])
    for i in range(nd):
        h = conv_transpose2d_s2k3(h, g[f"u{i}_w"], g[f"u{i}_b"])
        h = relu(batch_norm(h))
    return h


def local_enhancer_forward(params, x_nchw, class_idx):
    cfg = CFG
    n_le = cfg["n_local_enhancers"]

    x = jnp.transpose(x_nchw, (0, 2, 3, 1))   # NCHW -> NHWC, once at entry

    input_downsampled = [x]
    for _ in range(n_le):
        input_downsampled.append(avg_pool_3s2p1(input_downsampled[-1]))

    onehot = jax.nn.one_hot(class_idx, cfg["num_client"], dtype=jnp.float32)
    # thin (M=batch, K=num_client) matmul -> plain XLA dot by design
    embedding = jnp.dot(onehot, params["emb_w"].T) + params["emb_b"]

    output_prev = global_generator_forward(input_downsampled[-1], embedding,
                                           params["global"])

    for n in range(1, n_le + 1):
        p1 = params[f"m{n}_1"]
        p2 = params[f"m{n}_2"]
        xi = input_downsampled[n_le - n]

        # model_downsample: ReflectionPad3, Conv7, BN, ReLU, Conv3 s2, BN, StyleMod, ReLU
        h = conv2d(xi, p1["c0_w"], p1["c0_b"], 7, padding=3, pad_mode="reflect")
        h = relu(batch_norm(h))
        h = conv2d(h, p1["c1_w"], p1["c1_b"], 3, stride=2, padding=1)
        h = batch_norm(h)
        h = style_mod(h, embedding, p1["style_w"], p1["style_b"])
        h = relu(h)

        output_prev = h + output_prev.astype(h.dtype)

        # model_upsample: ResnetBlocks, ConvTranspose, BN, ReLU, [final conv7 + tanh]
        for i in range(cfg["n_blocks_local"]):
            output_prev = resnet_block(output_prev, embedding, p2[f"r{i}"])
        output_prev = conv_transpose2d_s2k3(output_prev, p2["ct_w"], p2["ct_b"])
        output_prev = relu(batch_norm(output_prev))
        if n == n_le:
            output_prev = conv2d(output_prev, p2["cf_w"], p2["cf_b"], 7,
                                 padding=3, pad_mode="reflect", activation="tanh")
    out = output_prev.astype(jnp.float32)
    return jnp.transpose(out, (0, 3, 1, 2))   # NHWC -> NCHW at exit


# ----------------------------------------------------------------------------
if __name__ == "__main__":
    key = jax.random.PRNGKey(0)
    pkey, xkey = jax.random.split(key)
    params = init_params(pkey)

    batch, H, W = 2, 32, 32
    x = jax.random.normal(xkey, (batch, CFG["input_nc"], H, W), jnp.float32)
    class_ = jnp.array([0, 1], dtype=jnp.int32)

    fwd = jax.jit(local_enhancer_forward)
    out = fwd(params, x, class_)
    out = jax.block_until_ready(out)

    assert out.shape == (batch, CFG["output_nc"], H, W), out.shape
    assert bool(jnp.all(jnp.isfinite(out)))
    print("KERNEL_OK")
</pallas_src>

<mosaic_0001>
module attributes {stable_mosaic.version = 11 : i64} {
  func.func @_matmul_bias_kernel_single_k(%arg0: i32, %arg1: i32, %arg2: memref<256x256xbf16, #tpu.memory_space<vmem>>, %arg3: memref<256x128xbf16, #tpu.memory_space<vmem>>, %arg4: memref<1x128xf32, #tpu.memory_space<vmem>>, %arg5: memref<256x128xbf16, #tpu.memory_space<vmem>>) attributes {dimension_semantics = [#tpu.dimension_semantics<parallel>, #tpu.dimension_semantics<parallel>], iteration_bounds = array<i64: 2, 1>, scalar_prefetch = 0 : i64, scratch_operands = 0 : i64, tpu.core_type = #tpu.core_type<tc>, window_params = [{transform_indices = @transform_0, window_bounds = array<i64: 256, 256>}, {transform_indices = @transform_1, window_bounds = array<i64: 256, 128>}, {transform_indices = @transform_2, window_bounds = array<i64: 1, 128>}, {transform_indices = @transform_3, window_bounds = array<i64: 256, 128>}]} {
    %c0 = arith.constant 0 : index
    %c0_0 = arith.constant 0 : index
    %0 = vector.load %arg2[%c0, %c0_0] : memref<256x256xbf16, #tpu.memory_space<vmem>>, vector<256x256xbf16>
    %c0_1 = arith.constant 0 : index
    %c0_2 = arith.constant 0 : index
    %1 = vector.load %arg3[%c0_1, %c0_2] : memref<256x128xbf16, #tpu.memory_space<vmem>>, vector<256x128xbf16>
    %cst = arith.constant dense<0.000000e+00> : vector<256x128xf32>
    %2 = tpu.matmul %0, %1, %cst {dimension_numbers = #tpu.dot_dimension_numbers<[1], [0], [0], [1], [0, 0, 1, 1], [], []>} : vector<256x256xbf16>, vector<256x128xbf16>, vector<256x128xf32> -> vector<256x128xf32>
    %c0_3 = arith.constant 0 : index
    %c0_4 = arith.constant 0 : index
    %3 = vector.load %arg4[%c0_3, %c0_4] : memref<1x128xf32, #tpu.memory_space<vmem>>, vector<1x128xf32>
    %4 = vector.broadcast %3 : vector<1x128xf32> to vector<256x128xf32>
    %5 = arith.addf %2, %4 : vector<256x128xf32>
    %6 = arith.truncf %5 : vector<256x128xf32> to vector<256x128xbf16>
    %c0_5 = arith.constant 0 : index
    %c0_6 = arith.constant 0 : index
    %7 = vector.load %arg5[%c0_5, %c0_6] : memref<256x128xbf16, #tpu.memory_space<vmem>>, vector<256x128xbf16>
    tpu.vector_store %arg5[%c0_5, %c0_6], %6 {strides = array<i32>} : memref<256x128xbf16, #tpu.memory_space<vmem>>, vector<256x128xbf16>,
    return
  }
  func.func @transform_0(%arg0: i32, %arg1: i32) -> (i32, i32) {
    %c0_i32 = arith.constant 0 : i32
    %c0_i32_0 = arith.constant 0 : i32
    return %arg0, %c0_i32 : i32, i32
  }
  func.func @transform_1(%arg0: i32, %arg1: i32) -> (i32, i32) {
    %c0_i32 = arith.constant 0 : i32
    %c0_i32_0 = arith.constant 0 : i32
    return %c0_i32, %arg1 : i32, i32
  }
  func.func @transform_2(%arg0: i32, %arg1: i32) -> (i32, i32) {
    %c0_i32 = arith.constant 0 : i32
    %c0_i32_0 = arith.constant 0 : i32
    return %c0_i32, %arg1 : i32, i32
  }
  func.func @transform_3(%arg0: i32, %arg1: i32) -> (i32, i32) {
    %c0_i32 = arith.constant 0 : i32
    return %arg0, %arg1 : i32, i32
  }
}

module attributes {stable_mosaic.version = 11 : i64} {
  func.func @_matmul_bias_kernel_single_k(%arg0: i32, %arg1: i32, %arg2: memref<64x384xbf16, #tpu.memory_space<vmem>>, %arg3: memref<384x128xbf16, #tpu.memory_space<vmem>>, %arg4: memref<1x128xf32, #tpu.memory_space<vmem>>, %arg5: memref<64x128xbf16, #tpu.memory_space<vmem>>) attributes {dimension_semantics = [#tpu.dimension_semantics<parallel>, #tpu.dimension_semantics<parallel>], iteration_bounds = array<i64: 2, 1>, scalar_prefetch = 0 : i64, scratch_operands = 0 : i64, tpu.core_type = #tpu.core_type<tc>, window_params = [{transform_indices = @transform_0, window_bounds = array<i64: 64, 384>}, {transform_indices = @transform_1, window_bounds = array<i64: 384, 128>}, {transform_indices = @transform_2, window_bounds = array<i64: 1, 128>}, {transform_indices = @transform_3, window_bounds = array<i64: 64, 128>}]} {
    %c0 = arith.constant 0 : index
    %c0_0 = arith.constant 0 : index
    %0 = vector.load %arg2[%c0, %c0_0] : memref<64x384xbf16, #tpu.memory_space<vmem>>, vector<64x384xbf16>
    %c0_1 = arith.constant 0 : index
    %c0_2 = arith.constant 0 : index
    %1 = vector.load %arg3[%c0_1, %c0_2] : memref<384x128xbf16, #tpu.memory_space<vmem>>, vector<384x128xbf16>
    %cst = arith.constant dense<0.000000e+00> : vector<64x128xf32>
    %2 = tpu.matmul %0, %1, %cst {dimension_numbers = #tpu.dot_dimension_numbers<[1], [0], [0], [1], [0, 0, 1, 1], [], []>} : vector<64x384xbf16>, vector<384x128xbf16>, vector<64x128xf32> -> vector<64x128xf32>
    %c0_3 = arith.constant 0 : index
    %c0_4 = arith.constant 0 : index
    %3 = vector.load %arg4[%c0_3, %c0_4] : memref<1x128xf32, #tpu.memory_space<vmem>>, vector<1x128xf32>
    %4 = vector.broadcast %3 : vector<1x128xf32> to vector<64x128xf32>
    %5 = arith.addf %2, %4 : vector<64x128xf32>
    %6 = arith.truncf %5 : vector<64x128xf32> to vector<64x128xbf16>
    %c0_5 = arith.constant 0 : index
    %c0_6 = arith.constant 0 : index
    %7 = vector.load %arg5[%c0_5, %c0_6] : memref<64x128xbf16, #tpu.memory_space<vmem>>, vector<64x128xbf16>
    tpu.vector_store %arg5[%c0_5, %c0_6], %6 {strides = array<i32>} : memref<64x128xbf16, #tpu.memory_space<vmem>>, vector<64x128xbf16>,
    return
  }
  func.func @transform_0(%arg0: i32, %arg1: i32) -> (i32, i32) {
    %c0_i32 = arith.constant 0 : i32
    %c0_i32_0 = arith.constant 0 : i32
    return %arg0, %c0_i32 : i32, i32
  }
  func.func @transform_1(%arg0: i32, %arg1: i32) -> (i32, i32) {
    %c0_i32 = arith.constant 0 : i32
    %c0_i32_0 = arith.constant 0 : i32
    return %c0_i32, %arg1 : i32, i32
  }
  func.func @transform_2(%arg0: i32, %arg1: i32) -> (i32, i32) {
    %c0_i32 = arith.constant 0 : i32
    %c0_i32_0 = arith.constant 0 : i32
    return %c0_i32, %arg1 : i32, i32
  }
  func.func @transform_3(%arg0: i32, %arg1: i32) -> (i32, i32) {
    %c0_i32 = arith.constant 0 : i32
    return %arg0, %arg1 : i32, i32
  }
}

module attributes {stable_mosaic.version = 11 : i64} {
  func.func @_matmul_bias_kernel_single_k(%arg0: i32, %arg1: i32, %arg2: memref<64x256xbf16, #tpu.memory_space<vmem>>, %arg3: memref<256x128xbf16, #tpu.memory_space<vmem>>, %arg4: memref<1x128xf32, #tpu.memory_space<vmem>>, %arg5: memref<64x128xbf16, #tpu.memory_space<vmem>>) attributes {dimension_semantics = [#tpu.dimension_semantics<parallel>, #tpu.dimension_semantics<parallel>], iteration_bounds = array<i64: 2, 1>, scalar_prefetch = 0 : i64, scratch_operands = 0 : i64, tpu.core_type = #tpu.core_type<tc>, window_params = [{transform_indices = @transform_0, window_bounds = array<i64: 64, 256>}, {transform_indices = @transform_1, window_bounds = array<i64: 256, 128>}, {transform_indices = @transform_2, window_bounds = array<i64: 1, 128>}, {transform_indices = @transform_3, window_bounds = array<i64: 64, 128>}]} {
    %c0 = arith.constant 0 : index
    %c0_0 = arith.constant 0 : index
    %0 = vector.load %arg2[%c0, %c0_0] : memref<64x256xbf16, #tpu.memory_space<vmem>>, vector<64x256xbf16>
    %c0_1 = arith.constant 0 : index
    %c0_2 = arith.constant 0 : index
    %1 = vector.load %arg3[%c0_1, %c0_2] : memref<256x128xbf16, #tpu.memory_space<vmem>>, vector<256x128xbf16>
    %cst = arith.constant dense<0.000000e+00> : vector<64x128xf32>
    %2 = tpu.matmul %0, %1, %cst {dimension_numbers = #tpu.dot_dimension_numbers<[1], [0], [0], [1], [0, 0, 1, 1], [], []>} : vector<64x256xbf16>, vector<256x128xbf16>, vector<64x128xf32> -> vector<64x128xf32>
    %c0_3 = arith.constant 0 : index
    %c0_4 = arith.constant 0 : index
    %3 = vector.load %arg4[%c0_3, %c0_4] : memref<1x128xf32, #tpu.memory_space<vmem>>, vector<1x128xf32>
    %4 = vector.broadcast %3 : vector<1x128xf32> to vector<64x128xf32>
    %5 = arith.addf %2, %4 : vector<64x128xf32>
    %6 = arith.truncf %5 : vector<64x128xf32> to vector<64x128xbf16>
    %c0_5 = arith.constant 0 : index
    %c0_6 = arith.constant 0 : index
    %7 = vector.load %arg5[%c0_5, %c0_6] : memref<64x128xbf16, #tpu.memory_space<vmem>>, vector<64x128xbf16>
    tpu.vector_store %arg5[%c0_5, %c0_6], %6 {strides = array<i32>} : memref<64x128xbf16, #tpu.memory_space<vmem>>, vector<64x128xbf16>,
    return
  }
  func.func @transform_0(%arg0: i32, %arg1: i32) -> (i32, i32) {
    %c0_i32 = arith.constant 0 : i32
    %c0_i32_0 = arith.constant 0 : i32
    return %arg0, %c0_i32 : i32, i32
  }
  func.func @transform_1(%arg0: i32, %arg1: i32) -> (i32, i32) {
    %c0_i32 = arith.constant 0 : i32
    %c0_i32_0 = arith.constant 0 : i32
    return %c0_i32, %arg1 : i32, i32
  }
  func.func @transform_2(%arg0: i32, %arg1: i32) -> (i32, i32) {
    %c0_i32 = arith.constant 0 : i32
    %c0_i32_0 = arith.constant 0 : i32
    return %c0_i32, %arg1 : i32, i32
  }
  func.func @transform_3(%arg0: i32, %arg1: i32) -> (i32, i32) {
    %c0_i32 = arith.constant 0 : i32
    return %arg0, %arg1 : i32, i32
  }
}

module attributes {stable_mosaic.version = 11 : i64} {
  func.func @_matmul_bias_kernel_single_k(%arg0: i32, %arg1: i32, %arg2: memref<256x384xbf16, #tpu.memory_space<vmem>>, %arg3: memref<384x128xbf16, #tpu.memory_space<vmem>>, %arg4: memref<1x128xf32, #tpu.memory_space<vmem>>, %arg5: memref<256x128xbf16, #tpu.memory_space<vmem>>) attributes {dimension_semantics = [#tpu.dimension_semantics<parallel>, #tpu.dimension_semantics<parallel>], iteration_bounds = array<i64: 2, 1>, scalar_prefetch = 0 : i64, scratch_operands = 0 : i64, tpu.core_type = #tpu.core_type<tc>, window_params = [{transform_indices = @transform_0, window_bounds = array<i64: 256, 384>}, {transform_indices = @transform_1, window_bounds = array<i64: 384, 128>}, {transform_indices = @transform_2, window_bounds = array<i64: 1, 128>}, {transform_indices = @transform_3, window_bounds = array<i64: 256, 128>}]} {
    %c0 = arith.constant 0 : index
    %c0_0 = arith.constant 0 : index
    %0 = vector.load %arg2[%c0, %c0_0] : memref<256x384xbf16, #tpu.memory_space<vmem>>, vector<256x384xbf16>
    %c0_1 = arith.constant 0 : index
    %c0_2 = arith.constant 0 : index
    %1 = vector.load %arg3[%c0_1, %c0_2] : memref<384x128xbf16, #tpu.memory_space<vmem>>, vector<384x128xbf16>
    %cst = arith.constant dense<0.000000e+00> : vector<256x128xf32>
    %2 = tpu.matmul %0, %1, %cst {dimension_numbers = #tpu.dot_dimension_numbers<[1], [0], [0], [1], [0, 0, 1, 1], [], []>} : vector<256x384xbf16>, vector<384x128xbf16>, vector<256x128xf32> -> vector<256x128xf32>
    %c0_3 = arith.constant 0 : index
    %c0_4 = arith.constant 0 : index
    %3 = vector.load %arg4[%c0_3, %c0_4] : memref<1x128xf32, #tpu.memory_space<vmem>>, vector<1x128xf32>
    %4 = vector.broadcast %3 : vector<1x128xf32> to vector<256x128xf32>
    %5 = arith.addf %2, %4 : vector<256x128xf32>
    %6 = arith.truncf %5 : vector<256x128xf32> to vector<256x128xbf16>
    %c0_5 = arith.constant 0 : index
    %c0_6 = arith.constant 0 : index
    %7 = vector.load %arg5[%c0_5, %c0_6] : memref<256x128xbf16, #tpu.memory_space<vmem>>, vector<256x128xbf16>
    tpu.vector_store %arg5[%c0_5, %c0_6], %6 {strides = array<i32>} : memref<256x128xbf16, #tpu.memory_space<vmem>>, vector<256x128xbf16>,
    return
  }
  func.func @transform_0(%arg0: i32, %arg1: i32) -> (i32, i32) {
    %c0_i32 = arith.constant 0 : i32
    %c0_i32_0 = arith.constant 0 : i32
    return %arg0, %c0_i32 : i32, i32
  }
  func.func @transform_1(%arg0: i32, %arg1: i32) -> (i32, i32) {
    %c0_i32 = arith.constant 0 : i32
    %c0_i32_0 = arith.constant 0 : i32
    return %c0_i32, %arg1 : i32, i32
  }
  func.func @transform_2(%arg0: i32, %arg1: i32) -> (i32, i32) {
    %c0_i32 = arith.constant 0 : i32
    %c0_i32_0 = arith.constant 0 : i32
    return %c0_i32, %arg1 : i32, i32
  }
  func.func @transform_3(%arg0: i32, %arg1: i32) -> (i32, i32) {
    %c0_i32 = arith.constant 0 : i32
    return %arg0, %arg1 : i32, i32
  }
}

module attributes {stable_mosaic.version = 11 : i64} {
  func.func @_matmul_bias_kernel_single_k(%arg0: i32, %arg1: i32, %arg2: memref<256x128xbf16, #tpu.memory_space<vmem>>, %arg3: memref<128x128xbf16, #tpu.memory_space<vmem>>, %arg4: memref<1x128xf32, #tpu.memory_space<vmem>>, %arg5: memref<256x128xbf16, #tpu.memory_space<vmem>>) attributes {dimension_semantics = [#tpu.dimension_semantics<parallel>, #tpu.dimension_semantics<parallel>], iteration_bounds = array<i64: 2, 1>, scalar_prefetch = 0 : i64, scratch_operands = 0 : i64, tpu.core_type = #tpu.core_type<tc>, window_params = [{transform_indices = @transform_0, window_bounds = array<i64: 256, 128>}, {transform_indices = @transform_1, window_bounds = array<i64: 128, 128>}, {transform_indices = @transform_2, window_bounds = array<i64: 1, 128>}, {transform_indices = @transform_3, window_bounds = array<i64: 256, 128>}]} {
    %c0 = arith.constant 0 : index
    %c0_0 = arith.constant 0 : index
    %0 = vector.load %arg2[%c0, %c0_0] : memref<256x128xbf16, #tpu.memory_space<vmem>>, vector<256x128xbf16>
    %c0_1 = arith.constant 0 : index
    %c0_2 = arith.constant 0 : index
    %1 = vector.load %arg3[%c0_1, %c0_2] : memref<128x128xbf16, #tpu.memory_space<vmem>>, vector<128x128xbf16>
    %cst = arith.constant dense<0.000000e+00> : vector<256x128xf32>
    %2 = tpu.matmul %0, %1, %cst {dimension_numbers = #tpu.dot_dimension_numbers<[1], [0], [0], [1], [0, 0, 1, 1], [], []>} : vector<256x128xbf16>, vector<128x128xbf16>, vector<256x128xf32> -> vector<256x128xf32>
    %c0_3 = arith.constant 0 : index
    %c0_4 = arith.constant 0 : index
    %3 = vector.load %arg4[%c0_3, %c0_4] : memref<1x128xf32, #tpu.memory_space<vmem>>, vector<1x128xf32>
    %4 = vector.broadcast %3 : vector<1x128xf32> to vector<256x128xf32>
    %5 = arith.addf %2, %4 : vector<256x128xf32>
    %6 = arith.truncf %5 : vector<256x128xf32> to vector<256x128xbf16>
    %c0_5 = arith.constant 0 : index
    %c0_6 = arith.constant 0 : index
    %7 = vector.load %arg5[%c0_5, %c0_6] : memref<256x128xbf16, #tpu.memory_space<vmem>>, vector<256x128xbf16>
    tpu.vector_store %arg5[%c0_5, %c0_6], %6 {strides = array<i32>} : memref<256x128xbf16, #tpu.memory_space<vmem>>, vector<256x128xbf16>,
    return
  }
  func.func @transform_0(%arg0: i32, %arg1: i32) -> (i32, i32) {
    %c0_i32 = arith.constant 0 : i32
    %c0_i32_0 = arith.constant 0 : i32
    return %arg0, %c0_i32 : i32, i32
  }
  func.func @transform_1(%arg0: i32, %arg1: i32) -> (i32, i32) {
    %c0_i32 = arith.constant 0 : i32
    %c0_i32_0 = arith.constant 0 : i32
    return %c0_i32, %arg1 : i32, i32
  }
  func.func @transform_2(%arg0: i32, %arg1: i32) -> (i32, i32) {
    %c0_i32 = arith.constant 0 : i32
    %c0_i32_0 = arith.constant 0 : i32
    return %c0_i32, %arg1 : i32, i32
  }
  func.func @transform_3(%arg0: i32, %arg1: i32) -> (i32, i32) {
    %c0_i32 = arith.constant 0 : i32
    return %arg0, %arg1 : i32, i32
  }
}

</mosaic_0001>

<llo_original>
// kernel: local_enhancer_forward.9
$region0: #{local_enhancer_forward.9}
  #allocation0 [shape = 'u32[]', space=smem, size = 0x4, offset = 0x4, fixed_abs, tag = 'smem constant byte address 0x4 - core index']
  #allocation1 [shape = 'u32[144,128]{1,0:T(1,128)}', space=vmem, size = 0x12000, scoped, tag = 'internal scratch']
  %s0 = inlined_call_operand.vmem [shape: bf16[512,256], index: 0, kind: input, shape index: {}]
  %s1 = inlined_call_operand.vmem [shape: bf16[256,128], index: 1, kind: input, shape index: {}]
  %s2 = inlined_call_operand.vmem [shape: f32[1,128], index: 2, kind: input, shape index: {}]
  %s3 = inlined_call_operand.vmem [shape: bf16[512,128], index: 3, kind: output, shape index: {}]
  %s4 = sld [smem:[#allocation0]]
  $region45: #{local_enhancer_forward.9} parent=0
    _
  %s6 = ssub.s32 1, %s4
  %s7 = scalar_select 0, %s6, %s4
  loop: start=0, step=1, limit=4
  $region2: #{local_enhancer_forward.9} parent=0 // loop_pre_header
    _
  $region3: #{local_enhancer_forward.9} parent=0 // loop_header
    %s9 = sphi 0, %s13
    %p10 = scmp.ge.s32.totalorder %s9, 4
    %s16 = sphi 0, %s28
    %s17 = sphi 0, %s24
    %s18 = sphi 0, %s16
    %s19 = sphi 0, %s17
    %s20 = sphi 0, %s18
    %s21 = sphi 0, %s19
    %s31 = sphi 0, %s33
    %s34 = sphi 0, %s31
    %s35 = sphi 0, %s34
    %s51 = sphi 0, %s35
    %s57 = sphi 0, %s59
    %s60 = sphi 0, %s57
    %s61 = sphi 0, %s60
    %s77 = sphi 0, %s61
    %s83 = sphi 0, %s85
    %s86 = sphi 0, %s83
    %s87 = sphi 0, %s86
    %s103 = sphi 0, %s87
    %s111 = sphi 0, %s113
    %s114 = sphi 0, %s111
    %s115 = sphi 0, %s114
    %s131 = sphi 0, %s115
  $region4: #{local_enhancer_forward.9} parent=0 // loop_header_branch
    %12 = sbr.rel (%p10) target = $region8
  $region5: #{local_enhancer_forward.9} parent=0 // loop_body
    %s14 = ssub.s32 %s9, 1
    %s15 = ssub.s32 %s9, 2
    %s22 = sadd.s32 1, %s17
    %p23 = scmp.ge.s32.totalorder %s22, 1
    %s24 = scalar_select %p23, 0, %s22
    %s25 = sadd.s32 1, %s16
    %s26 = scalar_select %p23, %s25, %s16
    %p27 = scmp.ge.s32.totalorder %s26, 2
    %s28 = scalar_select %p27, 0, %s26
    %s29 = ssub.s32 %s16, %s28
    %p30 = scmp.eq.s32.totalorder %s29, 0
    %s32 = sadd.s32 %s31, 1
    %s33 = scalar_select %p30, %s31, %s32
    %p36 = pneg %p30
    %p37 = scmp.eq.s32.totalorder %s9, 1
    %p38 = por %p36, %p37
    %p39 = scmp.ne.s32.totalorder %s31, %s34
    %p40 = scmp.eq.s32.totalorder %s9, 0
    %p41 = por %p39, %p40
    %p42 = scmp.ne.s32.totalorder %s31, %s34
    %p43 = scmp.eq.s32.totalorder %s14, 1
    %p44 = por %p42, %p43
    %p45 = scmp.ne.s32.totalorder %s34, %s35
    %p46 = scmp.eq.s32.totalorder %s14, 0
    %p47 = por %p45, %p46
    %p48 = scmp.ne.s32.totalorder %s34, %s35
    %p49 = scmp.eq.s32.totalorder %s15, 1
    %p50 = por %p48, %p49
    %p52 = scmp.ne.s32.totalorder %s35, %s51
    %p53 = scmp.eq.s32.totalorder %s15, 0
    %p54 = por %p52, %p53
    %s55 = ssub.s32 %s17, %s24
    %p56 = scmp.eq.s32.totalorder %s55, 0
    %s58 = sadd.s32 %s57, 1
    %s59 = scalar_select %p56, %s57, %s58
    %p62 = pneg %p56
    %p63 = scmp.eq.s32.totalorder %s9, 1
    %p64 = por %p62, %p63
    %p65 = scmp.ne.s32.totalorder %s57, %s60
    %p66 = scmp.eq.s32.totalorder %s9, 0
    %p67 = por %p65, %p66
    %p68 = scmp.ne.s32.totalorder %s57, %s60
    %p69 = scmp.eq.s32.totalorder %s14, 1
    %p70 = por %p68, %p69
    %p71 = scmp.ne.s32.totalorder %s60, %s61
    %p72 = scmp.eq.s32.totalorder %s14, 0
    %p73 = por %p71, %p72
    %p74 = scmp.ne.s32.totalorder %s60, %s61
    %p75 = scmp.eq.s32.totalorder %s15, 1
    %p76 = por %p74, %p75
    %p78 = scmp.ne.s32.totalorder %s61, %s77
    %p79 = scmp.eq.s32.totalorder %s15, 0
    %p80 = por %p78, %p79
    %s81 = ssub.s32 %s17, %s24
    %p82 = scmp.eq.s32.totalorder %s81, 0
    %s84 = sadd.s32 %s83, 1
    %s85 = scalar_select %p82, %s83, %s84
    %p88 = pneg %p82
    %p89 = scmp.eq.s32.totalorder %s9, 1
    %p90 = por %p88, %p89
    %p91 = scmp.ne.s32.totalorder %s83, %s86
    %p92 = scmp.eq.s32.totalorder %s9, 0
    %p93 = por %p91, %p92
    %p94 = scmp.ne.s32.totalorder %s83, %s86
    %p95 = scmp.eq.s32.totalorder %s14, 1
    %p96 = por %p94, %p95
    %p97 = scmp.ne.s32.totalorder %s86, %s87
    %p98 = scmp.eq.s32.totalorder %s14, 0
    %p99 = por %p97, %p98
    %p100 = scmp.ne.s32.totalorder %s86, %s87
    %p101 = scmp.eq.s32.totalorder %s15, 1
    %p102 = por %p100, %p101
    %p104 = scmp.ne.s32.totalorder %s87, %s103
    %p105 = scmp.eq.s32.totalorder %s15, 0
    %p106 = por %p104, %p105
    %s107 = ssub.s32 %s16, %s28
    %s108 = ssub.s32 %s17, %s24
    %s109 = sor.u32 %s107, %s108
    %p110 = scmp.eq.s32.totalorder %s109, 0
    %s112 = sadd.s32 %s111, 1
    %s113 = scalar_select %p110, %s111, %s112
    %p116 = pneg %p110
    %p117 = scmp.eq.s32.totalorder %s9, 1
    %p118 = por %p116, %p117
    %p119 = scmp.ne.s32.totalorder %s111, %s114
    %p120 = scmp.eq.s32.totalorder %s9, 0
    %p121 = por %p119, %p120
    %p122 = scmp.ne.s32.totalorder %s111, %s114
    %p123 = scmp.eq.s32.totalorder %s14, 1
    %p124 = por %p122, %p123
    %p125 = scmp.ne.s32.totalorder %s114, %s115
    %p126 = scmp.eq.s32.totalorder %s14, 0
    %p127 = por %p125, %p126
    %p128 = scmp.ne.s32.totalorder %s114, %s115
    %p129 = scmp.eq.s32.totalorder %s15, 1
    %p130 = por %p128, %p129
    %p132 = scmp.ne.s32.totalorder %s115, %s131
    %p133 = scmp.eq.s32.totalorder %s15, 0
    %p134 = por %p132, %p133
    %p135 = scmp.le.s32.totalorder 1, %s9
    %p136 = scmp.lt.s32.totalorder %s9, 3
    %p137 = pnand %p135, %p136
    %p138 = pneg %p137
    // Predicated region
    $region9: #{local_enhancer_forward.9} parent=5 // pred_check
      _
    $region10: #{local_enhancer_forward.9} parent=5 // pred_check_branch
      %140 = sbr.rel (%p137) target = $region12
    $region11: #{local_enhancer_forward.9} parent=5 // pred_region
      %s141 = ssub.s32 %s9, 1
      // Predicated region
      $region13: #{local_enhancer_forward.9} parent=11 // pred_check
        %p142 = pneg %p73
      $region14: #{local_enhancer_forward.9} parent=11 // pred_check_branch
        %144 = sbr.rel (%p142) target = $region16
      $region15: #{local_enhancer_forward.9} parent=11 // pred_region
        %p145 = scmp.lt.s32.totalorder %s19, 0
        %s146 = scalar_select %p145, %s19, 0
        %s147 = smul.addr %s146, 4
        %s148 = scalar_lea.vmem %s1, %s147
      $region16: #{local_enhancer_forward.9} parent=11 // pred_fallthru
        _
      // Predicated region
      $region17: #{local_enhancer_forward.9} parent=11 // pred_check
        %p149 = pneg %p99
      $region18: #{local_enhancer_forward.9} parent=11 // pred_check_branch
        %151 = sbr.rel (%p149) target = $region20
      $region19: #{local_enhancer_forward.9} parent=11 // pred_region
        %p152 = scmp.lt.s32.totalorder %s19, 0
        %s153 = scalar_select %p152, %s19, 0
        %s154 = scalar_lea.vmem %s2, %s153
      $region20: #{local_enhancer_forward.9} parent=11 // pred_fallthru
        _
    $region12: #{local_enhancer_forward.9} parent=5 // pred_fallthru
      _
    %p155 = scmp.lt.s32.totalorder %s9, 2
    // Predicated region
    $region21: #{local_enhancer_forward.9} parent=5 // pred_check
      %p156 = pneg %p155
    $region22: #{local_enhancer_forward.9} parent=5 // pred_check_branch
      %158 = sbr.rel (%p156) target = $region24
    $region23: #{local_enhancer_forward.9} parent=5 // pred_region
      // Predicated region
      $region25: #{local_enhancer_forward.9} parent=23 // pred_check
        %p159 = pneg %p41
      $region26: #{local_enhancer_forward.9} parent=23 // pred_check_branch
        %161 = sbr.rel (%p159) target = $region28
      $region27: #{local_enhancer_forward.9} parent=23 // pred_region
        %s162 = smul.u32 32, %s16
        %p163 = scmp.lt.s32.totalorder %s162, 63
        %s164 = scalar_select %p163, %s162, 63
        %s165 = smul.addr %s164, 2
        %s166 = smul.addr %s165, 4
        %s167 = scalar_lea.vmem %s0, %s166
        %s168 = smul.u32 32, %s16
      $region28: #{local_enhancer_forward.9} parent=23 // pred_fallthru
        _
    $region24: #{local_enhancer_forward.9} parent=5 // pred_fallthru
      _
    %p169 = scmp.le.s32.totalorder 1, %s9
    %p170 = scmp.lt.s32.totalorder %s9, 3
    %p171 = pnand %p169, %p170
    %p172 = pneg %p171
    // Predicated region
    $region29: #{local_enhancer_forward.9} parent=5 // pred_check
      _
    $region30: #{local_enhancer_forward.9} parent=5 // pred_check_branch
      %174 = sbr.rel (%p171) target = $region32
    $region31: #{local_enhancer_forward.9} parent=5 // pred_region
      %s175 = ssub.s32 %s9, 1
      %s176 = smul.u32 32, %s18
      %p177 = scmp.lt.s32.totalorder %s176, 63
      %s178 = scalar_select %p177, %s176, 63
      %s179 = smul.addr %s178, 2
      %s180 = smul.addr %s179, 4
      %s181 = scalar_lea.vmem %s0, %s180
      %p182 = pneg %p47
      %p183 = pneg %p44
      %p184 = scmp.lt.s32.totalorder %s19, 0
      %s185 = scalar_select %p184, %s19, 0
      %s186 = smul.addr %s185, 4
      %s187 = scalar_lea.vmem %s1, %s186
      %p188 = pneg %p73
      %p189 = pneg %p70
      %p190 = scmp.lt.s32.totalorder %s19, 0
      %s191 = scalar_select %p190, %s19, 0
      %s192 = scalar_lea.vmem %s2, %s191
      %p193 = pneg %p99
      %p194 = pneg %p96
      %p195 = pneg %p127
      %p196 = pneg %p124
      %s197 = smul.u32 32, %s18
      %p198 = scmp.lt.s32.totalorder %s197, 63
      %s199 = scalar_select %p198, %s197, 63
      %p200 = scmp.lt.s32.totalorder %s19, 0
      %s201 = scalar_select %p200, %s19, 0
      %s202 = sadd.s32 %s201, %s199
      %s203 = smul.addr %s202, 4
      %s204 = scalar_lea.vmem %s3, %s203
      %s205 = smul.u32 32, %s18
      %p206 = scmp.lt.s32.totalorder %s205, 63
      %s207 = scalar_select %p206, %s205, 63
      %s208 = smul.addr %s207, 2
      %s209 = smul.addr %s208, 4
      %s210 = scalar_lea.vmem %s0, %s209
      %s211 = smul.u32 32, %s18
      %p212 = scmp.lt.s32.totalorder %s19, 0
      %s213 = scalar_select %p212, %s19, 0
      %s214 = smul.addr %s213, 4
      %s215 = scalar_lea.vmem %s1, %s214
      %p216 = scmp.lt.s32.totalorder %s19, 0
      %s217 = scalar_select %p216, %s19, 0
      %s218 = scalar_lea.vmem %s2, %s217
      %s219 = smul.u32 32, %s18
      %p220 = scmp.lt.s32.totalorder %s219, 63
      %s221 = scalar_select %p220, %s219, 63
      %p222 = scmp.lt.s32.totalorder %s19, 0
      %s223 = scalar_select %p222, %s19, 0
      %s224 = sadd.s32 %s223, %s221
      %s225 = smul.addr %s224, 4
      %s226 = scalar_lea.vmem %s3, %s225
      %s227 = smul.u32 32, %s18
      %v229 = vld [vmem:[%s210] sm:$0xff]
      %v230 = vld [vmem:[%s210 + $0x8] sm:$0xff]
      %v231 = vld [vmem:[%s210 + $0x10] sm:$0xff]
      %v232 = vld [vmem:[%s210 + $0x18] sm:$0xff]
      %v233 = vld [vmem:[%s210 + $0x20] sm:$0xff]
      %v234 = vld [vmem:[%s210 + $0x28] sm:$0xff]
      %v235 = vld [vmem:[%s210 + $0x30] sm:$0xff]
      %v236 = vld [vmem:[%s210 + $0x38] sm:$0xff]
      %v237 = vld [vmem:[%s210 + $0x40] sm:$0xff]
      %v238 = vld [vmem:[%s210 + $0x48] sm:$0xff]
      %v239 = vld [vmem:[%s210 + $0x50] sm:$0xff]
      %v240 = vld [vmem:[%s210 + $0x58] sm:$0xff]
      %v241 = vld [vmem:[%s210 + $0x60] sm:$0xff]
      %v242 = vld [vmem:[%s210 + $0x68] sm:$0xff]
      %v243 = vld [vmem:[%s210 + $0x70] sm:$0xff]
      %v244 = vld [vmem:[%s210 + $0x78] sm:$0xff]
      %v245 = vld [vmem:[%s210 + $0x80] sm:$0xff]
      %v246 = vld [vmem:[%s210 + $0x88] sm:$0xff]
      %v247 = vld [vmem:[%s210 + $0x90] sm:$0xff]
      %v248 = vld [vmem:[%s210 + $0x98] sm:$0xff]
      %v249 = vld [vmem:[%s210 + $0xa0] sm:$0xff]
      %v250 = vld [vmem:[%s210 + $0xa8] sm:$0xff]
      %v251 = vld [vmem:[%s210 + $0xb0] sm:$0xff]
      %v252 = vld [vmem:[%s210 + $0xb8] sm:$0xff]
      %v253 = vld [vmem:[%s210 + $0xc0] sm:$0xff]
      %v254 = vld [vmem:[%s210 + $0xc8] sm:$0xff]
      %v255 = vld [vmem:[%s210 + $0xd0] sm:$0xff]
      %v256 = vld [vmem:[%s210 + $0xd8] sm:$0xff]
      %v257 = vld [vmem:[%s210 + $0xe0] sm:$0xff]
      %v258 = vld [vmem:[%s210 + $0xe8] sm:$0xff]
      %v259 = vld [vmem:[%s210 + $0xf0] sm:$0xff]
      %v260 = vld [vmem:[%s210 + $0xf8] sm:$0xff]
      %v261 = vld [vmem:[%s215] sm:$0xf]
      %v262 = vld [vmem:[%s215 + $0x4] sm:$0xf]
      %v263 = vld [vmem:[%s215 + $0x8] sm:$0xf]
      %v264 = vld [vmem:[%s215 + $0xc] sm:$0xf]
      %v265 = vld [vmem:[%s215 + $0x10] sm:$0xf]
      %v266 = vld [vmem:[%s215 + $0x14] sm:$0xf]
      %v267 = vld [vmem:[%s215 + $0x18] sm:$0xf]
      %v268 = vld [vmem:[%s215 + $0x1c] sm:$0xf]
      %v269 = vld [vmem:[%s215 + $0x20] sm:$0xf]
      %v270 = vld [vmem:[%s215 + $0x24] sm:$0xf]
      %v271 = vld [vmem:[%s215 + $0x28] sm:$0xf]
      %v272 = vld [vmem:[%s215 + $0x2c] sm:$0xf]
      %v273 = vld [vmem:[%s215 + $0x30] sm:$0xf]
      %v274 = vld [vmem:[%s215 + $0x34] sm:$0xf]
      %v275 = vld [vmem:[%s215 + $0x38] sm:$0xf]
      %v276 = vld [vmem:[%s215 + $0x3c] sm:$0xf]
      %v277 = vld [vmem:[%s215 + $0x40] sm:$0xf]
      %v278 = vld [vmem:[%s215 + $0x44] sm:$0xf]
      %v279 = vld [vmem:[%s215 + $0x48] sm:$0xf]
      %v280 = vld [vmem:[%s215 + $0x4c] sm:$0xf]
      %v281 = vld [vmem:[%s215 + $0x50] sm:$0xf]
      %v282 = vld [vmem:[%s215 + $0x54] sm:$0xf]
      %v283 = vld [vmem:[%s215 + $0x58] sm:$0xf]
      %v284 = vld [vmem:[%s215 + $0x5c] sm:$0xf]
      %v285 = vld [vmem:[%s215 + $0x60] sm:$0xf]
      %v286 = vld [vmem:[%s215 + $0x64] sm:$0xf]
      %v287 = vld [vmem:[%s215 + $0x68] sm:$0xf]
      %v288 = vld [vmem:[%s215 + $0x6c] sm:$0xf]
      %v289 = vld [vmem:[%s215 + $0x70] sm:$0xf]
      %v290 = vld [vmem:[%s215 + $0x74] sm:$0xf]
      %v291 = vld [vmem:[%s215 + $0x78] sm:$0xf]
      %v292 = vld [vmem:[%s215 + $0x7c] sm:$0xf]
      %v293 = vld [vmem:[%s218] sm:$0x1]
      %v295 = vlaneseq
      %v296 = vshrl.u32 %v295, 7
      %v297 = vsub.s32 0, %v296
      %v298 = vrot.slane %v293, %v297
      %v332 = vunpack.c.l.b16 %v229
      %v333 = vunpack.c.h.b16 %v229
      %v334 = vunpack.c.l.b16 %v230
      %v335 = vunpack.c.h.b16 %v230
      %v336 = vunpack.c.l.b16 %v231
      %v337 = vunpack.c.h.b16 %v231
      %v338 = vunpack.c.l.b16 %v232
      %v339 = vunpack.c.h.b16 %v232
      %v340 = vunpack.c.l.b16 %v233
      %v341 = vunpack.c.h.b16 %v233
      %v342 = vunpack.c.l.b16 %v234
      %v343 = vunpack.c.h.b16 %v234
      %v344 = vunpack.c.l.b16 %v235
      %v345 = vunpack.c.h.b16 %v235
      %v346 = vunpack.c.l.b16 %v236
      %v347 = vunpack.c.h.b16 %v236
      %v348 = vunpack.c.l.b16 %v237
      %v349 = vunpack.c.h.b16 %v237
      %v350 = vunpack.c.l.b16 %v238
      %v351 = vunpack.c.h.b16 %v238
      %v352 = vunpack.c.l.b16 %v239
      %v353 = vunpack.c.h.b16 %v239
      %v354 = vunpack.c.l.b16 %v240
      %v355 = vunpack.c.h.b16 %v240
      %v356 = vunpack.c.l.b16 %v241
      %v357 = vunpack.c.h.b16 %v241
      %v358 = vunpack.c.l.b16 %v242
      %v359 = vunpack.c.h.b16 %v242
      %v360 = vunpack.c.l.b16 %v243
      %v361 = vunpack.c.h.b16 %v243
      %v362 = vunpack.c.l.b16 %v244
      %v363 = vunpack.c.h.b16 %v244
      %v364 = vunpack.c.l.b16 %v245
      %v365 = vunpack.c.h.b16 %v245
      %v366 = vunpack.c.l.b16 %v246
      %v367 = vunpack.c.h.b16 %v246
      %v368 = vunpack.c.l.b16 %v247
      %v369 = vunpack.c.h.b16 %v247
      %v370 = vunpack.c.l.b16 %v248
      %v371 = vunpack.c.h.b16 %v248
      %v372 = vunpack.c.l.b16 %v249
      %v373 = vunpack.c.h.b16 %v249
      %v374 = vunpack.c.l.b16 %v250
      %v375 = vunpack.c.h.b16 %v250
      %v376 = vunpack.c.l.b16 %v251
      %v377 = vunpack.c.h.b16 %v251
      %v378 = vunpack.c.l.b16 %v252
      %v379 = vunpack.c.h.b16 %v252
      %v380 = vunpack.c.l.b16 %v253
      %v381 = vunpack.c.h.b16 %v253
      %v382 = vunpack.c.l.b16 %v254
      %v383 = vunpack.c.h.b16 %v254
      %v384 = vunpack.c.l.b16 %v255
      %v385 = vunpack.c.h.b16 %v255
      %v386 = vunpack.c.l.b16 %v256
      %v387 = vunpack.c.h.b16 %v256
      %v388 = vunpack.c.l.b16 %v257
      %v389 = vunpack.c.h.b16 %v257
      %v390 = vunpack.c.l.b16 %v258
      %v391 = vunpack.c.h.b16 %v258
      %v392 = vunpack.c.l.b16 %v259
      %v393 = vunpack.c.h.b16 %v259
      %v394 = vunpack.c.l.b16 %v260
      %v395 = vunpack.c.h.b16 %v260
      %v396 = vpack.c.b16 %v334, %v332
      %v397 = vpack.c.b16 %v335, %v333
      %v398 = vpack.c.b16 %v338, %v336
      %v399 = vpack.c.b16 %v339, %v337
      %v400 = vpack.c.b16 %v342, %v340
      %v401 = vpack.c.b16 %v343, %v341
      %v402 = vpack.c.b16 %v346, %v344
      %v403 = vpack.c.b16 %v347, %v345
      %v404 = vpack.c.b16 %v350, %v348
      %v405 = vpack.c.b16 %v351, %v349
      %v406 = vpack.c.b16 %v354, %v352
      %v407 = vpack.c.b16 %v355, %v353
      %v408 = vpack.c.b16 %v358, %v356
      %v409 = vpack.c.b16 %v359, %v357
      %v410 = vpack.c.b16 %v362, %v360
      %v411 = vpack.c.b16 %v363, %v361
      %v412 = vpack.c.b16 %v366, %v364
      %v413 = vpack.c.b16 %v367, %v365
      %v414 = vpack.c.b16 %v370, %v368
      %v415 = vpack.c.b16 %v371, %v369
      %v416 = vpack.c.b16 %v374, %v372
      %v417 = vpack.c.b16 %v375, %v373
      %v418 = vpack.c.b16 %v378, %v376
      %v419 = vpack.c.b16 %v379, %v377
      %v420 = vpack.c.b16 %v382, %v380
      %v421 = vpack.c.b16 %v383, %v381
      %v422 = vpack.c.b16 %v386, %v384
      %v423 = vpack.c.b16 %v387, %v385
      %v424 = vpack.c.b16 %v390, %v388
      %v425 = vpack.c.b16 %v391, %v389
      %v426 = vpack.c.b16 %v394, %v392
      %v427 = vpack.c.b16 %v395, %v393
      %v492 = vunpack.c.l.b16 %v261
      %v493 = vunpack.c.l.b16 %v262
      %v494 = vunpack.c.l.b16 %v263
      %v495 = vunpack.c.l.b16 %v264
      %v496 = vunpack.c.l.b16 %v265
      %v497 = vunpack.c.l.b16 %v266
      %v498 = vunpack.c.l.b16 %v267
      %v499 = vunpack.c.l.b16 %v268
      %v500 = vunpack.c.l.b16 %v269
      %v501 = vunpack.c.l.b16 %v270
      %v502 = vunpack.c.l.b16 %v271
      %v503 = vunpack.c.l.b16 %v272
      %v504 = vunpack.c.l.b16 %v273
      %v505 = vunpack.c.l.b16 %v274
      %v506 = vunpack.c.l.b16 %v275
      %v507 = vunpack.c.l.b16 %v276
      %v508 = vunpack.c.l.b16 %v277
      %v509 = vunpack.c.l.b16 %v278
      %v510 = vunpack.c.l.b16 %v279
      %v511 = vunpack.c.l.b16 %v280
      %v512 = vunpack.c.l.b16 %v281
      %v513 = vunpack.c.l.b16 %v282
      %v514 = vunpack.c.l.b16 %v283
      %v515 = vunpack.c.l.b16 %v284
      %v516 = vunpack.c.l.b16 %v285
      %v517 = vunpack.c.l.b16 %v286
      %v518 = vunpack.c.l.b16 %v287
      %v519 = vunpack.c.l.b16 %v288
      %v520 = vunpack.c.l.b16 %v289
      %v521 = vunpack.c.l.b16 %v290
      %v522 = vunpack.c.l.b16 %v291
      %v523 = vunpack.c.l.b16 %v292
      %v524 = vpack.c.b16 %v493, %v492
      %v525 = vpack.c.b16 %v495, %v494
      %v526 = vpack.c.b16 %v497, %v496
      %v527 = vpack.c.b16 %v499, %v498
      %v528 = vpack.c.b16 %v501, %v500
      %v529 = vpack.c.b16 %v503, %v502
      %v530 = vpack.c.b16 %v505, %v504
      %v531 = vpack.c.b16 %v507, %v506
      %v532 = vpack.c.b16 %v509, %v508
      %v533 = vpack.c.b16 %v511, %v510
      %v534 = vpack.c.b16 %v513, %v512
      %v535 = vpack.c.b16 %v515, %v514
      %v536 = vpack.c.b16 %v517, %v516
      %v537 = vpack.c.b16 %v519, %v518
      %v538 = vpack.c.b16 %v521, %v520
      %v539 = vpack.c.b16 %v523, %v522
      %556 = vmatprep.subr.bf16.mxu0 0
      %557 = vmatpush1.bf16.msra.mxu0 %v524
      %558 = vmatprep.subr.bf16.mxu0 0
      %559 = vmatpush1.bf16.msra.mxu0 %v525
      %560 = vmatprep.subr.bf16.mxu0 0
      %561 = vmatpush1.bf16.msra.mxu0 %v526
      %562 = vmatprep.subr.bf16.mxu0 0
      %563 = vmatpush1.bf16.msra.mxu0 %v527
      %564 = vmatprep.subr.bf16.mxu0 0
      %565 = vmatpush1.bf16.msra.mxu0 %v528
      %566 = vmatprep.subr.bf16.mxu0 0
      %567 = vmatpush1.bf16.msra.mxu0 %v529
      %568 = vmatprep.subr.bf16.mxu0 0
      %569 = vmatpush1.bf16.msra.mxu0 %v530
      %570 = vmatprep.subr.bf16.mxu0 0
      %571 = vmatpush1.bf16.msra.mxu0 %v531
      %572 = vmatprep.subr.bf16.mxu0 0
      %573 = vmatpush1.bf16.msra.mxu0 %v532
      %574 = vmatprep.subr.bf16.mxu0 0
      %575 = vmatpush1.bf16.msra.mxu0 %v533
      %576 = vmatprep.subr.bf16.mxu0 0
      %577 = vmatpush1.bf16.msra.mxu0 %v534
      %578 = vmatprep.subr.bf16.mxu0 0
      %579 = vmatpush1.bf16.msra.mxu0 %v535
      %580 = vmatprep.subr.bf16.mxu0 0
      %581 = vmatpush1.bf16.msra.mxu0 %v536
      %582 = vmatprep.subr.bf16.mxu0 0
      %583 = vmatpush1.bf16.msra.mxu0 %v537
      %584 = vmatprep.subr.bf16.mxu0 0
      %585 = vmatpush1.bf16.msra.mxu0 %v538
      %586 = vmatprep.subr.bf16.mxu0 0
      %587 = vmatpush1.bf16.msra.mxu0 %v539
      %588 = vmatprep.mubr.bf16.mxu0 %v397
      %589 = vmatmul.mubr.bf16.gmra.mrb[0].mxu0 %v396
      %v590 = vpop.f32.mrb[0].mxu0
      %v591 = vadd.f32 %v298, %v590
      %v592 = vpop.f32.mrb[0].mxu0
      %v593 = vpop.f32.mrb[0].mxu0
      %v594 = vadd.f32 %v298, %v593
      %v595 = vpop.f32.mrb[0].mxu0
      %596 = vmatprep.mubr.bf16.mxu0 %v399
      %597 = vmatmul.mubr.bf16.gmra.mrb[0].mxu0 %v398
      %v598 = vpop.f32.mrb[0].mxu0
      %v599 = vadd.f32 %v298, %v598
      %v600 = vpop.f32.mrb[0].mxu0
      %v601 = vpop.f32.mrb[0].mxu0
      %v602 = vadd.f32 %v298, %v601
      %v603 = vpop.f32.mrb[0].mxu0
      %604 = vmatprep.mubr.bf16.mxu0 %v401
      %605 = vmatmul.mubr.bf16.gmra.mrb[0].mxu0 %v400
      %v606 = vpop.f32.mrb[0].mxu0
      %v607 = vadd.f32 %v298, %v606
      %v608 = vpop.f32.mrb[0].mxu0
      %v609 = vpop.f32.mrb[0].mxu0
      %v610 = vadd.f32 %v298, %v609
      %v611 = vpop.f32.mrb[0].mxu0
      %612 = vmatprep.mubr.bf16.mxu0 %v403
      %613 = vmatmul.mubr.bf16.gmra.mrb[0].mxu0 %v402
      %v614 = vpop.f32.mrb[0].mxu0
      %v615 = vadd.f32 %v298, %v614
      %v616 = vpop.f32.mrb[0].mxu0
      %v617 = vpop.f32.mrb[0].mxu0
      %v618 = vadd.f32 %v298, %v617
      %v619 = vpop.f32.mrb[0].mxu0
      %620 = vmatprep.mubr.bf16.mxu0 %v405
      %621 = vmatmul.mubr.bf16.gmra.mrb[0].mxu0 %v404
      %v622 = vpop.f32.mrb[0].mxu0
      %v623 = vadd.f32 %v298, %v622
      %v624 = vpop.f32.mrb[0].mxu0
      %v625 = vpop.f32.mrb[0].mxu0
      %v626 = vadd.f32 %v298, %v625
      %v627 = vpop.f32.mrb[0].mxu0
      %628 = vmatprep.mubr.bf16.mxu0 %v407
      %629 = vmatmul.mubr.bf16.gmra.mrb[0].mxu0 %v406
      %v630 = vpop.f32.mrb[0].mxu0
      %v631 = vadd.f32 %v298, %v630
      %v632 = vpop.f32.mrb[0].mxu0
      %v633 = vpop.f32.mrb[0].mxu0
      %v634 = vadd.f32 %v298, %v633
      %v635 = vpop.f32.mrb[0].mxu0
      %636 = vmatprep.mubr.bf16.mxu0 %v409
      %637 = vmatmul.mubr.bf16.gmra.mrb[0].mxu0 %v408
      %v638 = vpop.f32.mrb[0].mxu0
      %v639 = vadd.f32 %v298, %v638
      %v640 = vpop.f32.mrb[0].mxu0
      %v641 = vpop.f32.mrb[0].mxu0
      %v642 = vadd.f32 %v298, %v641
      %v643 = vpop.f32.mrb[0].mxu0
      %644 = vmatprep.mubr.bf16.mxu0 %v411
      %645 = vmatmul.mubr.bf16.gmra.mrb[0].mxu0 %v410
      %v646 = vpop.f32.mrb[0].mxu0
      %v647 = vadd.f32 %v298, %v646
      %v648 = vpop.f32.mrb[0].mxu0
      %v649 = vpop.f32.mrb[0].mxu0
      %v650 = vadd.f32 %v298, %v649
      %v651 = vpop.f32.mrb[0].mxu0
      %652 = vmatprep.mubr.bf16.mxu0 %v413
      %653 = vmatmul.mubr.bf16.gmra.mrb[0].mxu0 %v412
      %v654 = vpop.f32.mrb[0].mxu0
      %v655 = vadd.f32 %v298, %v654
      %v656 = vpop.f32.mrb[0].mxu0
      %v657 = vpop.f32.mrb[0].mxu0
      %v658 = vadd.f32 %v298, %v657
      %v659 = vpop.f32.mrb[0].mxu0
      %660 = vmatprep.mubr.bf16.mxu0 %v415
      %661 = vmatmul.mubr.bf16.gmra.mrb[0].mxu0 %v414
      %v662 = vpop.f32.mrb[0].mxu0
      %v663 = vadd.f32 %v298, %v662
      %v664 = vpop.f32.mrb[0].mxu0
      %v665 = vpop.f32.mrb[0].mxu0
      %v666 = vadd.f32 %v298, %v665
      %v667 = vpop.f32.mrb[0].mxu0
      %668 = vmatprep.mubr.bf16.mxu0 %v417
      %669 = vmatmul.mubr.bf16.gmra.mrb[0].mxu0 %v416
      %v670 = vpop.f32.mrb[0].mxu0
      %v671 = vadd.f32 %v298, %v670
      %v672 = vpop.f32.mrb[0].mxu0
      %v673 = vpop.f32.mrb[0].mxu0
      %v674 = vadd.f32 %v298, %v673
      %v675 = vpop.f32.mrb[0].mxu0
      %676 = vmatprep.mubr.bf16.mxu0 %v419
      %677 = vmatmul.mubr.bf16.gmra.mrb[0].mxu0 %v418
      %v678 = vpop.f32.mrb[0].mxu0
      %v679 = vadd.f32 %v298, %v678
      %v680 = vpop.f32.mrb[0].mxu0
      %v681 = vpop.f32.mrb[0].mxu0
      %v682 = vadd.f32 %v298, %v681
      %v683 = vpop.f32.mrb[0].mxu0
      %684 = vmatprep.mubr.bf16.mxu0 %v421
      %685 = vmatmul.mubr.bf16.gmra.mrb[0].mxu0 %v420
      %v686 = vpop.f32.mrb[0].mxu0
      %v687 = vadd.f32 %v298, %v686
      %v688 = vpop.f32.mrb[0].mxu0
      %v689 = vpop.f32.mrb[0].mxu0
      %v690 = vadd.f32 %v298, %v689
      %v691 = vpop.f32.mrb[0].mxu0
      %692 = vmatprep.mubr.bf16.mxu0 %v423
      %693 = vmatmul.mubr.bf16.gmra.mrb[0].mxu0 %v422
      %v694 = vpop.f32.mrb[0].mxu0
      %v695 = vadd.f32 %v298, %v694
      %v696 = vpop.f32.mrb[0].mxu0
      %v697 = vpop.f32.mrb[0].mxu0
      %v698 = vadd.f32 %v298, %v697
      %v699 = vpop.f32.mrb[0].mxu0
      %700 = vmatprep.mubr.bf16.mxu0 %v425
      %701 = vmatmul.mubr.bf16.gmra.mrb[0].mxu0 %v424
      %v702 = vpop.f32.mrb[0].mxu0
      %v703 = vadd.f32 %v298, %v702
      %v704 = vpop.f32.mrb[0].mxu0
      %v705 = vpop.f32.mrb[0].mxu0
      %v706 = vadd.f32 %v298, %v705
      %v707 = vpop.f32.mrb[0].mxu0
      %708 = vmatprep.mubr.bf16.mxu0 %v427
      %709 = vmatmul.mubr.bf16.gmra.mrb[0].mxu0 %v426
      %v710 = vpop.f32.mrb[0].mxu0
      %v711 = vadd.f32 %v298, %v710
      %v712 = vpop.f32.mrb[0].mxu0
      %v713 = vpop.f32.mrb[0].mxu0
      %v714 = vadd.f32 %v298, %v713
      %v715 = vpop.f32.mrb[0].mxu0
      %716 = vdwg.mxu0
      %v717 = vpack.c.bf16 %v594, %v591
      %v718 = vpack.c.bf16 %v602, %v599
      %v719 = vpack.c.bf16 %v610, %v607
      %v720 = vpack.c.bf16 %v618, %v615
      %v721 = vpack.c.bf16 %v626, %v623
      %v722 = vpack.c.bf16 %v634, %v631
      %v723 = vpack.c.bf16 %v642, %v639
      %v724 = vpack.c.bf16 %v650, %v647
      %v725 = vpack.c.bf16 %v658, %v655
      %v726 = vpack.c.bf16 %v666, %v663
      %v727 = vpack.c.bf16 %v674, %v671
      %v728 = vpack.c.bf16 %v682, %v679
      %v729 = vpack.c.bf16 %v690, %v687
      %v730 = vpack.c.bf16 %v698, %v695
      %v731 = vpack.c.bf16 %v706, %v703
      %v732 = vpack.c.bf16 %v714, %v711
      %v749 = vunpack.c.l.b16 %v717
      %v750 = vunpack.c.h.b16 %v717
      %v751 = vunpack.c.l.b16 %v718
      %v752 = vunpack.c.h.b16 %v718
      %v753 = vunpack.c.l.b16 %v719
      %v754 = vunpack.c.h.b16 %v719
      %v755 = vunpack.c.l.b16 %v720
      %v756 = vunpack.c.h.b16 %v720
      %v757 = vunpack.c.l.b16 %v721
      %v758 = vunpack.c.h.b16 %v721
      %v759 = vunpack.c.l.b16 %v722
      %v760 = vunpack.c.h.b16 %v722
      %v761 = vunpack.c.l.b16 %v723
      %v762 = vunpack.c.h.b16 %v723
      %v763 = vunpack.c.l.b16 %v724
      %v764 = vunpack.c.h.b16 %v724
      %v765 = vunpack.c.l.b16 %v725
      %v766 = vunpack.c.h.b16 %v725
      %v767 = vunpack.c.l.b16 %v726
      %v768 = vunpack.c.h.b16 %v726
      %v769 = vunpack.c.l.b16 %v727
      %v770 = vunpack.c.h.b16 %v727
      %v771 = vunpack.c.l.b16 %v728
      %v772 = vunpack.c.h.b16 %v728
      %v773 = vunpack.c.l.b16 %v729
      %v774 = vunpack.c.h.b16 %v729
      %v775 = vunpack.c.l.b16 %v730
      %v776 = vunpack.c.h.b16 %v730
      %v777 = vunpack.c.l.b16 %v731
      %v778 = vunpack.c.h.b16 %v731
      %v779 = vunpack.c.l.b16 %v732
      %v780 = vunpack.c.h.b16 %v732
      %v781 = vpack.c.b16 %v749, %v749
      %v782 = vpack.c.b16 %v750, %v750
      %v783 = vpack.c.b16 %v751, %v751
      %v784 = vpack.c.b16 %v752, %v752
      %v785 = vpack.c.b16 %v753, %v753
      %v786 = vpack.c.b16 %v754, %v754
      %v787 = vpack.c.b16 %v755, %v755
      %v788 = vpack.c.b16 %v756, %v756
      %v789 = vpack.c.b16 %v757, %v757
      %v790 = vpack.c.b16 %v758, %v758
      %v791 = vpack.c.b16 %v759, %v759
      %v792 = vpack.c.b16 %v760, %v760
      %v793 = vpack.c.b16 %v761, %v761
      %v794 = vpack.c.b16 %v762, %v762
      %v795 = vpack.c.b16 %v763, %v763
      %v796 = vpack.c.b16 %v764, %v764
      %v797 = vpack.c.b16 %v765, %v765
      %v798 = vpack.c.b16 %v766, %v766
      %v799 = vpack.c.b16 %v767, %v767
      %v800 = vpack.c.b16 %v768, %v768
      %v801 = vpack.c.b16 %v769, %v769
      %v802 = vpack.c.b16 %v770, %v770
      %v803 = vpack.c.b16 %v771, %v771
      %v804 = vpack.c.b16 %v772, %v772
      %v805 = vpack.c.b16 %v773, %v773
      %v806 = vpack.c.b16 %v774, %v774
      %v807 = vpack.c.b16 %v775, %v775
      %v808 = vpack.c.b16 %v776, %v776
      %v809 = vpack.c.b16 %v777, %v777
      %v810 = vpack.c.b16 %v778, %v778
      %v811 = vpack.c.b16 %v779, %v779
      %v812 = vpack.c.b16 %v780, %v780
      %845 = vst [vmem:[%s226] sm:$0xf] %v781
      %846 = vst [vmem:[%s226 + $0x4] sm:$0xf] %v782
      %847 = vst [vmem:[%s226 + $0x8] sm:$0xf] %v783
      %848 = vst [vmem:[%s226 + $0xc] sm:$0xf] %v784
      %849 = vst [vmem:[%s226 + $0x10] sm:$0xf] %v785
      %850 = vst [vmem:[%s226 + $0x14] sm:$0xf] %v786
      %851 = vst [vmem:[%s226 + $0x18] sm:$0xf] %v787
      %852 = vst [vmem:[%s226 + $0x1c] sm:$0xf] %v788
      %853 = vst [vmem:[%s226 + $0x20] sm:$0xf] %v789
      %854 = vst [vmem:[%s226 + $0x24] sm:$0xf] %v790
      %855 = vst [vmem:[%s226 + $0x28] sm:$0xf] %v791
      %856 = vst [vmem:[%s226 + $0x2c] sm:$0xf] %v792
      %857 = vst [vmem:[%s226 + $0x30] sm:$0xf] %v793
      %858 = vst [vmem:[%s226 + $0x34] sm:$0xf] %v794
      %859 = vst [vmem:[%s226 + $0x38] sm:$0xf] %v795
      %860 = vst [vmem:[%s226 + $0x3c] sm:$0xf] %v796
      %861 = vst [vmem:[%s226 + $0x40] sm:$0xf] %v797
      %862 = vst [vmem:[%s226 + $0x44] sm:$0xf] %v798
      %863 = vst [vmem:[%s226 + $0x48] sm:$0xf] %v799
      %864 = vst [vmem:[%s226 + $0x4c] sm:$0xf] %v800
      %865 = vst [vmem:[%s226 + $0x50] sm:$0xf] %v801
      %866 = vst [vmem:[%s226 + $0x54] sm:$0xf] %v802
      %867 = vst [vmem:[%s226 + $0x58] sm:$0xf] %v803
      %868 = vst [vmem:[%s226 + $0x5c] sm:$0xf] %v804
      %869 = vst [vmem:[%s226 + $0x60] sm:$0xf] %v805
      %870 = vst [vmem:[%s226 + $0x64] sm:$0xf] %v806
      %871 = vst [vmem:[%s226 + $0x68] sm:$0xf] %v807
      %872 = vst [vmem:[%s226 + $0x6c] sm:$0xf] %v808
      %873 = vst [vmem:[%s226 + $0x70] sm:$0xf] %v809
      %874 = vst [vmem:[%s226 + $0x74] sm:$0xf] %v810
      %875 = vst [vmem:[%s226 + $0x78] sm:$0xf] %v811
      %876 = vst [vmem:[%s226 + $0x7c] sm:$0xf] %v812
      %s877 = smul.u32 32, %s18
      %p878 = scmp.lt.s32.totalorder %s877, 63
      %s879 = scalar_select %p878, %s877, 63
      %p880 = scmp.lt.s32.totalorder %s19, 0
      %s881 = scalar_select %p880, %s19, 0
      %s882 = sadd.s32 %s881, %s879
      %s883 = smul.addr %s882, 4
      %s884 = scalar_lea.vmem %s3, %s883
      // Predicated region
      $region33: #{local_enhancer_forward.9} parent=31 // pred_check
        %p885 = pneg %p124
      $region34: #{local_enhancer_forward.9} parent=31 // pred_check_branch
        %887 = sbr.rel (%p885) target = $region36
      $region35: #{local_enhancer_forward.9} parent=31 // pred_region
        %s888 = smul.u32 32, %s18
      $region36: #{local_enhancer_forward.9} parent=31 // pred_fallthru
        _
    $region32: #{local_enhancer_forward.9} parent=5 // pred_fallthru
      _
    %p889 = scmp.le.s32.totalorder 2, %s9
    // Predicated region
    $region37: #{local_enhancer_forward.9} parent=5 // pred_check
      %p890 = pneg %p889
    $region38: #{local_enhancer_forward.9} parent=5 // pred_check_branch
      %892 = sbr.rel (%p890) target = $region40
    $region39: #{local_enhancer_forward.9} parent=5 // pred_region
      %s893 = ssub.s32 %s9, 2
      // Predicated region
      $region41: #{local_enhancer_forward.9} parent=39 // pred_check
        %p894 = pneg %p130
      $region42: #{local_enhancer_forward.9} parent=39 // pred_check_branch
        %896 = sbr.rel (%p894) target = $region44
      $region43: #{local_enhancer_forward.9} parent=39 // pred_region
        %s897 = smul.u32 32, %s20
        %p898 = scmp.lt.s32.totalorder %s897, 63
        %s899 = scalar_select %p898, %s897, 63
        %p900 = scmp.lt.s32.totalorder %s21, 0
        %s901 = scalar_select %p900, %s21, 0
        %s902 = sadd.s32 %s901, %s899
        %s903 = smul.addr %s902, 4
        %s904 = scalar_lea.vmem %s3, %s903
      $region44: #{local_enhancer_forward.9} parent=39 // pred_fallthru
        _
    $region40: #{local_enhancer_forward.9} parent=5 // pred_fallthru
      _
  $region6: #{local_enhancer_forward.9} parent=0 // loop_footer
    %s13 = sadd.s32 1, %s9
  $region7: #{local_enhancer_forward.9} parent=0 // loop_footer_branch
    %8 = sbr.rel target = $region3
  $region8: #{local_enhancer_forward.9} parent=0 // loop_exit
    _

// kernel: local_enhancer_forward.10
$region0: #{local_enhancer_forward.10}
  #allocation0 [shape = 'u32[]', space=smem, size = 0x4, offset = 0x4, fixed_abs, tag = 'smem constant byte address 0x4 - core index']
  #allocation1 [shape = 'u32[144,128]{1,0:T(1,128)}', space=vmem, size = 0x12000, scoped, tag = 'internal scratch']
  %s0 = inlined_call_operand.vmem [shape: bf16[128,384], index: 0, kind: input, shape index: {}]
  %s1 = inlined_call_operand.vmem [shape: bf16[384,128], index: 1, kind: input, shape index: {}]
  %s2 = inlined_call_operand.vmem [shape: f32[1,128], index: 2, kind: input, shape index: {}]
  %s3 = inlined_call_operand.vmem [shape: bf16[128,128], index: 3, kind: output, shape index: {}]
  %s4 = sld [smem:[#allocation0]]
  $region45: #{local_enhancer_forward.10} parent=0
    _
  %s6 = ssub.s32 1, %s4
  %s7 = scalar_select 0, %s6, %s4
  loop: start=0, step=1, limit=4
  $region2: #{local_enhancer_forward.10} parent=0 // loop_pre_header
    _
  $region3: #{local_enhancer_forward.10} parent=0 // loop_header
    %s9 = sphi 0, %s13
    %p10 = scmp.ge.s32.totalorder %s9, 4
    %s16 = sphi 0, %s28
    %s17 = sphi 0, %s24
    %s18 = sphi 0, %s16
    %s19 = sphi 0, %s17
    %s20 = sphi 0, %s18
    %s21 = sphi 0, %s19
    %s31 = sphi 0, %s33
    %s34 = sphi 0, %s31
    %s35 = sphi 0, %s34
    %s51 = sphi 0, %s35
    %s57 = sphi 0, %s59
    %s60 = sphi 0, %s57
    %s61 = sphi 0, %s60
    %s77 = sphi 0, %s61
    %s83 = sphi 0, %s85
    %s86 = sphi 0, %s83
    %s87 = sphi 0, %s86
    %s103 = sphi 0, %s87
    %s111 = sphi 0, %s113
    %s114 = sphi 0, %s111
    %s115 = sphi 0, %s114
    %s131 = sphi 0, %s115
  $region4: #{local_enhancer_forward.10} parent=0 // loop_header_branch
    %12 = sbr.rel (%p10) target = $region8
  $region5: #{local_enhancer_forward.10} parent=0 // loop_body
    %s14 = ssub.s32 %s9, 1
    %s15 = ssub.s32 %s9, 2
    %s22 = sadd.s32 1, %s17
    %p23 = scmp.ge.s32.totalorder %s22, 1
    %s24 = scalar_select %p23, 0, %s22
    %s25 = sadd.s32 1, %s16
    %s26 = scalar_select %p23, %s25, %s16
    %p27 = scmp.ge.s32.totalorder %s26, 2
    %s28 = scalar_select %p27, 0, %s26
    %s29 = ssub.s32 %s16, %s28
    %p30 = scmp.eq.s32.totalorder %s29, 0
    %s32 = sadd.s32 %s31, 1
    %s33 = scalar_select %p30, %s31, %s32
    %p36 = pneg %p30
    %p37 = scmp.eq.s32.totalorder %s9, 1
    %p38 = por %p36, %p37
    %p39 = scmp.ne.s32.totalorder %s31, %s34
    %p40 = scmp.eq.s32.totalorder %s9, 0
    %p41 = por %p39, %p40
    %p42 = scmp.ne.s32.totalorder %s31, %s34
    %p43 = scmp.eq.s32.totalorder %s14, 1
    %p44 = por %p42, %p43
    %p45 = scmp.ne.s32.totalorder %s34, %s35
    %p46 = scmp.eq.s32.totalorder %s14, 0
    %p47 = por %p45, %p46
    %p48 = scmp.ne.s32.totalorder %s34, %s35
    %p49 = scmp.eq.s32.totalorder %s15, 1
    %p50 = por %p48, %p49
    %p52 = scmp.ne.s32.totalorder %s35, %s51
    %p53 = scmp.eq.s32.totalorder %s15, 0
    %p54 = por %p52, %p53
    %s55 = ssub.s32 %s17, %s24
    %p56 = scmp.eq.s32.totalorder %s55, 0
    %s58 = sadd.s32 %s57, 1
    %s59 = scalar_select %p56, %s57, %s58
    %p62 = pneg %p56
    %p63 = scmp.eq.s32.totalorder %s9, 1
    %p64 = por %p62, %p63
    %p65 = scmp.ne.s32.totalorder %s57, %s60
    %p66 = scmp.eq.s32.totalorder %s9, 0
    %p67 = por %p65, %p66
    %p68 = scmp.ne.s32.totalorder %s57, %s60
    %p69 = scmp.eq.s32.totalorder %s14, 1
    %p70 = por %p68, %p69
    %p71 = scmp.ne.s32.totalorder %s60, %s61
    %p72 = scmp.eq.s32.totalorder %s14, 0
    %p73 = por %p71, %p72
    %p74 = scmp.ne.s32.totalorder %s60, %s61
    %p75 = scmp.eq.s32.totalorder %s15, 1
    %p76 = por %p74, %p75
    %p78 = scmp.ne.s32.totalorder %s61, %s77
    %p79 = scmp.eq.s32.totalorder %s15, 0
    %p80 = por %p78, %p79
    %s81 = ssub.s32 %s17, %s24
    %p82 = scmp.eq.s32.totalorder %s81, 0
    %s84 = sadd.s32 %s83, 1
    %s85 = scalar_select %p82, %s83, %s84
    %p88 = pneg %p82
    %p89 = scmp.eq.s32.totalorder %s9, 1
    %p90 = por %p88, %p89
    %p91 = scmp.ne.s32.totalorder %s83, %s86
    %p92 = scmp.eq.s32.totalorder %s9, 0
    %p93 = por %p91, %p92
    %p94 = scmp.ne.s32.totalorder %s83, %s86
    %p95 = scmp.eq.s32.totalorder %s14, 1
    %p96 = por %p94, %p95
    %p97 = scmp.ne.s32.totalorder %s86, %s87
    %p98 = scmp.eq.s32.totalorder %s14, 0
    %p99 = por %p97, %p98
    %p100 = scmp.ne.s32.totalorder %s86, %s87
    %p101 = scmp.eq.s32.totalorder %s15, 1
    %p102 = por %p100, %p101
    %p104 = scmp.ne.s32.totalorder %s87, %s103
    %p105 = scmp.eq.s32.totalorder %s15, 0
    %p106 = por %p104, %p105
    %s107 = ssub.s32 %s16, %s28
    %s108 = ssub.s32 %s17, %s24
    %s109 = sor.u32 %s107, %s108
    %p110 = scmp.eq.s32.totalorder %s109, 0
    %s112 = sadd.s32 %s111, 1
    %s113 = scalar_select %p110, %s111, %s112
    %p116 = pneg %p110
    %p117 = scmp.eq.s32.totalorder %s9, 1
    %p118 = por %p116, %p117
    %p119 = scmp.ne.s32.totalorder %s111, %s114
    %p120 = scmp.eq.s32.totalorder %s9, 0
    %p121 = por %p119, %p120
    %p122 = scmp.ne.s32.totalorder %s111, %s114
    %p123 = scmp.eq.s32.totalorder %s14, 1
    %p124 = por %p122, %p123
    %p125 = scmp.ne.s32.totalorder %s114, %s115
    %p126 = scmp.eq.s32.totalorder %s14, 0
    %p127 = por %p125, %p126
    %p128 = scmp.ne.s32.totalorder %s114, %s115
    %p129 = scmp.eq.s32.totalorder %s15, 1
    %p130 = por %p128, %p129
    %p132 = scmp.ne.s32.totalorder %s115, %s131
    %p133 = scmp.eq.s32.totalorder %s15, 0
    %p134 = por %p132, %p133
    %p135 = scmp.le.s32.totalorder 1, %s9
    %p136 = scmp.lt.s32.totalorder %s9, 3
    %p137 = pnand %p135, %p136
    %p138 = pneg %p137
    // Predicated region
    $region9: #{local_enhancer_forward.10} parent=5 // pred_check
      _
    $region10: #{local_enhancer_forward.10} parent=5 // pred_check_branch
      %140 = sbr.rel (%p137) target = $region12
    $region11: #{local_enhancer_forward.10} parent=5 // pred_region
      %s141 = ssub.s32 %s9, 1
      // Predicated region
      $region13: #{local_enhancer_forward.10} parent=11 // pred_check
        %p142 = pneg %p73
      $region14: #{local_enhancer_forward.10} parent=11 // pred_check_branch
        %144 = sbr.rel (%p142) target = $region16
      $region15: #{local_enhancer_forward.10} parent=11 // pred_region
        %p145 = scmp.lt.s32.totalorder %s19, 0
        %s146 = scalar_select %p145, %s19, 0
        %s147 = smul.addr %s146, 4
        %s148 = scalar_lea.vmem %s1, %s147
      $region16: #{local_enhancer_forward.10} parent=11 // pred_fallthru
        _
      // Predicated region
      $region17: #{local_enhancer_forward.10} parent=11 // pred_check
        %p149 = pneg %p99
      $region18: #{local_enhancer_forward.10} parent=11 // pred_check_branch
        %151 = sbr.rel (%p149) target = $region20
      $region19: #{local_enhancer_forward.10} parent=11 // pred_region
        %p152 = scmp.lt.s32.totalorder %s19, 0
        %s153 = scalar_select %p152, %s19, 0
        %s154 = scalar_lea.vmem %s2, %s153
      $region20: #{local_enhancer_forward.10} parent=11 // pred_fallthru
        _
    $region12: #{local_enhancer_forward.10} parent=5 // pred_fallthru
      _
    %p155 = scmp.lt.s32.totalorder %s9, 2
    // Predicated region
    $region21: #{local_enhancer_forward.10} parent=5 // pred_check
      %p156 = pneg %p155
    $region22: #{local_enhancer_forward.10} parent=5 // pred_check_branch
      %158 = sbr.rel (%p156) target = $region24
    $region23: #{local_enhancer_forward.10} parent=5 // pred_region
      // Predicated region
      $region25: #{local_enhancer_forward.10} parent=23 // pred_check
        %p159 = pneg %p41
      $region26: #{local_enhancer_forward.10} parent=23 // pred_check_branch
        %161 = sbr.rel (%p159) target = $region28
      $region27: #{local_enhancer_forward.10} parent=23 // pred_region
        %s162 = smul.u32 8, %s16
        %p163 = scmp.lt.s32.totalorder %s162, 15
        %s164 = scalar_select %p163, %s162, 15
        %s165 = smul.addr %s164, 3
        %s166 = smul.addr %s165, 4
        %s167 = scalar_lea.vmem %s0, %s166
        %s168 = smul.u32 8, %s16
      $region28: #{local_enhancer_forward.10} parent=23 // pred_fallthru
        _
    $region24: #{local_enhancer_forward.10} parent=5 // pred_fallthru
      _
    %p169 = scmp.le.s32.totalorder 1, %s9
    %p170 = scmp.lt.s32.totalorder %s9, 3
    %p171 = pnand %p169, %p170
    %p172 = pneg %p171
    // Predicated region
    $region29: #{local_enhancer_forward.10} parent=5 // pred_check
      _
    $region30: #{local_enhancer_forward.10} parent=5 // pred_check_branch
      %174 = sbr.rel (%p171) target = $region32
    $region31: #{local_enhancer_forward.10} parent=5 // pred_region
      %s175 = ssub.s32 %s9, 1
      %s176 = smul.u32 8, %s18
      %p177 = scmp.lt.s32.totalorder %s176, 15
      %s178 = scalar_select %p177, %s176, 15
      %s179 = smul.addr %s178, 3
      %s180 = smul.addr %s179, 4
      %s181 = scalar_lea.vmem %s0, %s180
      %p182 = pneg %p47
      %p183 = pneg %p44
      %p184 = scmp.lt.s32.totalorder %s19, 0
      %s185 = scalar_select %p184, %s19, 0
      %s186 = smul.addr %s185, 4
      %s187 = scalar_lea.vmem %s1, %s186
      %p188 = pneg %p73
      %p189 = pneg %p70
      %p190 = scmp.lt.s32.totalorder %s19, 0
      %s191 = scalar_select %p190, %s19, 0
      %s192 = scalar_lea.vmem %s2, %s191
      %p193 = pneg %p99
      %p194 = pneg %p96
      %p195 = pneg %p127
      %p196 = pneg %p124
      %s197 = smul.u32 8, %s18
      %p198 = scmp.lt.s32.totalorder %s197, 15
      %s199 = scalar_select %p198, %s197, 15
      %p200 = scmp.lt.s32.totalorder %s19, 0
      %s201 = scalar_select %p200, %s19, 0
      %s202 = sadd.s32 %s201, %s199
      %s203 = smul.addr %s202, 4
      %s204 = scalar_lea.vmem %s3, %s203
      %s205 = smul.u32 8, %s18
      %p206 = scmp.lt.s32.totalorder %s205, 15
      %s207 = scalar_select %p206, %s205, 15
      %s208 = smul.addr %s207, 3
      %s209 = smul.addr %s208, 4
      %s210 = scalar_lea.vmem %s0, %s209
      %s211 = smul.u32 8, %s18
      %p212 = scmp.lt.s32.totalorder %s19, 0
      %s213 = scalar_select %p212, %s19, 0
      %s214 = smul.addr %s213, 4
      %s215 = scalar_lea.vmem %s1, %s214
      %p216 = scmp.lt.s32.totalorder %s19, 0
      %s217 = scalar_select %p216, %s19, 0
      %s218 = scalar_lea.vmem %s2, %s217
      %s219 = smul.u32 8, %s18
      %p220 = scmp.lt.s32.totalorder %s219, 15
      %s221 = scalar_select %p220, %s219, 15
      %p222 = scmp.lt.s32.totalorder %s19, 0
      %s223 = scalar_select %p222, %s19, 0
      %s224 = sadd.s32 %s223, %s221
      %s225 = smul.addr %s224, 4
      %s226 = scalar_lea.vmem %s3, %s225
      %s227 = smul.u32 8, %s18
      %v229 = vld [vmem:[%s210] sm:$0xff]
      %v230 = vld [vmem:[%s210 + $0x8] sm:$0xf]
      %v231 = vld [vmem:[%s210 + $0xc] sm:$0xff]
      %v232 = vld [vmem:[%s210 + $0x14] sm:$0xf]
      %v233 = vld [vmem:[%s210 + $0x18] sm:$0xff]
      %v234 = vld [vmem:[%s210 + $0x20] sm:$0xf]
      %v235 = vld [vmem:[%s210 + $0x24] sm:$0xff]
      %v236 = vld [vmem:[%s210 + $0x2c] sm:$0xf]
      %v237 = vld [vmem:[%s210 + $0x30] sm:$0xff]
      %v238 = vld [vmem:[%s210 + $0x38] sm:$0xf]
      %v239 = vld [vmem:[%s210 + $0x3c] sm:$0xff]
      %v240 = vld [vmem:[%s210 + $0x44] sm:$0xf]
      %v241 = vld [vmem:[%s210 + $0x48] sm:$0xff]
      %v242 = vld [vmem:[%s210 + $0x50] sm:$0xf]
      %v243 = vld [vmem:[%s210 + $0x54] sm:$0xff]
      %v244 = vld [vmem:[%s210 + $0x5c] sm:$0xf]
      %v245 = vld [vmem:[%s215] sm:$0xf]
      %v246 = vld [vmem:[%s215 + $0x4] sm:$0xf]
      %v247 = vld [vmem:[%s215 + $0x8] sm:$0xf]
      %v248 = vld [vmem:[%s215 + $0xc] sm:$0xf]
      %v249 = vld [vmem:[%s215 + $0x10] sm:$0xf]
      %v250 = vld [vmem:[%s215 + $0x14] sm:$0xf]
      %v251 = vld [vmem:[%s215 + $0x18] sm:$0xf]
      %v252 = vld [vmem:[%s215 + $0x1c] sm:$0xf]
      %v253 = vld [vmem:[%s215 + $0x20] sm:$0xf]
      %v254 = vld [vmem:[%s215 + $0x24] sm:$0xf]
      %v255 = vld [vmem:[%s215 + $0x28] sm:$0xf]
      %v256 = vld [vmem:[%s215 + $0x2c] sm:$0xf]
      %v257 = vld [vmem:[%s215 + $0x30] sm:$0xf]
      %v258 = vld [vmem:[%s215 + $0x34] sm:$0xf]
      %v259 = vld [vmem:[%s215 + $0x38] sm:$0xf]
      %v260 = vld [vmem:[%s215 + $0x3c] sm:$0xf]
      %v261 = vld [vmem:[%s215 + $0x40] sm:$0xf]
      %v262 = vld [vmem:[%s215 + $0x44] sm:$0xf]
      %v263 = vld [vmem:[%s215 + $0x48] sm:$0xf]
      %v264 = vld [vmem:[%s215 + $0x4c] sm:$0xf]
      %v265 = vld [vmem:[%s215 + $0x50] sm:$0xf]
      %v266 = vld [vmem:[%s215 + $0x54] sm:$0xf]
      %v267 = vld [vmem:[%s215 + $0x58] sm:$0xf]
      %v268 = vld [vmem:[%s215 + $0x5c] sm:$0xf]
      %v269 = vld [vmem:[%s215 + $0x60] sm:$0xf]
      %v270 = vld [vmem:[%s215 + $0x64] sm:$0xf]
      %v271 = vld [vmem:[%s215 + $0x68] sm:$0xf]
      %v272 = vld [vmem:[%s215 + $0x6c] sm:$0xf]
      %v273 = vld [vmem:[%s215 + $0x70] sm:$0xf]
      %v274 = vld [vmem:[%s215 + $0x74] sm:$0xf]
      %v275 = vld [vmem:[%s215 + $0x78] sm:$0xf]
      %v276 = vld [vmem:[%s215 + $0x7c] sm:$0xf]
      %v277 = vld [vmem:[%s215 + $0x80] sm:$0xf]
      %v278 = vld [vmem:[%s215 + $0x84] sm:$0xf]
      %v279 = vld [vmem:[%s215 + $0x88] sm:$0xf]
      %v280 = vld [vmem:[%s215 + $0x8c] sm:$0xf]
      %v281 = vld [vmem:[%s215 + $0x90] sm:$0xf]
      %v282 = vld [vmem:[%s215 + $0x94] sm:$0xf]
      %v283 = vld [vmem:[%s215 + $0x98] sm:$0xf]
      %v284 = vld [vmem:[%s215 + $0x9c] sm:$0xf]
      %v285 = vld [vmem:[%s215 + $0xa0] sm:$0xf]
      %v286 = vld [vmem:[%s215 + $0xa4] sm:$0xf]
      %v287 = vld [vmem:[%s215 + $0xa8] sm:$0xf]
      %v288 = vld [vmem:[%s215 + $0xac] sm:$0xf]
      %v289 = vld [vmem:[%s215 + $0xb0] sm:$0xf]
      %v290 = vld [vmem:[%s215 + $0xb4] sm:$0xf]
      %v291 = vld [vmem:[%s215 + $0xb8] sm:$0xf]
      %v292 = vld [vmem:[%s215 + $0xbc] sm:$0xf]
      %v293 = vld [vmem:[%s218] sm:$0x1]
      %v295 = vlaneseq
      %v296 = vshrl.u32 %v295, 7
      %v297 = vsub.s32 0, %v296
      %v298 = vrot.slane %v293, %v297
      %v316 = vunpack.c.l.b16 %v229
      %v317 = vunpack.c.h.b16 %v229
      %v318 = vunpack.c.l.b16 %v230
      %v319 = vunpack.c.l.b16 %v231
      %v320 = vunpack.c.h.b16 %v231
      %v321 = vunpack.c.l.b16 %v232
      %v322 = vunpack.c.l.b16 %v233
      %v323 = vunpack.c.h.b16 %v233
      %v324 = vunpack.c.l.b16 %v234
      %v325 = vunpack.c.l.b16 %v235
      %v326 = vunpack.c.h.b16 %v235
      %v327 = vunpack.c.l.b16 %v236
      %v328 = vunpack.c.l.b16 %v237
      %v329 = vunpack.c.h.b16 %v237
      %v330 = vunpack.c.l.b16 %v238
      %v331 = vunpack.c.l.b16 %v239
      %v332 = vunpack.c.h.b16 %v239
      %v333 = vunpack.c.l.b16 %v240
      %v334 = vunpack.c.l.b16 %v241
      %v335 = vunpack.c.h.b16 %v241
      %v336 = vunpack.c.l.b16 %v242
      %v337 = vunpack.c.l.b16 %v243
      %v338 = vunpack.c.h.b16 %v243
      %v339 = vunpack.c.l.b16 %v244
      %v340 = vpack.c.b16 %v319, %v316
      %v341 = vpack.c.b16 %v320, %v317
      %v342 = vpack.c.b16 %v321, %v318
      %v343 = vpack.c.b16 %v325, %v322
      %v344 = vpack.c.b16 %v326, %v323
      %v345 = vpack.c.b16 %v327, %v324
      %v346 = vpack.c.b16 %v331, %v328
      %v347 = vpack.c.b16 %v332, %v329
      %v348 = vpack.c.b16 %v333, %v330
      %v349 = vpack.c.b16 %v337, %v334
      %v350 = vpack.c.b16 %v338, %v335
      %v351 = vpack.c.b16 %v339, %v336
      %v412 = vunpack.c.l.b16 %v245
      %v413 = vunpack.c.l.b16 %v246
      %v414 = vunpack.c.l.b16 %v247
      %v415 = vunpack.c.l.b16 %v248
      %v416 = vunpack.c.l.b16 %v249
      %v417 = vunpack.c.l.b16 %v250
      %v418 = vunpack.c.l.b16 %v251
      %v419 = vunpack.c.l.b16 %v252
      %v420 = vunpack.c.l.b16 %v253
      %v421 = vunpack.c.l.b16 %v254
      %v422 = vunpack.c.l.b16 %v255
      %v423 = vunpack.c.l.b16 %v256
      %v424 = vunpack.c.l.b16 %v257
      %v425 = vunpack.c.l.b16 %v258
      %v426 = vunpack.c.l.b16 %v259
      %v427 = vunpack.c.l.b16 %v260
      %v428 = vunpack.c.l.b16 %v261
      %v429 = vunpack.c.l.b16 %v262
      %v430 = vunpack.c.l.b16 %v263
      %v431 = vunpack.c.l.b16 %v264
      %v432 = vunpack.c.l.b16 %v265
      %v433 = vunpack.c.l.b16 %v266
      %v434 = vunpack.c.l.b16 %v267
      %v435 = vunpack.c.l.b16 %v268
      %v436 = vunpack.c.l.b16 %v269
      %v437 = vunpack.c.l.b16 %v270
      %v438 = vunpack.c.l.b16 %v271
      %v439 = vunpack.c.l.b16 %v272
      %v440 = vunpack.c.l.b16 %v273
      %v441 = vunpack.c.l.b16 %v274
      %v442 = vunpack.c.l.b16 %v275
      %v443 = vunpack.c.l.b16 %v276
      %v444 = vunpack.c.l.b16 %v277
      %v445 = vunpack.c.l.b16 %v278
      %v446 = vunpack.c.l.b16 %v279
      %v447 = vunpack.c.l.b16 %v280
      %v448 = vunpack.c.l.b16 %v281
      %v449 = vunpack.c.l.b16 %v282
      %v450 = vunpack.c.l.b16 %v283
      %v451 = vunpack.c.l.b16 %v284
      %v452 = vunpack.c.l.b16 %v285
      %v453 = vunpack.c.l.b16 %v286
      %v454 = vunpack.c.l.b16 %v287
      %v455 = vunpack.c.l.b16 %v288
      %v456 = vunpack.c.l.b16 %v289
      %v457 = vunpack.c.l.b16 %v290
      %v458 = vunpack.c.l.b16 %v291
      %v459 = vunpack.c.l.b16 %v292
      %v460 = vpack.c.b16 %v413, %v412
      %v461 = vpack.c.b16 %v415, %v414
      %v462 = vpack.c.b16 %v417, %v416
      %v463 = vpack.c.b16 %v419, %v418
      %v464 = vpack.c.b16 %v421, %v420
      %v465 = vpack.c.b16 %v423, %v422
      %v466 = vpack.c.b16 %v425, %v424
      %v467 = vpack.c.b16 %v427, %v426
      %v468 = vpack.c.b16 %v429, %v428
      %v469 = vpack.c.b16 %v431, %v430
      %v470 = vpack.c.b16 %v433, %v432
      %v471 = vpack.c.b16 %v435, %v434
      %v472 = vpack.c.b16 %v437, %v436
      %v473 = vpack.c.b16 %v439, %v438
      %v474 = vpack.c.b16 %v441, %v440
      %v475 = vpack.c.b16 %v443, %v442
      %v476 = vpack.c.b16 %v445, %v444
      %v477 = vpack.c.b16 %v447, %v446
      %v478 = vpack.c.b16 %v449, %v448
      %v479 = vpack.c.b16 %v451, %v450
      %v480 = vpack.c.b16 %v453, %v452
      %v481 = vpack.c.b16 %v455, %v454
      %v482 = vpack.c.b16 %v457, %v456
      %v483 = vpack.c.b16 %v459, %v458
      %508 = vmatprep.subr.bf16.mxu0 0
      %509 = vmatpush1.bf16.msra.mxu0 %v460
      %510 = vmatprep.subr.bf16.mxu0 0
      %511 = vmatpush1.bf16.msra.mxu0 %v461
      %512 = vmatprep.subr.bf16.mxu0 0
      %513 = vmatpush1.bf16.msra.mxu0 %v462
      %514 = vmatprep.subr.bf16.mxu0 0
      %515 = vmatpush1.bf16.msra.mxu0 %v463
      %516 = vmatprep.subr.bf16.mxu0 0
      %517 = vmatpush1.bf16.msra.mxu0 %v464
      %518 = vmatprep.subr.bf16.mxu0 0
      %519 = vmatpush1.bf16.msra.mxu0 %v465
      %520 = vmatprep.subr.bf16.mxu0 0
      %521 = vmatpush1.bf16.msra.mxu0 %v466
      %522 = vmatprep.subr.bf16.mxu0 0
      %523 = vmatpush1.bf16.msra.mxu0 %v467
      %524 = vmatprep.subr.bf16.mxu0 0
      %525 = vmatpush1.bf16.msra.mxu0 %v468
      %526 = vmatprep.subr.bf16.mxu0 0
      %527 = vmatpush1.bf16.msra.mxu0 %v469
      %528 = vmatprep.subr.bf16.mxu0 0
      %529 = vmatpush1.bf16.msra.mxu0 %v470
      %530 = vmatprep.subr.bf16.mxu0 0
      %531 = vmatpush1.bf16.msra.mxu0 %v471
      %532 = vmatprep.subr.bf16.mxu0 0
      %533 = vmatpush1.bf16.msra.mxu0 %v472
      %534 = vmatprep.subr.bf16.mxu0 0
      %535 = vmatpush1.bf16.msra.mxu0 %v473
      %536 = vmatprep.subr.bf16.mxu0 0
      %537 = vmatpush1.bf16.msra.mxu0 %v474
      %538 = vmatprep.subr.bf16.mxu0 0
      %539 = vmatpush1.bf16.msra.mxu0 %v475
      %540 = vmatprep.mubr.bf16.mxu0 %v341
      %541 = vmatmul.mubr.bf16.gmra.mrb[0].mxu0 %v340
      %v542 = vpop.f32.mrb[0].mxu0
      %v543 = vadd.f32 %v298, %v542
      %v544 = vpop.f32.mrb[0].mxu0
      %v545 = vpop.f32.mrb[0].mxu0
      %v546 = vadd.f32 %v298, %v545
      %v547 = vpop.f32.mrb[0].mxu0
      %548 = vmatprep.mubr.bf16.mxu0 %v344
      %549 = vmatmul.mubr.bf16.gmra.mrb[0].mxu0 %v343
      %v550 = vpop.f32.mrb[0].mxu0
      %v551 = vadd.f32 %v298, %v550
      %v552 = vpop.f32.mrb[0].mxu0
      %v553 = vpop.f32.mrb[0].mxu0
      %v554 = vadd.f32 %v298, %v553
      %v555 = vpop.f32.mrb[0].mxu0
      %556 = vmatprep.mubr.bf16.mxu0 %v347
      %557 = vmatmul.mubr.bf16.gmra.mrb[0].mxu0 %v346
      %v558 = vpop.f32.mrb[0].mxu0
      %v559 = vadd.f32 %v298, %v558
      %v560 = vpop.f32.mrb[0].mxu0
      %v561 = vpop.f32.mrb[0].mxu0
      %v562 = vadd.f32 %v298, %v561
      %v563 = vpop.f32.mrb[0].mxu0
      %564 = vmatprep.mubr.bf16.mxu0 %v350
      %565 = vmatmul.mubr.bf16.gmra.mrb[0].mxu0 %v349
      %v566 = vpop.f32.mrb[0].mxu0
      %v567 = vadd.f32 %v298, %v566
      %v568 = vpop.f32.mrb[0].mxu0
      %v569 = vpop.f32.mrb[0].mxu0
      %v570 = vadd.f32 %v298, %v569
      %v571 = vpop.f32.mrb[0].mxu0
      %572 = vdwg.mxu0
      %573 = vmatprep.subr.bf16.mxu0 0
      %574 = vmatpush1.bf16.msra.mxu0 %v476
      %575 = vmatprep.subr.bf16.mxu0 0
      %576 = vmatpush1.bf16.msra.mxu0 %v477
      %577 = vmatprep.subr.bf16.mxu0 0
      %578 = vmatpush1.bf16.msra.mxu0 %v478
      %579 = vmatprep.subr.bf16.mxu0 0
      %580 = vmatpush1.bf16.msra.mxu0 %v479
      %581 = vmatprep.subr.bf16.mxu0 0
      %582 = vmatpush1.bf16.msra.mxu0 %v480
      %583 = vmatprep.subr.bf16.mxu0 0
      %584 = vmatpush1.bf16.msra.mxu0 %v481
      %585 = vmatprep.subr.bf16.mxu0 0
      %586 = vmatpush1.bf16.msra.mxu0 %v482
      %587 = vmatprep.subr.bf16.mxu0 0
      %588 = vmatpush1.bf16.msra.mxu0 %v483
      %589 = vmatprep.subr.bf16.mxu0 0
      %590 = vmatpush1.bf16.msra.mxu0 0
      %591 = vmatprep.subr.bf16.mxu0 0
      %592 = vmatpush1.bf16.msra.mxu0 0
      %593 = vmatprep.subr.bf16.mxu0 0
      %594 = vmatpush1.bf16.msra.mxu0 0
      %595 = vmatprep.subr.bf16.mxu0 0
      %596 = vmatpush1.bf16.msra.mxu0 0
      %597 = vmatprep.subr.bf16.mxu0 0
      %598 = vmatpush1.bf16.msra.mxu0 0
      %599 = vmatprep.subr.bf16.mxu0 0
      %600 = vmatpush1.bf16.msra.mxu0 0
      %601 = vmatprep.subr.bf16.mxu0 0
      %602 = vmatpush1.bf16.msra.mxu0 0
      %603 = vmatprep.subr.bf16.mxu0 0
      %604 = vmatpush1.bf16.msra.mxu0 0
      %605 = vmatprep.mubr.bf16.mxu0 0
      %606 = vmatmul.mubr.bf16.gmra.mrb[0].mxu0 %v342
      %v607 = vpop.f32.mrb[0].mxu0
      %v608 = vadd.f32 %v543, %v607
      %v609 = vpop.f32.mrb[0].mxu0
      %v610 = vpop.f32.mrb[0].mxu0
      %v611 = vadd.f32 %v546, %v610
      %v612 = vpop.f32.mrb[0].mxu0
      %613 = vmatprep.mubr.bf16.mxu0 0
      %614 = vmatmul.mubr.bf16.gmra.mrb[0].mxu0 %v345
      %v615 = vpop.f32.mrb[0].mxu0
      %v616 = vadd.f32 %v551, %v615
      %v617 = vpop.f32.mrb[0].mxu0
      %v618 = vpop.f32.mrb[0].mxu0
      %v619 = vadd.f32 %v554, %v618
      %v620 = vpop.f32.mrb[0].mxu0
      %621 = vmatprep.mubr.bf16.mxu0 0
      %622 = vmatmul.mubr.bf16.gmra.mrb[0].mxu0 %v348
      %v623 = vpop.f32.mrb[0].mxu0
      %v624 = vadd.f32 %v559, %v623
      %v625 = vpop.f32.mrb[0].mxu0
      %v626 = vpop.f32.mrb[0].mxu0
      %v627 = vadd.f32 %v562, %v626
      %v628 = vpop.f32.mrb[0].mxu0
      %629 = vmatprep.mubr.bf16.mxu0 0
      %630 = vmatmul.mubr.bf16.gmra.mrb[0].mxu0 %v351
      %v631 = vpop.f32.mrb[0].mxu0
      %v632 = vadd.f32 %v567, %v631
      %v633 = vpop.f32.mrb[0].mxu0
      %v634 = vpop.f32.mrb[0].mxu0
      %v635 = vadd.f32 %v570, %v634
      %v636 = vpop.f32.mrb[0].mxu0
      %637 = vdwg.mxu0
      %v638 = vpack.c.bf16 %v611, %v608
      %v639 = vpack.c.bf16 %v619, %v616
      %v640 = vpack.c.bf16 %v627, %v624
      %v641 = vpack.c.bf16 %v635, %v632
      %v646 = vunpack.c.l.b16 %v638
      %v647 = vunpack.c.h.b16 %v638
      %v648 = vunpack.c.l.b16 %v639
      %v649 = vunpack.c.h.b16 %v639
      %v650 = vunpack.c.l.b16 %v640
      %v651 = vunpack.c.h.b16 %v640
      %v652 = vunpack.c.l.b16 %v641
      %v653 = vunpack.c.h.b16 %v641
      %v654 = vpack.c.b16 %v646, %v646
      %v655 = vpack.c.b16 %v647, %v647
      %v656 = vpack.c.b16 %v648, %v648
      %v657 = vpack.c.b16 %v649, %v649
      %v658 = vpack.c.b16 %v650, %v650
      %v659 = vpack.c.b16 %v651, %v651
      %v660 = vpack.c.b16 %v652, %v652
      %v661 = vpack.c.b16 %v653, %v653
      %670 = vst [vmem:[%s226] sm:$0xf] %v654
      %671 = vst [vmem:[%s226 + $0x4] sm:$0xf] %v655
      %672 = vst [vmem:[%s226 + $0x8] sm:$0xf] %v656
      %673 = vst [vmem:[%s226 + $0xc] sm:$0xf] %v657
      %674 = vst [vmem:[%s226 + $0x10] sm:$0xf] %v658
      %675 = vst [vmem:[%s226 + $0x14] sm:$0xf] %v659
      %676 = vst [vmem:[%s226 + $0x18] sm:$0xf] %v660
      %677 = vst [vmem:[%s226 + $0x1c] sm:$0xf] %v661
      %s678 = smul.u32 8, %s18
      %p679 = scmp.lt.s32.totalorder %s678, 15
      %s680 = scalar_select %p679, %s678, 15
      %p681 = scmp.lt.s32.totalorder %s19, 0
      %s682 = scalar_select %p681, %s19, 0
      %s683 = sadd.s32 %s682, %s680
      %s684 = smul.addr %s683, 4
      %s685 = scalar_lea.vmem %s3, %s684
      // Predicated region
      $region33: #{local_enhancer_forward.10} parent=31 // pred_check
        %p686 = pneg %p124
      $region34: #{local_enhancer_forward.10} parent=31 // pred_check_branch
        %688 = sbr.rel (%p686) target = $region36
      $region35: #{local_enhancer_forward.10} parent=31 // pred_region
        %s689 = smul.u32 8, %s18
      $region36: #{local_enhancer_forward.10} parent=31 // pred_fallthru
        _
    $region32: #{local_enhancer_forward.10} parent=5 // pred_fallthru
      _
    %p690 = scmp.le.s32.totalorder 2, %s9
    // Predicated region
    $region37: #{local_enhancer_forward.10} parent=5 // pred_check
      %p691 = pneg %p690
    $region38: #{local_enhancer_forward.10} parent=5 // pred_check_branch
      %693 = sbr.rel (%p691) target = $region40
    $region39: #{local_enhancer_forward.10} parent=5 // pred_region
      %s694 = ssub.s32 %s9, 2
      // Predicated region
      $region41: #{local_enhancer_forward.10} parent=39 // pred_check
        %p695 = pneg %p130
      $region42: #{local_enhancer_forward.10} parent=39 // pred_check_branch
        %697 = sbr.rel (%p695) target = $region44
      $region43: #{local_enhancer_forward.10} parent=39 // pred_region
        %s698 = smul.u32 8, %s20
        %p699 = scmp.lt.s32.totalorder %s698, 15
        %s700 = scalar_select %p699, %s698, 15
        %p701 = scmp.lt.s32.totalorder %s21, 0
        %s702 = scalar_select %p701, %s21, 0
        %s703 = sadd.s32 %s702, %s700
        %s704 = smul.addr %s703, 4
        %s705 = scalar_lea.vmem %s3, %s704
      $region44: #{local_enhancer_forward.10} parent=39 // pred_fallthru
        _
    $region40: #{local_enhancer_forward.10} parent=5 // pred_fallthru
      _
  $region6: #{local_enhancer_forward.10} parent=0 // loop_footer
    %s13 = sadd.s32 1, %s9
  $region7: #{local_enhancer_forward.10} parent=0 // loop_footer_branch
    %8 = sbr.rel target = $region3
  $region8: #{local_enhancer_forward.10} parent=0 // loop_exit
    _

// kernel: local_enhancer_forward.11
$region0: #{local_enhancer_forward.11}
  #allocation0 [shape = 'u32[]', space=smem, size = 0x4, offset = 0x4, fixed_abs, tag = 'smem constant byte address 0x4 - core index']
  #allocation1 [shape = 'u32[144,128]{1,0:T(1,128)}', space=vmem, size = 0x12000, scoped, tag = 'internal scratch']
  %s0 = inlined_call_operand.vmem [shape: bf16[128,256], index: 0, kind: input, shape index: {}]
  %s1 = inlined_call_operand.vmem [shape: bf16[256,128], index: 1, kind: input, shape index: {}]
  %s2 = inlined_call_operand.vmem [shape: f32[1,128], index: 2, kind: input, shape index: {}]
  %s3 = inlined_call_operand.vmem [shape: bf16[128,128], index: 3, kind: output, shape index: {}]
  %s4 = sld [smem:[#allocation0]]
  $region45: #{local_enhancer_forward.11} parent=0
    _
  %s6 = ssub.s32 1, %s4
  %s7 = scalar_select 0, %s6, %s4
  loop: start=0, step=1, limit=4
  $region2: #{local_enhancer_forward.11} parent=0 // loop_pre_header
    _
  $region3: #{local_enhancer_forward.11} parent=0 // loop_header
    %s9 = sphi 0, %s13
    %p10 = scmp.ge.s32.totalorder %s9, 4
    %s16 = sphi 0, %s28
    %s17 = sphi 0, %s24
    %s18 = sphi 0, %s16
    %s19 = sphi 0, %s17
    %s20 = sphi 0, %s18
    %s21 = sphi 0, %s19
    %s31 = sphi 0, %s33
    %s34 = sphi 0, %s31
    %s35 = sphi 0, %s34
    %s51 = sphi 0, %s35
    %s57 = sphi 0, %s59
    %s60 = sphi 0, %s57
    %s61 = sphi 0, %s60
    %s77 = sphi 0, %s61
    %s83 = sphi 0, %s85
    %s86 = sphi 0, %s83
    %s87 = sphi 0, %s86
    %s103 = sphi 0, %s87
    %s111 = sphi 0, %s113
    %s114 = sphi 0, %s111
    %s115 = sphi 0, %s114
    %s131 = sphi 0, %s115
  $region4: #{local_enhancer_forward.11} parent=0 // loop_header_branch
    %12 = sbr.rel (%p10) target = $region8
  $region5: #{local_enhancer_forward.11} parent=0 // loop_body
    %s14 = ssub.s32 %s9, 1
    %s15 = ssub.s32 %s9, 2
    %s22 = sadd.s32 1, %s17
    %p23 = scmp.ge.s32.totalorder %s22, 1
    %s24 = scalar_select %p23, 0, %s22
    %s25 = sadd.s32 1, %s16
    %s26 = scalar_select %p23, %s25, %s16
    %p27 = scmp.ge.s32.totalorder %s26, 2
    %s28 = scalar_select %p27, 0, %s26
    %s29 = ssub.s32 %s16, %s28
    %p30 = scmp.eq.s32.totalorder %s29, 0
    %s32 = sadd.s32 %s31, 1
    %s33 = scalar_select %p30, %s31, %s32
    %p36 = pneg %p30
    %p37 = scmp.eq.s32.totalorder %s9, 1
    %p38 = por %p36, %p37
    %p39 = scmp.ne.s32.totalorder %s31, %s34
    %p40 = scmp.eq.s32.totalorder %s9, 0
    %p41 = por %p39, %p40
    %p42 = scmp.ne.s32.totalorder %s31, %s34
    %p43 = scmp.eq.s32.totalorder %s14, 1
    %p44 = por %p42, %p43
    %p45 = scmp.ne.s32.totalorder %s34, %s35
    %p46 = scmp.eq.s32.totalorder %s14, 0
    %p47 = por %p45, %p46
    %p48 = scmp.ne.s32.totalorder %s34, %s35
    %p49 = scmp.eq.s32.totalorder %s15, 1
    %p50 = por %p48, %p49
    %p52 = scmp.ne.s32.totalorder %s35, %s51
    %p53 = scmp.eq.s32.totalorder %s15, 0
    %p54 = por %p52, %p53
    %s55 = ssub.s32 %s17, %s24
    %p56 = scmp.eq.s32.totalorder %s55, 0
    %s58 = sadd.s32 %s57, 1
    %s59 = scalar_select %p56, %s57, %s58
    %p62 = pneg %p56
    %p63 = scmp.eq.s32.totalorder %s9, 1
    %p64 = por %p62, %p63
    %p65 = scmp.ne.s32.totalorder %s57, %s60
    %p66 = scmp.eq.s32.totalorder %s9, 0
    %p67 = por %p65, %p66
    %p68 = scmp.ne.s32.totalorder %s57, %s60
    %p69 = scmp.eq.s32.totalorder %s14, 1
    %p70 = por %p68, %p69
    %p71 = scmp.ne.s32.totalorder %s60, %s61
    %p72 = scmp.eq.s32.totalorder %s14, 0
    %p73 = por %p71, %p72
    %p74 = scmp.ne.s32.totalorder %s60, %s61
    %p75 = scmp.eq.s32.totalorder %s15, 1
    %p76 = por %p74, %p75
    %p78 = scmp.ne.s32.totalorder %s61, %s77
    %p79 = scmp.eq.s32.totalorder %s15, 0
    %p80 = por %p78, %p79
    %s81 = ssub.s32 %s17, %s24
    %p82 = scmp.eq.s32.totalorder %s81, 0
    %s84 = sadd.s32 %s83, 1
    %s85 = scalar_select %p82, %s83, %s84
    %p88 = pneg %p82
    %p89 = scmp.eq.s32.totalorder %s9, 1
    %p90 = por %p88, %p89
    %p91 = scmp.ne.s32.totalorder %s83, %s86
    %p92 = scmp.eq.s32.totalorder %s9, 0
    %p93 = por %p91, %p92
    %p94 = scmp.ne.s32.totalorder %s83, %s86
    %p95 = scmp.eq.s32.totalorder %s14, 1
    %p96 = por %p94, %p95
    %p97 = scmp.ne.s32.totalorder %s86, %s87
    %p98 = scmp.eq.s32.totalorder %s14, 0
    %p99 = por %p97, %p98
    %p100 = scmp.ne.s32.totalorder %s86, %s87
    %p101 = scmp.eq.s32.totalorder %s15, 1
    %p102 = por %p100, %p101
    %p104 = scmp.ne.s32.totalorder %s87, %s103
    %p105 = scmp.eq.s32.totalorder %s15, 0
    %p106 = por %p104, %p105
    %s107 = ssub.s32 %s16, %s28
    %s108 = ssub.s32 %s17, %s24
    %s109 = sor.u32 %s107, %s108
    %p110 = scmp.eq.s32.totalorder %s109, 0
    %s112 = sadd.s32 %s111, 1
    %s113 = scalar_select %p110, %s111, %s112
    %p116 = pneg %p110
    %p117 = scmp.eq.s32.totalorder %s9, 1
    %p118 = por %p116, %p117
    %p119 = scmp.ne.s32.totalorder %s111, %s114
    %p120 = scmp.eq.s32.totalorder %s9, 0
    %p121 = por %p119, %p120
    %p122 = scmp.ne.s32.totalorder %s111, %s114
    %p123 = scmp.eq.s32.totalorder %s14, 1
    %p124 = por %p122, %p123
    %p125 = scmp.ne.s32.totalorder %s114, %s115
    %p126 = scmp.eq.s32.totalorder %s14, 0
    %p127 = por %p125, %p126
    %p128 = scmp.ne.s32.totalorder %s114, %s115
    %p129 = scmp.eq.s32.totalorder %s15, 1
    %p130 = por %p128, %p129
    %p132 = scmp.ne.s32.totalorder %s115, %s131
    %p133 = scmp.eq.s32.totalorder %s15, 0
    %p134 = por %p132, %p133
    %p135 = scmp.le.s32.totalorder 1, %s9
    %p136 = scmp.lt.s32.totalorder %s9, 3
    %p137 = pnand %p135, %p136
    %p138 = pneg %p137
    // Predicated region
    $region9: #{local_enhancer_forward.11} parent=5 // pred_check
      _
    $region10: #{local_enhancer_forward.11} parent=5 // pred_check_branch
      %140 = sbr.rel (%p137) target = $region12
    $region11: #{local_enhancer_forward.11} parent=5 // pred_region
      %s141 = ssub.s32 %s9, 1
      // Predicated region
      $region13: #{local_enhancer_forward.11} parent=11 // pred_check
        %p142 = pneg %p73
      $region14: #{local_enhancer_forward.11} parent=11 // pred_check_branch
        %144 = sbr.rel (%p142) target = $region16
      $region15: #{local_enhancer_forward.11} parent=11 // pred_region
        %p145 = scmp.lt.s32.totalorder %s19, 0
        %s146 = scalar_select %p145, %s19, 0
        %s147 = smul.addr %s146, 4
        %s148 = scalar_lea.vmem %s1, %s147
      $region16: #{local_enhancer_forward.11} parent=11 // pred_fallthru
        _
      // Predicated region
      $region17: #{local_enhancer_forward.11} parent=11 // pred_check
        %p149 = pneg %p99
      $region18: #{local_enhancer_forward.11} parent=11 // pred_check_branch
        %151 = sbr.rel (%p149) target = $region20
      $region19: #{local_enhancer_forward.11} parent=11 // pred_region
        %p152 = scmp.lt.s32.totalorder %s19, 0
        %s153 = scalar_select %p152, %s19, 0
        %s154 = scalar_lea.vmem %s2, %s153
      $region20: #{local_enhancer_forward.11} parent=11 // pred_fallthru
        _
    $region12: #{local_enhancer_forward.11} parent=5 // pred_fallthru
      _
    %p155 = scmp.lt.s32.totalorder %s9, 2
    // Predicated region
    $region21: #{local_enhancer_forward.11} parent=5 // pred_check
      %p156 = pneg %p155
    $region22: #{local_enhancer_forward.11} parent=5 // pred_check_branch
      %158 = sbr.rel (%p156) target = $region24
    $region23: #{local_enhancer_forward.11} parent=5 // pred_region
      // Predicated region
      $region25: #{local_enhancer_forward.11} parent=23 // pred_check
        %p159 = pneg %p41
      $region26: #{local_enhancer_forward.11} parent=23 // pred_check_branch
        %161 = sbr.rel (%p159) target = $region28
      $region27: #{local_enhancer_forward.11} parent=23 // pred_region
        %s162 = smul.u32 8, %s16
        %p163 = scmp.lt.s32.totalorder %s162, 15
        %s164 = scalar_select %p163, %s162, 15
        %s165 = smul.addr %s164, 2
        %s166 = smul.addr %s165, 4
        %s167 = scalar_lea.vmem %s0, %s166
        %s168 = smul.u32 8, %s16
      $region28: #{local_enhancer_forward.11} parent=23 // pred_fallthru
        _
    $region24: #{local_enhancer_forward.11} parent=5 // pred_fallthru
      _
    %p169 = scmp.le.s32.totalorder 1, %s9
    %p170 = scmp.lt.s32.totalorder %s9, 3
    %p171 = pnand %p169, %p170
    %p172 = pneg %p171
    // Predicated region
    $region29: #{local_enhancer_forward.11} parent=5 // pred_check
      _
    $region30: #{local_enhancer_forward.11} parent=5 // pred_check_branch
      %174 = sbr.rel (%p171) target = $region32
    $region31: #{local_enhancer_forward.11} parent=5 // pred_region
      %s175 = ssub.s32 %s9, 1
      %s176 = smul.u32 8, %s18
      %p177 = scmp.lt.s32.totalorder %s176, 15
      %s178 = scalar_select %p177, %s176, 15
      %s179 = smul.addr %s178, 2
      %s180 = smul.addr %s179, 4
      %s181 = scalar_lea.vmem %s0, %s180
      %p182 = pneg %p47
      %p183 = pneg %p44
      %p184 = scmp.lt.s32.totalorder %s19, 0
      %s185 = scalar_select %p184, %s19, 0
      %s186 = smul.addr %s185, 4
      %s187 = scalar_lea.vmem %s1, %s186
      %p188 = pneg %p73
      %p189 = pneg %p70
      %p190 = scmp.lt.s32.totalorder %s19, 0
      %s191 = scalar_select %p190, %s19, 0
      %s192 = scalar_lea.vmem %s2, %s191
      %p193 = pneg %p99
      %p194 = pneg %p96
      %p195 = pneg %p127
      %p196 = pneg %p124
      %s197 = smul.u32 8, %s18
      %p198 = scmp.lt.s32.totalorder %s197, 15
      %s199 = scalar_select %p198, %s197, 15
      %p200 = scmp.lt.s32.totalorder %s19, 0
      %s201 = scalar_select %p200, %s19, 0
      %s202 = sadd.s32 %s201, %s199
      %s203 = smul.addr %s202, 4
      %s204 = scalar_lea.vmem %s3, %s203
      %s205 = smul.u32 8, %s18
      %p206 = scmp.lt.s32.totalorder %s205, 15
      %s207 = scalar_select %p206, %s205, 15
      %s208 = smul.addr %s207, 2
      %s209 = smul.addr %s208, 4
      %s210 = scalar_lea.vmem %s0, %s209
      %s211 = smul.u32 8, %s18
      %p212 = scmp.lt.s32.totalorder %s19, 0
      %s213 = scalar_select %p212, %s19, 0
      %s214 = smul.addr %s213, 4
      %s215 = scalar_lea.vmem %s1, %s214
      %p216 = scmp.lt.s32.totalorder %s19, 0
      %s217 = scalar_select %p216, %s19, 0
      %s218 = scalar_lea.vmem %s2, %s217
      %s219 = smul.u32 8, %s18
      %p220 = scmp.lt.s32.totalorder %s219, 15
      %s221 = scalar_select %p220, %s219, 15
      %p222 = scmp.lt.s32.totalorder %s19, 0
      %s223 = scalar_select %p222, %s19, 0
      %s224 = sadd.s32 %s223, %s221
      %s225 = smul.addr %s224, 4
      %s226 = scalar_lea.vmem %s3, %s225
      %s227 = smul.u32 8, %s18
      %v229 = vld [vmem:[%s210] sm:$0xff]
      %v230 = vld [vmem:[%s210 + $0x8] sm:$0xff]
      %v231 = vld [vmem:[%s210 + $0x10] sm:$0xff]
      %v232 = vld [vmem:[%s210 + $0x18] sm:$0xff]
      %v233 = vld [vmem:[%s210 + $0x20] sm:$0xff]
      %v234 = vld [vmem:[%s210 + $0x28] sm:$0xff]
      %v235 = vld [vmem:[%s210 + $0x30] sm:$0xff]
      %v236 = vld [vmem:[%s210 + $0x38] sm:$0xff]
      %v237 = vld [vmem:[%s215] sm:$0xf]
      %v238 = vld [vmem:[%s215 + $0x4] sm:$0xf]
      %v239 = vld [vmem:[%s215 + $0x8] sm:$0xf]
      %v240 = vld [vmem:[%s215 + $0xc] sm:$0xf]
      %v241 = vld [vmem:[%s215 + $0x10] sm:$0xf]
      %v242 = vld [vmem:[%s215 + $0x14] sm:$0xf]
      %v243 = vld [vmem:[%s215 + $0x18] sm:$0xf]
      %v244 = vld [vmem:[%s215 + $0x1c] sm:$0xf]
      %v245 = vld [vmem:[%s215 + $0x20] sm:$0xf]
      %v246 = vld [vmem:[%s215 + $0x24] sm:$0xf]
      %v247 = vld [vmem:[%s215 + $0x28] sm:$0xf]
      %v248 = vld [vmem:[%s215 + $0x2c] sm:$0xf]
      %v249 = vld [vmem:[%s215 + $0x30] sm:$0xf]
      %v250 = vld [vmem:[%s215 + $0x34] sm:$0xf]
      %v251 = vld [vmem:[%s215 + $0x38] sm:$0xf]
      %v252 = vld [vmem:[%s215 + $0x3c] sm:$0xf]
      %v253 = vld [vmem:[%s215 + $0x40] sm:$0xf]
      %v254 = vld [vmem:[%s215 + $0x44] sm:$0xf]
      %v255 = vld [vmem:[%s215 + $0x48] sm:$0xf]
      %v256 = vld [vmem:[%s215 + $0x4c] sm:$0xf]
      %v257 = vld [vmem:[%s215 + $0x50] sm:$0xf]
      %v258 = vld [vmem:[%s215 + $0x54] sm:$0xf]
      %v259 = vld [vmem:[%s215 + $0x58] sm:$0xf]
      %v260 = vld [vmem:[%s215 + $0x5c] sm:$0xf]
      %v261 = vld [vmem:[%s215 + $0x60] sm:$0xf]
      %v262 = vld [vmem:[%s215 + $0x64] sm:$0xf]
      %v263 = vld [vmem:[%s215 + $0x68] sm:$0xf]
      %v264 = vld [vmem:[%s215 + $0x6c] sm:$0xf]
      %v265 = vld [vmem:[%s215 + $0x70] sm:$0xf]
      %v266 = vld [vmem:[%s215 + $0x74] sm:$0xf]
      %v267 = vld [vmem:[%s215 + $0x78] sm:$0xf]
      %v268 = vld [vmem:[%s215 + $0x7c] sm:$0xf]
      %v269 = vld [vmem:[%s218] sm:$0x1]
      %v271 = vlaneseq
      %v272 = vshrl.u32 %v271, 7
      %v273 = vsub.s32 0, %v272
      %v274 = vrot.slane %v269, %v273
      %v284 = vunpack.c.l.b16 %v229
      %v285 = vunpack.c.h.b16 %v229
      %v286 = vunpack.c.l.b16 %v230
      %v287 = vunpack.c.h.b16 %v230
      %v288 = vunpack.c.l.b16 %v231
      %v289 = vunpack.c.h.b16 %v231
      %v290 = vunpack.c.l.b16 %v232
      %v291 = vunpack.c.h.b16 %v232
      %v292 = vunpack.c.l.b16 %v233
      %v293 = vunpack.c.h.b16 %v233
      %v294 = vunpack.c.l.b16 %v234
      %v295 = vunpack.c.h.b16 %v234
      %v296 = vunpack.c.l.b16 %v235
      %v297 = vunpack.c.h.b16 %v235
      %v298 = vunpack.c.l.b16 %v236
      %v299 = vunpack.c.h.b16 %v236
      %v300 = vpack.c.b16 %v286, %v284
      %v301 = vpack.c.b16 %v287, %v285
      %v302 = vpack.c.b16 %v290, %v288
      %v303 = vpack.c.b16 %v291, %v289
      %v304 = vpack.c.b16 %v294, %v292
      %v305 = vpack.c.b16 %v295, %v293
      %v306 = vpack.c.b16 %v298, %v296
      %v307 = vpack.c.b16 %v299, %v297
      %v348 = vunpack.c.l.b16 %v237
      %v349 = vunpack.c.l.b16 %v238
      %v350 = vunpack.c.l.b16 %v239
      %v351 = vunpack.c.l.b16 %v240
      %v352 = vunpack.c.l.b16 %v241
      %v353 = vunpack.c.l.b16 %v242
      %v354 = vunpack.c.l.b16 %v243
      %v355 = vunpack.c.l.b16 %v244
      %v356 = vunpack.c.l.b16 %v245
      %v357 = vunpack.c.l.b16 %v246
      %v358 = vunpack.c.l.b16 %v247
      %v359 = vunpack.c.l.b16 %v248
      %v360 = vunpack.c.l.b16 %v249
      %v361 = vunpack.c.l.b16 %v250
      %v362 = vunpack.c.l.b16 %v251
      %v363 = vunpack.c.l.b16 %v252
      %v364 = vunpack.c.l.b16 %v253
      %v365 = vunpack.c.l.b16 %v254
      %v366 = vunpack.c.l.b16 %v255
      %v367 = vunpack.c.l.b16 %v256
      %v368 = vunpack.c.l.b16 %v257
      %v369 = vunpack.c.l.b16 %v258
      %v370 = vunpack.c.l.b16 %v259
      %v371 = vunpack.c.l.b16 %v260
      %v372 = vunpack.c.l.b16 %v261
      %v373 = vunpack.c.l.b16 %v262
      %v374 = vunpack.c.l.b16 %v263
      %v375 = vunpack.c.l.b16 %v264
      %v376 = vunpack.c.l.b16 %v265
      %v377 = vunpack.c.l.b16 %v266
      %v378 = vunpack.c.l.b16 %v267
      %v379 = vunpack.c.l.b16 %v268
      %v380 = vpack.c.b16 %v349, %v348
      %v381 = vpack.c.b16 %v351, %v350
      %v382 = vpack.c.b16 %v353, %v352
      %v383 = vpack.c.b16 %v355, %v354
      %v384 = vpack.c.b16 %v357, %v356
      %v385 = vpack.c.b16 %v359, %v358
      %v386 = vpack.c.b16 %v361, %v360
      %v387 = vpack.c.b16 %v363, %v362
      %v388 = vpack.c.b16 %v365, %v364
      %v389 = vpack.c.b16 %v367, %v366
      %v390 = vpack.c.b16 %v369, %v368
      %v391 = vpack.c.b16 %v371, %v370
      %v392 = vpack.c.b16 %v373, %v372
      %v393 = vpack.c.b16 %v375, %v374
      %v394 = vpack.c.b16 %v377, %v376
      %v395 = vpack.c.b16 %v379, %v378
      %412 = vmatprep.subr.bf16.mxu0 0
      %413 = vmatpush1.bf16.msra.mxu0 %v380
      %414 = vmatprep.subr.bf16.mxu0 0
      %415 = vmatpush1.bf16.msra.mxu0 %v381
      %416 = vmatprep.subr.bf16.mxu0 0
      %417 = vmatpush1.bf16.msra.mxu0 %v382
      %418 = vmatprep.subr.bf16.mxu0 0
      %419 = vmatpush1.bf16.msra.mxu0 %v383
      %420 = vmatprep.subr.bf16.mxu0 0
      %421 = vmatpush1.bf16.msra.mxu0 %v384
      %422 = vmatprep.subr.bf16.mxu0 0
      %423 = vmatpush1.bf16.msra.mxu0 %v385
      %424 = vmatprep.subr.bf16.mxu0 0
      %425 = vmatpush1.bf16.msra.mxu0 %v386
      %426 = vmatprep.subr.bf16.mxu0 0
      %427 = vmatpush1.bf16.msra.mxu0 %v387
      %428 = vmatprep.subr.bf16.mxu0 0
      %429 = vmatpush1.bf16.msra.mxu0 %v388
      %430 = vmatprep.subr.bf16.mxu0 0
      %431 = vmatpush1.bf16.msra.mxu0 %v389
      %432 = vmatprep.subr.bf16.mxu0 0
      %433 = vmatpush1.bf16.msra.mxu0 %v390
      %434 = vmatprep.subr.bf16.mxu0 0
      %435 = vmatpush1.bf16.msra.mxu0 %v391
      %436 = vmatprep.subr.bf16.mxu0 0
      %437 = vmatpush1.bf16.msra.mxu0 %v392
      %438 = vmatprep.subr.bf16.mxu0 0
      %439 = vmatpush1.bf16.msra.mxu0 %v393
      %440 = vmatprep.subr.bf16.mxu0 0
      %441 = vmatpush1.bf16.msra.mxu0 %v394
      %442 = vmatprep.subr.bf16.mxu0 0
      %443 = vmatpush1.bf16.msra.mxu0 %v395
      %444 = vmatprep.mubr.bf16.mxu0 %v301
      %445 = vmatmul.mubr.bf16.gmra.mrb[0].mxu0 %v300
      %v446 = vpop.f32.mrb[0].mxu0
      %v447 = vadd.f32 %v274, %v446
      %v448 = vpop.f32.mrb[0].mxu0
      %v449 = vpop.f32.mrb[0].mxu0
      %v450 = vadd.f32 %v274, %v449
      %v451 = vpop.f32.mrb[0].mxu0
      %452 = vmatprep.mubr.bf16.mxu0 %v303
      %453 = vmatmul.mubr.bf16.gmra.mrb[0].mxu0 %v302
      %v454 = vpop.f32.mrb[0].mxu0
      %v455 = vadd.f32 %v274, %v454
      %v456 = vpop.f32.mrb[0].mxu0
      %v457 = vpop.f32.mrb[0].mxu0
      %v458 = vadd.f32 %v274, %v457
      %v459 = vpop.f32.mrb[0].mxu0
      %460 = vmatprep.mubr.bf16.mxu0 %v305
      %461 = vmatmul.mubr.bf16.gmra.mrb[0].mxu0 %v304
      %v462 = vpop.f32.mrb[0].mxu0
      %v463 = vadd.f32 %v274, %v462
      %v464 = vpop.f32.mrb[0].mxu0
      %v465 = vpop.f32.mrb[0].mxu0
      %v466 = vadd.f32 %v274, %v465
      %v467 = vpop.f32.mrb[0].mxu0
      %468 = vmatprep.mubr.bf16.mxu0 %v307
      %469 = vmatmul.mubr.bf16.gmra.mrb[0].mxu0 %v306
      %v470 = vpop.f32.mrb[0].mxu0
      %v471 = vadd.f32 %v274, %v470
      %v472 = vpop.f32.mrb[0].mxu0
      %v473 = vpop.f32.mrb[0].mxu0
      %v474 = vadd.f32 %v274, %v473
      %v475 = vpop.f32.mrb[0].mxu0
      %476 = vdwg.mxu0
      %v477 = vpack.c.bf16 %v450, %v447
      %v478 = vpack.c.bf16 %v458, %v455
      %v479 = vpack.c.bf16 %v466, %v463
      %v480 = vpack.c.bf16 %v474, %v471
      %v485 = vunpack.c.l.b16 %v477
      %v486 = vunpack.c.h.b16 %v477
      %v487 = vunpack.c.l.b16 %v478
      %v488 = vunpack.c.h.b16 %v478
      %v489 = vunpack.c.l.b16 %v479
      %v490 = vunpack.c.h.b16 %v479
      %v491 = vunpack.c.l.b16 %v480
      %v492 = vunpack.c.h.b16 %v480
      %v493 = vpack.c.b16 %v485, %v485
      %v494 = vpack.c.b16 %v486, %v486
      %v495 = vpack.c.b16 %v487, %v487
      %v496 = vpack.c.b16 %v488, %v488
      %v497 = vpack.c.b16 %v489, %v489
      %v498 = vpack.c.b16 %v490, %v490
      %v499 = vpack.c.b16 %v491, %v491
      %v500 = vpack.c.b16 %v492, %v492
      %509 = vst [vmem:[%s226] sm:$0xf] %v493
      %510 = vst [vmem:[%s226 + $0x4] sm:$0xf] %v494
      %511 = vst [vmem:[%s226 + $0x8] sm:$0xf] %v495
      %512 = vst [vmem:[%s226 + $0xc] sm:$0xf] %v496
      %513 = vst [vmem:[%s226 + $0x10] sm:$0xf] %v497
      %514 = vst [vmem:[%s226 + $0x14] sm:$0xf] %v498
      %515 = vst [vmem:[%s226 + $0x18] sm:$0xf] %v499
      %516 = vst [vmem:[%s226 + $0x1c] sm:$0xf] %v500
      %s517 = smul.u32 8, %s18
      %p518 = scmp.lt.s32.totalorder %s517, 15
      %s519 = scalar_select %p518, %s517, 15
      %p520 = scmp.lt.s32.totalorder %s19, 0
      %s521 = scalar_select %p520, %s19, 0
      %s522 = sadd.s32 %s521, %s519
      %s523 = smul.addr %s522, 4
      %s524 = scalar_lea.vmem %s3, %s523
      // Predicated region
      $region33: #{local_enhancer_forward.11} parent=31 // pred_check
        %p525 = pneg %p124
      $region34: #{local_enhancer_forward.11} parent=31 // pred_check_branch
        %527 = sbr.rel (%p525) target = $region36
      $region35: #{local_enhancer_forward.11} parent=31 // pred_region
        %s528 = smul.u32 8, %s18
      $region36: #{local_enhancer_forward.11} parent=31 // pred_fallthru
        _
    $region32: #{local_enhancer_forward.11} parent=5 // pred_fallthru
      _
    %p529 = scmp.le.s32.totalorder 2, %s9
    // Predicated region
    $region37: #{local_enhancer_forward.11} parent=5 // pred_check
      %p530 = pneg %p529
    $region38: #{local_enhancer_forward.11} parent=5 // pred_check_branch
      %532 = sbr.rel (%p530) target = $region40
    $region39: #{local_enhancer_forward.11} parent=5 // pred_region
      %s533 = ssub.s32 %s9, 2
      // Predicated region
      $region41: #{local_enhancer_forward.11} parent=39 // pred_check
        %p534 = pneg %p130
      $region42: #{local_enhancer_forward.11} parent=39 // pred_check_branch
        %536 = sbr.rel (%p534) target = $region44
      $region43: #{local_enhancer_forward.11} parent=39 // pred_region
        %s537 = smul.u32 8, %s20
        %p538 = scmp.lt.s32.totalorder %s537, 15
        %s539 = scalar_select %p538, %s537, 15
        %p540 = scmp.lt.s32.totalorder %s21, 0
        %s541 = scalar_select %p540, %s21, 0
        %s542 = sadd.s32 %s541, %s539
        %s543 = smul.addr %s542, 4
        %s544 = scalar_lea.vmem %s3, %s543
      $region44: #{local_enhancer_forward.11} parent=39 // pred_fallthru
        _
    $region40: #{local_enhancer_forward.11} parent=5 // pred_fallthru
      _
  $region6: #{local_enhancer_forward.11} parent=0 // loop_footer
    %s13 = sadd.s32 1, %s9
  $region7: #{local_enhancer_forward.11} parent=0 // loop_footer_branch
    %8 = sbr.rel target = $region3
  $region8: #{local_enhancer_forward.11} parent=0 // loop_exit
    _

// kernel: local_enhancer_forward.13
$region0: #{local_enhancer_forward.13}
  #allocation0 [shape = 'u32[]', space=smem, size = 0x4, offset = 0x4, fixed_abs, tag = 'smem constant byte address 0x4 - core index']
  #allocation1 [shape = 'u32[144,128]{1,0:T(1,128)}', space=vmem, size = 0x12000, scoped, tag = 'internal scratch']
  %s0 = inlined_call_operand.vmem [shape: bf16[512,384], index: 0, kind: input, shape index: {}]
  %s1 = inlined_call_operand.vmem [shape: bf16[384,128], index: 1, kind: input, shape index: {}]
  %s2 = inlined_call_operand.vmem [shape: f32[1,128], index: 2, kind: input, shape index: {}]
  %s3 = inlined_call_operand.vmem [shape: bf16[512,128], index: 3, kind: output, shape index: {}]
  %s4 = sld [smem:[#allocation0]]
  $region45: #{local_enhancer_forward.13} parent=0
    _
  %s6 = ssub.s32 1, %s4
  %s7 = scalar_select 0, %s6, %s4
  loop: start=0, step=1, limit=4
  $region2: #{local_enhancer_forward.13} parent=0 // loop_pre_header
    _
  $region3: #{local_enhancer_forward.13} parent=0 // loop_header
    %s9 = sphi 0, %s13
    %p10 = scmp.ge.s32.totalorder %s9, 4
    %s16 = sphi 0, %s28
    %s17 = sphi 0, %s24
    %s18 = sphi 0, %s16
    %s19 = sphi 0, %s17
    %s20 = sphi 0, %s18
    %s21 = sphi 0, %s19
    %s31 = sphi 0, %s33
    %s34 = sphi 0, %s31
    %s35 = sphi 0, %s34
    %s51 = sphi 0, %s35
    %s57 = sphi 0, %s59
    %s60 = sphi 0, %s57
    %s61 = sphi 0, %s60
    %s77 = sphi 0, %s61
    %s83 = sphi 0, %s85
    %s86 = sphi 0, %s83
    %s87 = sphi 0, %s86
    %s103 = sphi 0, %s87
    %s111 = sphi 0, %s113
    %s114 = sphi 0, %s111
    %s115 = sphi 0, %s114
    %s131 = sphi 0, %s115
  $region4: #{local_enhancer_forward.13} parent=0 // loop_header_branch
    %12 = sbr.rel (%p10) target = $region8
  $region5: #{local_enhancer_forward.13} parent=0 // loop_body
    %s14 = ssub.s32 %s9, 1
    %s15 = ssub.s32 %s9, 2
    %s22 = sadd.s32 1, %s17
    %p23 = scmp.ge.s32.totalorder %s22, 1
    %s24 = scalar_select %p23, 0, %s22
    %s25 = sadd.s32 1, %s16
    %s26 = scalar_select %p23, %s25, %s16
    %p27 = scmp.ge.s32.totalorder %s26, 2
    %s28 = scalar_select %p27, 0, %s26
    %s29 = ssub.s32 %s16, %s28
    %p30 = scmp.eq.s32.totalorder %s29, 0
    %s32 = sadd.s32 %s31, 1
    %s33 = scalar_select %p30, %s31, %s32
    %p36 = pneg %p30
    %p37 = scmp.eq.s32.totalorder %s9, 1
    %p38 = por %p36, %p37
    %p39 = scmp.ne.s32.totalorder %s31, %s34
    %p40 = scmp.eq.s32.totalorder %s9, 0
    %p41 = por %p39, %p40
    %p42 = scmp.ne.s32.totalorder %s31, %s34
    %p43 = scmp.eq.s32.totalorder %s14, 1
    %p44 = por %p42, %p43
    %p45 = scmp.ne.s32.totalorder %s34, %s35
    %p46 = scmp.eq.s32.totalorder %s14, 0
    %p47 = por %p45, %p46
    %p48 = scmp.ne.s32.totalorder %s34, %s35
    %p49 = scmp.eq.s32.totalorder %s15, 1
    %p50 = por %p48, %p49
    %p52 = scmp.ne.s32.totalorder %s35, %s51
    %p53 = scmp.eq.s32.totalorder %s15, 0
    %p54 = por %p52, %p53
    %s55 = ssub.s32 %s17, %s24
    %p56 = scmp.eq.s32.totalorder %s55, 0
    %s58 = sadd.s32 %s57, 1
    %s59 = scalar_select %p56, %s57, %s58
    %p62 = pneg %p56
    %p63 = scmp.eq.s32.totalorder %s9, 1
    %p64 = por %p62, %p63
    %p65 = scmp.ne.s32.totalorder %s57, %s60
    %p66 = scmp.eq.s32.totalorder %s9, 0
    %p67 = por %p65, %p66
    %p68 = scmp.ne.s32.totalorder %s57, %s60
    %p69 = scmp.eq.s32.totalorder %s14, 1
    %p70 = por %p68, %p69
    %p71 = scmp.ne.s32.totalorder %s60, %s61
    %p72 = scmp.eq.s32.totalorder %s14, 0
    %p73 = por %p71, %p72
    %p74 = scmp.ne.s32.totalorder %s60, %s61
    %p75 = scmp.eq.s32.totalorder %s15, 1
    %p76 = por %p74, %p75
    %p78 = scmp.ne.s32.totalorder %s61, %s77
    %p79 = scmp.eq.s32.totalorder %s15, 0
    %p80 = por %p78, %p79
    %s81 = ssub.s32 %s17, %s24
    %p82 = scmp.eq.s32.totalorder %s81, 0
    %s84 = sadd.s32 %s83, 1
    %s85 = scalar_select %p82, %s83, %s84
    %p88 = pneg %p82
    %p89 = scmp.eq.s32.totalorder %s9, 1
    %p90 = por %p88, %p89
    %p91 = scmp.ne.s32.totalorder %s83, %s86
    %p92 = scmp.eq.s32.totalorder %s9, 0
    %p93 = por %p91, %p92
    %p94 = scmp.ne.s32.totalorder %s83, %s86
    %p95 = scmp.eq.s32.totalorder %s14, 1
    %p96 = por %p94, %p95
    %p97 = scmp.ne.s32.totalorder %s86, %s87
    %p98 = scmp.eq.s32.totalorder %s14, 0
    %p99 = por %p97, %p98
    %p100 = scmp.ne.s32.totalorder %s86, %s87
    %p101 = scmp.eq.s32.totalorder %s15, 1
    %p102 = por %p100, %p101
    %p104 = scmp.ne.s32.totalorder %s87, %s103
    %p105 = scmp.eq.s32.totalorder %s15, 0
    %p106 = por %p104, %p105
    %s107 = ssub.s32 %s16, %s28
    %s108 = ssub.s32 %s17, %s24
    %s109 = sor.u32 %s107, %s108
    %p110 = scmp.eq.s32.totalorder %s109, 0
    %s112 = sadd.s32 %s111, 1
    %s113 = scalar_select %p110, %s111, %s112
    %p116 = pneg %p110
    %p117 = scmp.eq.s32.totalorder %s9, 1
    %p118 = por %p116, %p117
    %p119 = scmp.ne.s32.totalorder %s111, %s114
    %p120 = scmp.eq.s32.totalorder %s9, 0
    %p121 = por %p119, %p120
    %p122 = scmp.ne.s32.totalorder %s111, %s114
    %p123 = scmp.eq.s32.totalorder %s14, 1
    %p124 = por %p122, %p123
    %p125 = scmp.ne.s32.totalorder %s114, %s115
    %p126 = scmp.eq.s32.totalorder %s14, 0
    %p127 = por %p125, %p126
    %p128 = scmp.ne.s32.totalorder %s114, %s115
    %p129 = scmp.eq.s32.totalorder %s15, 1
    %p130 = por %p128, %p129
    %p132 = scmp.ne.s32.totalorder %s115, %s131
    %p133 = scmp.eq.s32.totalorder %s15, 0
    %p134 = por %p132, %p133
    %p135 = scmp.le.s32.totalorder 1, %s9
    %p136 = scmp.lt.s32.totalorder %s9, 3
    %p137 = pnand %p135, %p136
    %p138 = pneg %p137
    // Predicated region
    $region9: #{local_enhancer_forward.13} parent=5 // pred_check
      _
    $region10: #{local_enhancer_forward.13} parent=5 // pred_check_branch
      %140 = sbr.rel (%p137) target = $region12
    $region11: #{local_enhancer_forward.13} parent=5 // pred_region
      %s141 = ssub.s32 %s9, 1
      // Predicated region
      $region13: #{local_enhancer_forward.13} parent=11 // pred_check
        %p142 = pneg %p73
      $region14: #{local_enhancer_forward.13} parent=11 // pred_check_branch
        %144 = sbr.rel (%p142) target = $region16
      $region15: #{local_enhancer_forward.13} parent=11 // pred_region
        %p145 = scmp.lt.s32.totalorder %s19, 0
        %s146 = scalar_select %p145, %s19, 0
        %s147 = smul.addr %s146, 4
        %s148 = scalar_lea.vmem %s1, %s147
      $region16: #{local_enhancer_forward.13} parent=11 // pred_fallthru
        _
      // Predicated region
      $region17: #{local_enhancer_forward.13} parent=11 // pred_check
        %p149 = pneg %p99
      $region18: #{local_enhancer_forward.13} parent=11 // pred_check_branch
        %151 = sbr.rel (%p149) target = $region20
      $region19: #{local_enhancer_forward.13} parent=11 // pred_region
        %p152 = scmp.lt.s32.totalorder %s19, 0
        %s153 = scalar_select %p152, %s19, 0
        %s154 = scalar_lea.vmem %s2, %s153
      $region20: #{local_enhancer_forward.13} parent=11 // pred_fallthru
        _
    $region12: #{local_enhancer_forward.13} parent=5 // pred_fallthru
      _
    %p155 = scmp.lt.s32.totalorder %s9, 2
    // Predicated region
    $region21: #{local_enhancer_forward.13} parent=5 // pred_check
      %p156 = pneg %p155
    $region22: #{local_enhancer_forward.13} parent=5 // pred_check_branch
      %158 = sbr.rel (%p156) target = $region24
    $region23: #{local_enhancer_forward.13} parent=5 // pred_region
      // Predicated region
      $region25: #{local_enhancer_forward.13} parent=23 // pred_check
        %p159 = pneg %p41
      $region26: #{local_enhancer_forward.13} parent=23 // pred_check_branch
        %161 = sbr.rel (%p159) target = $region28
      $region27: #{local_enhancer_forward.13} parent=23 // pred_region
        %s162 = smul.u32 32, %s16
        %p163 = scmp.lt.s32.totalorder %s162, 63
        %s164 = scalar_select %p163, %s162, 63
        %s165 = smul.addr %s164, 3
        %s166 = smul.addr %s165, 4
        %s167 = scalar_lea.vmem %s0, %s166
        %s168 = smul.u32 32, %s16
      $region28: #{local_enhancer_forward.13} parent=23 // pred_fallthru
        _
    $region24: #{local_enhancer_forward.13} parent=5 // pred_fallthru
      _
    %p169 = scmp.le.s32.totalorder 1, %s9
    %p170 = scmp.lt.s32.totalorder %s9, 3
    %p171 = pnand %p169, %p170
    %p172 = pneg %p171
    // Predicated region
    $region29: #{local_enhancer_forward.13} parent=5 // pred_check
      _
    $region30: #{local_enhancer_forward.13} parent=5 // pred_check_branch
      %174 = sbr.rel (%p171) target = $region32
    $region31: #{local_enhancer_forward.13} parent=5 // pred_region
      %s175 = ssub.s32 %s9, 1
      %s176 = smul.u32 32, %s18
      %p177 = scmp.lt.s32.totalorder %s176, 63
      %s178 = scalar_select %p177, %s176, 63
      %s179 = smul.addr %s178, 3
      %s180 = smul.addr %s179, 4
      %s181 = scalar_lea.vmem %s0, %s180
      %p182 = pneg %p47
      %p183 = pneg %p44
      %p184 = scmp.lt.s32.totalorder %s19, 0
      %s185 = scalar_select %p184, %s19, 0
      %s186 = smul.addr %s185, 4
      %s187 = scalar_lea.vmem %s1, %s186
      %p188 = pneg %p73
      %p189 = pneg %p70
      %p190 = scmp.lt.s32.totalorder %s19, 0
      %s191 = scalar_select %p190, %s19, 0
      %s192 = scalar_lea.vmem %s2, %s191
      %p193 = pneg %p99
      %p194 = pneg %p96
      %p195 = pneg %p127
      %p196 = pneg %p124
      %s197 = smul.u32 32, %s18
      %p198 = scmp.lt.s32.totalorder %s197, 63
      %s199 = scalar_select %p198, %s197, 63
      %p200 = scmp.lt.s32.totalorder %s19, 0
      %s201 = scalar_select %p200, %s19, 0
      %s202 = sadd.s32 %s201, %s199
      %s203 = smul.addr %s202, 4
      %s204 = scalar_lea.vmem %s3, %s203
      %s205 = smul.u32 32, %s18
      %p206 = scmp.lt.s32.totalorder %s205, 63
      %s207 = scalar_select %p206, %s205, 63
      %s208 = smul.addr %s207, 3
      %s209 = smul.addr %s208, 4
      %s210 = scalar_lea.vmem %s0, %s209
      %s211 = smul.u32 32, %s18
      %p212 = scmp.lt.s32.totalorder %s19, 0
      %s213 = scalar_select %p212, %s19, 0
      %s214 = smul.addr %s213, 4
      %s215 = scalar_lea.vmem %s1, %s214
      %p216 = scmp.lt.s32.totalorder %s19, 0
      %s217 = scalar_select %p216, %s19, 0
      %s218 = scalar_lea.vmem %s2, %s217
      %s219 = smul.u32 32, %s18
      %p220 = scmp.lt.s32.totalorder %s219, 63
      %s221 = scalar_select %p220, %s219, 63
      %p222 = scmp.lt.s32.totalorder %s19, 0
      %s223 = scalar_select %p222, %s19, 0
      %s224 = sadd.s32 %s223, %s221
      %s225 = smul.addr %s224, 4
      %s226 = scalar_lea.vmem %s3, %s225
      %s227 = smul.u32 32, %s18
      %v229 = vld [vmem:[%s210] sm:$0xff]
      %v230 = vld [vmem:[%s210 + $0x8] sm:$0xf]
      %v231 = vld [vmem:[%s210 + $0xc] sm:$0xff]
      %v232 = vld [vmem:[%s210 + $0x14] sm:$0xf]
      %v233 = vld [vmem:[%s210 + $0x18] sm:$0xff]
      %v234 = vld [vmem:[%s210 + $0x20] sm:$0xf]
      %v235 = vld [vmem:[%s210 + $0x24] sm:$0xff]
      %v236 = vld [vmem:[%s210 + $0x2c] sm:$0xf]
      %v237 = vld [vmem:[%s210 + $0x30] sm:$0xff]
      %v238 = vld [vmem:[%s210 + $0x38] sm:$0xf]
      %v239 = vld [vmem:[%s210 + $0x3c] sm:$0xff]
      %v240 = vld [vmem:[%s210 + $0x44] sm:$0xf]
      %v241 = vld [vmem:[%s210 + $0x48] sm:$0xff]
      %v242 = vld [vmem:[%s210 + $0x50] sm:$0xf]
      %v243 = vld [vmem:[%s210 + $0x54] sm:$0xff]
      %v244 = vld [vmem:[%s210 + $0x5c] sm:$0xf]
      %v245 = vld [vmem:[%s210 + $0x60] sm:$0xff]
      %v246 = vld [vmem:[%s210 + $0x68] sm:$0xf]
      %v247 = vld [vmem:[%s210 + $0x6c] sm:$0xff]
      %v248 = vld [vmem:[%s210 + $0x74] sm:$0xf]
      %v249 = vld [vmem:[%s210 + $0x78] sm:$0xff]
      %v250 = vld [vmem:[%s210 + $0x80] sm:$0xf]
      %v251 = vld [vmem:[%s210 + $0x84] sm:$0xff]
      %v252 = vld [vmem:[%s210 + $0x8c] sm:$0xf]
      %v253 = vld [vmem:[%s210 + $0x90] sm:$0xff]
      %v254 = vld [vmem:[%s210 + $0x98] sm:$0xf]
      %v255 = vld [vmem:[%s210 + $0x9c] sm:$0xff]
      %v256 = vld [vmem:[%s210 + $0xa4] sm:$0xf]
      %v257 = vld [vmem:[%s210 + $0xa8] sm:$0xff]
      %v258 = vld [vmem:[%s210 + $0xb0] sm:$0xf]
      %v259 = vld [vmem:[%s210 + $0xb4] sm:$0xff]
      %v260 = vld [vmem:[%s210 + $0xbc] sm:$0xf]
      %v261 = vld [vmem:[%s210 + $0xc0] sm:$0xff]
      %v262 = vld [vmem:[%s210 + $0xc8] sm:$0xf]
      %v263 = vld [vmem:[%s210 + $0xcc] sm:$0xff]
      %v264 = vld [vmem:[%s210 + $0xd4] sm:$0xf]
      %v265 = vld [vmem:[%s210 + $0xd8] sm:$0xff]
      %v266 = vld [vmem:[%s210 + $0xe0] sm:$0xf]
      %v267 = vld [vmem:[%s210 + $0xe4] sm:$0xff]
      %v268 = vld [vmem:[%s210 + $0xec] sm:$0xf]
      %v269 = vld [vmem:[%s210 + $0xf0] sm:$0xff]
      %v270 = vld [vmem:[%s210 + $0xf8] sm:$0xf]
      %v271 = vld [vmem:[%s210 + $0xfc] sm:$0xff]
      %v272 = vld [vmem:[%s210 + $0x104] sm:$0xf]
      %v273 = vld [vmem:[%s210 + $0x108] sm:$0xff]
      %v274 = vld [vmem:[%s210 + $0x110] sm:$0xf]
      %v275 = vld [vmem:[%s210 + $0x114] sm:$0xff]
      %v276 = vld [vmem:[%s210 + $0x11c] sm:$0xf]
      %v277 = vld [vmem:[%s210 + $0x120] sm:$0xff]
      %v278 = vld [vmem:[%s210 + $0x128] sm:$0xf]
      %v279 = vld [vmem:[%s210 + $0x12c] sm:$0xff]
      %v280 = vld [vmem:[%s210 + $0x134] sm:$0xf]
      %v281 = vld [vmem:[%s210 + $0x138] sm:$0xff]
      %v282 = vld [vmem:[%s210 + $0x140] sm:$0xf]
      %v283 = vld [vmem:[%s210 + $0x144] sm:$0xff]
      %v284 = vld [vmem:[%s210 + $0x14c] sm:$0xf]
      %v285 = vld [vmem:[%s210 + $0x150] sm:$0xff]
      %v286 = vld [vmem:[%s210 + $0x158] sm:$0xf]
      %v287 = vld [vmem:[%s210 + $0x15c] sm:$0xff]
      %v288 = vld [vmem:[%s210 + $0x164] sm:$0xf]
      %v289 = vld [vmem:[%s210 + $0x168] sm:$0xff]
      %v290 = vld [vmem:[%s210 + $0x170] sm:$0xf]
      %v291 = vld [vmem:[%s210 + $0x174] sm:$0xff]
      %v292 = vld [vmem:[%s210 + $0x17c] sm:$0xf]
      %v293 = vld [vmem:[%s215] sm:$0xf]
      %v294 = vld [vmem:[%s215 + $0x4] sm:$0xf]
      %v295 = vld [vmem:[%s215 + $0x8] sm:$0xf]
      %v296 = vld [vmem:[%s215 + $0xc] sm:$0xf]
      %v297 = vld [vmem:[%s215 + $0x10] sm:$0xf]
      %v298 = vld [vmem:[%s215 + $0x14] sm:$0xf]
      %v299 = vld [vmem:[%s215 + $0x18] sm:$0xf]
      %v300 = vld [vmem:[%s215 + $0x1c] sm:$0xf]
      %v301 = vld [vmem:[%s215 + $0x20] sm:$0xf]
      %v302 = vld [vmem:[%s215 + $0x24] sm:$0xf]
      %v303 = vld [vmem:[%s215 + $0x28] sm:$0xf]
      %v304 = vld [vmem:[%s215 + $0x2c] sm:$0xf]
      %v305 = vld [vmem:[%s215 + $0x30] sm:$0xf]
      %v306 = vld [vmem:[%s215 + $0x34] sm:$0xf]
      %v307 = vld [vmem:[%s215 + $0x38] sm:$0xf]
      %v308 = vld [vmem:[%s215 + $0x3c] sm:$0xf]
      %v309 = vld [vmem:[%s215 + $0x40] sm:$0xf]
      %v310 = vld [vmem:[%s215 + $0x44] sm:$0xf]
      %v311 = vld [vmem:[%s215 + $0x48] sm:$0xf]
      %v312 = vld [vmem:[%s215 + $0x4c] sm:$0xf]
      %v313 = vld [vmem:[%s215 + $0x50] sm:$0xf]
      %v314 = vld [vmem:[%s215 + $0x54] sm:$0xf]
      %v315 = vld [vmem:[%s215 + $0x58] sm:$0xf]
      %v316 = vld [vmem:[%s215 + $0x5c] sm:$0xf]
      %v317 = vld [vmem:[%s215 + $0x60] sm:$0xf]
      %v318 = vld [vmem:[%s215 + $0x64] sm:$0xf]
      %v319 = vld [vmem:[%s215 + $0x68] sm:$0xf]
      %v320 = vld [vmem:[%s215 + $0x6c] sm:$0xf]
      %v321 = vld [vmem:[%s215 + $0x70] sm:$0xf]
      %v322 = vld [vmem:[%s215 + $0x74] sm:$0xf]
      %v323 = vld [vmem:[%s215 + $0x78] sm:$0xf]
      %v324 = vld [vmem:[%s215 + $0x7c] sm:$0xf]
      %v325 = vld [vmem:[%s215 + $0x80] sm:$0xf]
      %v326 = vld [vmem:[%s215 + $0x84] sm:$0xf]
      %v327 = vld [vmem:[%s215 + $0x88] sm:$0xf]
      %v328 = vld [vmem:[%s215 + $0x8c] sm:$0xf]
      %v329 = vld [vmem:[%s215 + $0x90] sm:$0xf]
      %v330 = vld [vmem:[%s215 + $0x94] sm:$0xf]
      %v331 = vld [vmem:[%s215 + $0x98] sm:$0xf]
      %v332 = vld [vmem:[%s215 + $0x9c] sm:$0xf]
      %v333 = vld [vmem:[%s215 + $0xa0] sm:$0xf]
      %v334 = vld [vmem:[%s215 + $0xa4] sm:$0xf]
      %v335 = vld [vmem:[%s215 + $0xa8] sm:$0xf]
      %v336 = vld [vmem:[%s215 + $0xac] sm:$0xf]
      %v337 = vld [vmem:[%s215 + $0xb0] sm:$0xf]
      %v338 = vld [vmem:[%s215 + $0xb4] sm:$0xf]
      %v339 = vld [vmem:[%s215 + $0xb8] sm:$0xf]
      %v340 = vld [vmem:[%s215 + $0xbc] sm:$0xf]
      %v341 = vld [vmem:[%s218] sm:$0x1]
      %v343 = vlaneseq
      %v344 = vshrl.u32 %v343, 7
      %v345 = vsub.s32 0, %v344
      %v346 = vrot.slane %v341, %v345
      %v412 = vunpack.c.l.b16 %v229
      %v413 = vunpack.c.h.b16 %v229
      %v414 = vunpack.c.l.b16 %v230
      %v415 = vunpack.c.l.b16 %v231
      %v416 = vunpack.c.h.b16 %v231
      %v417 = vunpack.c.l.b16 %v232
      %v418 = vunpack.c.l.b16 %v233
      %v419 = vunpack.c.h.b16 %v233
      %v420 = vunpack.c.l.b16 %v234
      %v421 = vunpack.c.l.b16 %v235
      %v422 = vunpack.c.h.b16 %v235
      %v423 = vunpack.c.l.b16 %v236
      %v424 = vunpack.c.l.b16 %v237
      %v425 = vunpack.c.h.b16 %v237
      %v426 = vunpack.c.l.b16 %v238
      %v427 = vunpack.c.l.b16 %v239
      %v428 = vunpack.c.h.b16 %v239
      %v429 = vunpack.c.l.b16 %v240
      %v430 = vunpack.c.l.b16 %v241
      %v431 = vunpack.c.h.b16 %v241
      %v432 = vunpack.c.l.b16 %v242
      %v433 = vunpack.c.l.b16 %v243
      %v434 = vunpack.c.h.b16 %v243
      %v435 = vunpack.c.l.b16 %v244
      %v436 = vunpack.c.l.b16 %v245
      %v437 = vunpack.c.h.b16 %v245
      %v438 = vunpack.c.l.b16 %v246
      %v439 = vunpack.c.l.b16 %v247
      %v440 = vunpack.c.h.b16 %v247
      %v441 = vunpack.c.l.b16 %v248
      %v442 = vunpack.c.l.b16 %v249
      %v443 = vunpack.c.h.b16 %v249
      %v444 = vunpack.c.l.b16 %v250
      %v445 = vunpack.c.l.b16 %v251
      %v446 = vunpack.c.h.b16 %v251
      %v447 = vunpack.c.l.b16 %v252
      %v448 = vunpack.c.l.b16 %v253
      %v449 = vunpack.c.h.b16 %v253
      %v450 = vunpack.c.l.b16 %v254
      %v451 = vunpack.c.l.b16 %v255
      %v452 = vunpack.c.h.b16 %v255
      %v453 = vunpack.c.l.b16 %v256
      %v454 = vunpack.c.l.b16 %v257
      %v455 = vunpack.c.h.b16 %v257
      %v456 = vunpack.c.l.b16 %v258
      %v457 = vunpack.c.l.b16 %v259
      %v458 = vunpack.c.h.b16 %v259
      %v459 = vunpack.c.l.b16 %v260
      %v460 = vunpack.c.l.b16 %v261
      %v461 = vunpack.c.h.b16 %v261
      %v462 = vunpack.c.l.b16 %v262
      %v463 = vunpack.c.l.b16 %v263
      %v464 = vunpack.c.h.b16 %v263
      %v465 = vunpack.c.l.b16 %v264
      %v466 = vunpack.c.l.b16 %v265
      %v467 = vunpack.c.h.b16 %v265
      %v468 = vunpack.c.l.b16 %v266
      %v469 = vunpack.c.l.b16 %v267
      %v470 = vunpack.c.h.b16 %v267
      %v471 = vunpack.c.l.b16 %v268
      %v472 = vunpack.c.l.b16 %v269
      %v473 = vunpack.c.h.b16 %v269
      %v474 = vunpack.c.l.b16 %v270
      %v475 = vunpack.c.l.b16 %v271
      %v476 = vunpack.c.h.b16 %v271
      %v477 = vunpack.c.l.b16 %v272
      %v478 = vunpack.c.l.b16 %v273
      %v479 = vunpack.c.h.b16 %v273
      %v480 = vunpack.c.l.b16 %v274
      %v481 = vunpack.c.l.b16 %v275
      %v482 = vunpack.c.h.b16 %v275
      %v483 = vunpack.c.l.b16 %v276
      %v484 = vunpack.c.l.b16 %v277
      %v485 = vunpack.c.h.b16 %v277
      %v486 = vunpack.c.l.b16 %v278
      %v487 = vunpack.c.l.b16 %v279
      %v488 = vunpack.c.h.b16 %v279
      %v489 = vunpack.c.l.b16 %v280
      %v490 = vunpack.c.l.b16 %v281
      %v491 = vunpack.c.h.b16 %v281
      %v492 = vunpack.c.l.b16 %v282
      %v493 = vunpack.c.l.b16 %v283
      %v494 = vunpack.c.h.b16 %v283
      %v495 = vunpack.c.l.b16 %v284
      %v496 = vunpack.c.l.b16 %v285
      %v497 = vunpack.c.h.b16 %v285
      %v498 = vunpack.c.l.b16 %v286
      %v499 = vunpack.c.l.b16 %v287
      %v500 = vunpack.c.h.b16 %v287
      %v501 = vunpack.c.l.b16 %v288
      %v502 = vunpack.c.l.b16 %v289
      %v503 = vunpack.c.h.b16 %v289
      %v504 = vunpack.c.l.b16 %v290
      %v505 = vunpack.c.l.b16 %v291
      %v506 = vunpack.c.h.b16 %v291
      %v507 = vunpack.c.l.b16 %v292
      %v508 = vpack.c.b16 %v415, %v412
      %v509 = vpack.c.b16 %v416, %v413
      %v510 = vpack.c.b16 %v417, %v414
      %v511 = vpack.c.b16 %v421, %v418
      %v512 = vpack.c.b16 %v422, %v419
      %v513 = vpack.c.b16 %v423, %v420
      %v514 = vpack.c.b16 %v427, %v424
      %v515 = vpack.c.b16 %v428, %v425
      %v516 = vpack.c.b16 %v429, %v426
      %v517 = vpack.c.b16 %v433, %v430
      %v518 = vpack.c.b16 %v434, %v431
      %v519 = vpack.c.b16 %v435, %v432
      %v520 = vpack.c.b16 %v439, %v436
      %v521 = vpack.c.b16 %v440, %v437
      %v522 = vpack.c.b16 %v441, %v438
      %v523 = vpack.c.b16 %v445, %v442
      %v524 = vpack.c.b16 %v446, %v443
      %v525 = vpack.c.b16 %v447, %v444
      %v526 = vpack.c.b16 %v451, %v448
      %v527 = vpack.c.b16 %v452, %v449
      %v528 = vpack.c.b16 %v453, %v450
      %v529 = vpack.c.b16 %v457, %v454
      %v530 = vpack.c.b16 %v458, %v455
      %v531 = vpack.c.b16 %v459, %v456
      %v532 = vpack.c.b16 %v463, %v460
      %v533 = vpack.c.b16 %v464, %v461
      %v534 = vpack.c.b16 %v465, %v462
      %v535 = vpack.c.b16 %v469, %v466
      %v536 = vpack.c.b16 %v470, %v467
      %v537 = vpack.c.b16 %v471, %v468
      %v538 = vpack.c.b16 %v475, %v472
      %v539 = vpack.c.b16 %v476, %v473
      %v540 = vpack.c.b16 %v477, %v474
      %v541 = vpack.c.b16 %v481, %v478
      %v542 = vpack.c.b16 %v482, %v479
      %v543 = vpack.c.b16 %v483, %v480
      %v544 = vpack.c.b16 %v487, %v484
      %v545 = vpack.c.b16 %v488, %v485
      %v546 = vpack.c.b16 %v489, %v486
      %v547 = vpack.c.b16 %v493, %v490
      %v548 = vpack.c.b16 %v494, %v491
      %v549 = vpack.c.b16 %v495, %v492
      %v550 = vpack.c.b16 %v499, %v496
      %v551 = vpack.c.b16 %v500, %v497
      %v552 = vpack.c.b16 %v501, %v498
      %v553 = vpack.c.b16 %v505, %v502
      %v554 = vpack.c.b16 %v506, %v503
      %v555 = vpack.c.b16 %v507, %v504
      %v652 = vunpack.c.l.b16 %v293
      %v653 = vunpack.c.l.b16 %v294
      %v654 = vunpack.c.l.b16 %v295
      %v655 = vunpack.c.l.b16 %v296
      %v656 = vunpack.c.l.b16 %v297
      %v657 = vunpack.c.l.b16 %v298
      %v658 = vunpack.c.l.b16 %v299
      %v659 = vunpack.c.l.b16 %v300
      %v660 = vunpack.c.l.b16 %v301
      %v661 = vunpack.c.l.b16 %v302
      %v662 = vunpack.c.l.b16 %v303
      %v663 = vunpack.c.l.b16 %v304
      %v664 = vunpack.c.l.b16 %v305
      %v665 = vunpack.c.l.b16 %v306
      %v666 = vunpack.c.l.b16 %v307
      %v667 = vunpack.c.l.b16 %v308
      %v668 = vunpack.c.l.b16 %v309
      %v669 = vunpack.c.l.b16 %v310
      %v670 = vunpack.c.l.b16 %v311
      %v671 = vunpack.c.l.b16 %v312
      %v672 = vunpack.c.l.b16 %v313
      %v673 = vunpack.c.l.b16 %v314
      %v674 = vunpack.c.l.b16 %v315
      %v675 = vunpack.c.l.b16 %v316
      %v676 = vunpack.c.l.b16 %v317
      %v677 = vunpack.c.l.b16 %v318
      %v678 = vunpack.c.l.b16 %v319
      %v679 = vunpack.c.l.b16 %v320
      %v680 = vunpack.c.l.b16 %v321
      %v681 = vunpack.c.l.b16 %v322
      %v682 = vunpack.c.l.b16 %v323
      %v683 = vunpack.c.l.b16 %v324
      %v684 = vunpack.c.l.b16 %v325
      %v685 = vunpack.c.l.b16 %v326
      %v686 = vunpack.c.l.b16 %v327
      %v687 = vunpack.c.l.b16 %v328
      %v688 = vunpack.c.l.b16 %v329
      %v689 = vunpack.c.l.b16 %v330
      %v690 = vunpack.c.l.b16 %v331
      %v691 = vunpack.c.l.b16 %v332
      %v692 = vunpack.c.l.b16 %v333
      %v693 = vunpack.c.l.b16 %v334
      %v694 = vunpack.c.l.b16 %v335
      %v695 = vunpack.c.l.b16 %v336
      %v696 = vunpack.c.l.b16 %v337
      %v697 = vunpack.c.l.b16 %v338
      %v698 = vunpack.c.l.b16 %v339
      %v699 = vunpack.c.l.b16 %v340
      %v700 = vpack.c.b16 %v653, %v652
      %v701 = vpack.c.b16 %v655, %v654
      %v702 = vpack.c.b16 %v657, %v656
      %v703 = vpack.c.b16 %v659, %v658
      %v704 = vpack.c.b16 %v661, %v660
      %v705 = vpack.c.b16 %v663, %v662
      %v706 = vpack.c.b16 %v665, %v664
      %v707 = vpack.c.b16 %v667, %v666
      %v708 = vpack.c.b16 %v669, %v668
      %v709 = vpack.c.b16 %v671, %v670
      %v710 = vpack.c.b16 %v673, %v672
      %v711 = vpack.c.b16 %v675, %v674
      %v712 = vpack.c.b16 %v677, %v676
      %v713 = vpack.c.b16 %v679, %v678
      %v714 = vpack.c.b16 %v681, %v680
      %v715 = vpack.c.b16 %v683, %v682
      %v716 = vpack.c.b16 %v685, %v684
      %v717 = vpack.c.b16 %v687, %v686
      %v718 = vpack.c.b16 %v689, %v688
      %v719 = vpack.c.b16 %v691, %v690
      %v720 = vpack.c.b16 %v693, %v692
      %v721 = vpack.c.b16 %v695, %v694
      %v722 = vpack.c.b16 %v697, %v696
      %v723 = vpack.c.b16 %v699, %v698
      %748 = vmatprep.subr.bf16.mxu0 0
      %749 = vmatpush1.bf16.msra.mxu0 %v700
      %750 = vmatprep.subr.bf16.mxu0 0
      %751 = vmatpush1.bf16.msra.mxu0 %v701
      %752 = vmatprep.subr.bf16.mxu0 0
      %753 = vmatpush1.bf16.msra.mxu0 %v702
      %754 = vmatprep.subr.bf16.mxu0 0
      %755 = vmatpush1.bf16.msra.mxu0 %v703
      %756 = vmatprep.subr.bf16.mxu0 0
      %757 = vmatpush1.bf16.msra.mxu0 %v704
      %758 = vmatprep.subr.bf16.mxu0 0
      %759 = vmatpush1.bf16.msra.mxu0 %v705
      %760 = vmatprep.subr.bf16.mxu0 0
      %761 = vmatpush1.bf16.msra.mxu0 %v706
      %762 = vmatprep.subr.bf16.mxu0 0
      %763 = vmatpush1.bf16.msra.mxu0 %v707
      %764 = vmatprep.subr.bf16.mxu0 0
      %765 = vmatpush1.bf16.msra.mxu0 %v708
      %766 = vmatprep.subr.bf16.mxu0 0
      %767 = vmatpush1.bf16.msra.mxu0 %v709
      %768 = vmatprep.subr.bf16.mxu0 0
      %769 = vmatpush1.bf16.msra.mxu0 %v710
      %770 = vmatprep.subr.bf16.mxu0 0
      %771 = vmatpush1.bf16.msra.mxu0 %v711
      %772 = vmatprep.subr.bf16.mxu0 0
      %773 = vmatpush1.bf16.msra.mxu0 %v712
      %774 = vmatprep.subr.bf16.mxu0 0
      %775 = vmatpush1.bf16.msra.mxu0 %v713
      %776 = vmatprep.subr.bf16.mxu0 0
      %777 = vmatpush1.bf16.msra.mxu0 %v714
      %778 = vmatprep.subr.bf16.mxu0 0
      %779 = vmatpush1.bf16.msra.mxu0 %v715
      %780 = vmatprep.mubr.bf16.mxu0 %v509
      %781 = vmatmul.mubr.bf16.gmra.mrb[0].mxu0 %v508
      %v782 = vpop.f32.mrb[0].mxu0
      %v783 = vadd.f32 %v346, %v782
      %v784 = vpop.f32.mrb[0].mxu0
      %v785 = vpop.f32.mrb[0].mxu0
      %v786 = vadd.f32 %v346, %v785
      %v787 = vpop.f32.mrb[0].mxu0
      %788 = vmatprep.mubr.bf16.mxu0 %v512
      %789 = vmatmul.mubr.bf16.gmra.mrb[0].mxu0 %v511
      %v790 = vpop.f32.mrb[0].mxu0
      %v791 = vadd.f32 %v346, %v790
      %v792 = vpop.f32.mrb[0].mxu0
      %v793 = vpop.f32.mrb[0].mxu0
      %v794 = vadd.f32 %v346, %v793
      %v795 = vpop.f32.mrb[0].mxu0
      %796 = vmatprep.mubr.bf16.mxu0 %v515
      %797 = vmatmul.mubr.bf16.gmra.mrb[0].mxu0 %v514
      %v798 = vpop.f32.mrb[0].mxu0
      %v799 = vadd.f32 %v346, %v798
      %v800 = vpop.f32.mrb[0].mxu0
      %v801 = vpop.f32.mrb[0].mxu0
      %v802 = vadd.f32 %v346, %v801
      %v803 = vpop.f32.mrb[0].mxu0
      %804 = vmatprep.mubr.bf16.mxu0 %v518
      %805 = vmatmul.mubr.bf16.gmra.mrb[0].mxu0 %v517
      %v806 = vpop.f32.mrb[0].mxu0
      %v807 = vadd.f32 %v346, %v806
      %v808 = vpop.f32.mrb[0].mxu0
      %v809 = vpop.f32.mrb[0].mxu0
      %v810 = vadd.f32 %v346, %v809
      %v811 = vpop.f32.mrb[0].mxu0
      %812 = vmatprep.mubr.bf16.mxu0 %v521
      %813 = vmatmul.mubr.bf16.gmra.mrb[0].mxu0 %v520
      %v814 = vpop.f32.mrb[0].mxu0
      %v815 = vadd.f32 %v346, %v814
      %v816 = vpop.f32.mrb[0].mxu0
      %v817 = vpop.f32.mrb[0].mxu0
      %v818 = vadd.f32 %v346, %v817
      %v819 = vpop.f32.mrb[0].mxu0
      %820 = vmatprep.mubr.bf16.mxu0 %v524
      %821 = vmatmul.mubr.bf16.gmra.mrb[0].mxu0 %v523
      %v822 = vpop.f32.mrb[0].mxu0
      %v823 = vadd.f32 %v346, %v822
      %v824 = vpop.f32.mrb[0].mxu0
      %v825 = vpop.f32.mrb[0].mxu0
      %v826 = vadd.f32 %v346, %v825
      %v827 = vpop.f32.mrb[0].mxu0
      %828 = vmatprep.mubr.bf16.mxu0 %v527
      %829 = vmatmul.mubr.bf16.gmra.mrb[0].mxu0 %v526
      %v830 = vpop.f32.mrb[0].mxu0
      %v831 = vadd.f32 %v346, %v830
      %v832 = vpop.f32.mrb[0].mxu0
      %v833 = vpop.f32.mrb[0].mxu0
      %v834 = vadd.f32 %v346, %v833
      %v835 = vpop.f32.mrb[0].mxu0
      %836 = vmatprep.mubr.bf16.mxu0 %v530
      %837 = vmatmul.mubr.bf16.gmra.mrb[0].mxu0 %v529
      %v838 = vpop.f32.mrb[0].mxu0
      %v839 = vadd.f32 %v346, %v838
      %v840 = vpop.f32.mrb[0].mxu0
      %v841 = vpop.f32.mrb[0].mxu0
      %v842 = vadd.f32 %v346, %v841
      %v843 = vpop.f32.mrb[0].mxu0
      %844 = vmatprep.mubr.bf16.mxu0 %v533
      %845 = vmatmul.mubr.bf16.gmra.mrb[0].mxu0 %v532
      %v846 = vpop.f32.mrb[0].mxu0
      %v847 = vadd.f32 %v346, %v846
      %v848 = vpop.f32.mrb[0].mxu0
      %v849 = vpop.f32.mrb[0].mxu0
      %v850 = vadd.f32 %v346, %v849
      %v851 = vpop.f32.mrb[0].mxu0
      %852 = vmatprep.mubr.bf16.mxu0 %v536
      %853 = vmatmul.mubr.bf16.gmra.mrb[0].mxu0 %v535
      %v854 = vpop.f32.mrb[0].mxu0
      %v855 = vadd.f32 %v346, %v854
      %v856 = vpop.f32.mrb[0].mxu0
      %v857 = vpop.f32.mrb[0].mxu0
      %v858 = vadd.f32 %v346, %v857
      %v859 = vpop.f32.mrb[0].mxu0
      %860 = vmatprep.mubr.bf16.mxu0 %v539
      %861 = vmatmul.mubr.bf16.gmra.mrb[0].mxu0 %v538
      %v862 = vpop.f32.mrb[0].mxu0
      %v863 = vadd.f32 %v346, %v862
      %v864 = vpop.f32.mrb[0].mxu0
      %v865 = vpop.f32.mrb[0].mxu0
      %v866 = vadd.f32 %v346, %v865
      %v867 = vpop.f32.mrb[0].mxu0
      %868 = vmatprep.mubr.bf16.mxu0 %v542
      %869 = vmatmul.mubr.bf16.gmra.mrb[0].mxu0 %v541
      %v870 = vpop.f32.mrb[0].mxu0
      %v871 = vadd.f32 %v346, %v870
      %v872 = vpop.f32.mrb[0].mxu0
      %v873 = vpop.f32.mrb[0].mxu0
      %v874 = vadd.f32 %v346, %v873
      %v875 = vpop.f32.mrb[0].mxu0
      %876 = vmatprep.mubr.bf16.mxu0 %v545
      %877 = vmatmul.mubr.bf16.gmra.mrb[0].mxu0 %v544
      %v878 = vpop.f32.mrb[0].mxu0
      %v879 = vadd.f32 %v346, %v878
      %v880 = vpop.f32.mrb[0].mxu0
      %v881 = vpop.f32.mrb[0].mxu0
      %v882 = vadd.f32 %v346, %v881
      %v883 = vpop.f32.mrb[0].mxu0
      %884 = vmatprep.mubr.bf16.mxu0 %v548
      %885 = vmatmul.mubr.bf16.gmra.mrb[0].mxu0 %v547
      %v886 = vpop.f32.mrb[0].mxu0
      %v887 = vadd.f32 %v346, %v886
      %v888 = vpop.f32.mrb[0].mxu0
      %v889 = vpop.f32.mrb[0].mxu0
      %v890 = vadd.f32 %v346, %v889
      %v891 = vpop.f32.mrb[0].mxu0
      %892 = vmatprep.mubr.bf16.mxu0 %v551
      %893 = vmatmul.mubr.bf16.gmra.mrb[0].mxu0 %v550
      %v894 = vpop.f32.mrb[0].mxu0
      %v895 = vadd.f32 %v346, %v894
      %v896 = vpop.f32.mrb[0].mxu0
      %v897 = vpop.f32.mrb[0].mxu0
      %v898 = vadd.f32 %v346, %v897
      %v899 = vpop.f32.mrb[0].mxu0
      %900 = vmatprep.mubr.bf16.mxu0 %v554
      %901 = vmatmul.mubr.bf16.gmra.mrb[0].mxu0 %v553
      %v902 = vpop.f32.mrb[0].mxu0
      %v903 = vadd.f32 %v346, %v902
      %v904 = vpop.f32.mrb[0].mxu0
      %v905 = vpop.f32.mrb[0].mxu0
      %v906 = vadd.f32 %v346, %v905
      %v907 = vpop.f32.mrb[0].mxu0
      %908 = vdwg.mxu0
      %909 = vmatprep.subr.bf16.mxu0 0
      %910 = vmatpush1.bf16.msra.mxu0 %v716
      %911 = vmatprep.subr.bf16.mxu0 0
      %912 = vmatpush1.bf16.msra.mxu0 %v717
      %913 = vmatprep.subr.bf16.mxu0 0
      %914 = vmatpush1.bf16.msra.mxu0 %v718
      %915 = vmatprep.subr.bf16.mxu0 0
      %916 = vmatpush1.bf16.msra.mxu0 %v719
      %917 = vmatprep.subr.bf16.mxu0 0
      %918 = vmatpush1.bf16.msra.mxu0 %v720
      %919 = vmatprep.subr.bf16.mxu0 0
      %920 = vmatpush1.bf16.msra.mxu0 %v721
      %921 = vmatprep.subr.bf16.mxu0 0
      %922 = vmatpush1.bf16.msra.mxu0 %v722
      %923 = vmatprep.subr.bf16.mxu0 0
      %924 = vmatpush1.bf16.msra.mxu0 %v723
      %925 = vmatprep.subr.bf16.mxu0 0
      %926 = vmatpush1.bf16.msra.mxu0 0
      %927 = vmatprep.subr.bf16.mxu0 0
      %928 = vmatpush1.bf16.msra.mxu0 0
      %929 = vmatprep.subr.bf16.mxu0 0
      %930 = vmatpush1.bf16.msra.mxu0 0
      %931 = vmatprep.subr.bf16.mxu0 0
      %932 = vmatpush1.bf16.msra.mxu0 0
      %933 = vmatprep.subr.bf16.mxu0 0
      %934 = vmatpush1.bf16.msra.mxu0 0
      %935 = vmatprep.subr.bf16.mxu0 0
      %936 = vmatpush1.bf16.msra.mxu0 0
      %937 = vmatprep.subr.bf16.mxu0 0
      %938 = vmatpush1.bf16.msra.mxu0 0
      %939 = vmatprep.subr.bf16.mxu0 0
      %940 = vmatpush1.bf16.msra.mxu0 0
      %941 = vmatprep.mubr.bf16.mxu0 0
      %942 = vmatmul.mubr.bf16.gmra.mrb[0].mxu0 %v510
      %v943 = vpop.f32.mrb[0].mxu0
      %v944 = vadd.f32 %v783, %v943
      %v945 = vpop.f32.mrb[0].mxu0
      %v946 = vpop.f32.mrb[0].mxu0
      %v947 = vadd.f32 %v786, %v946
      %v948 = vpop.f32.mrb[0].mxu0
      %949 = vmatprep.mubr.bf16.mxu0 0
      %950 = vmatmul.mubr.bf16.gmra.mrb[0].mxu0 %v513
      %v951 = vpop.f32.mrb[0].mxu0
      %v952 = vadd.f32 %v791, %v951
      %v953 = vpop.f32.mrb[0].mxu0
      %v954 = vpop.f32.mrb[0].mxu0
      %v955 = vadd.f32 %v794, %v954
      %v956 = vpop.f32.mrb[0].mxu0
      %957 = vmatprep.mubr.bf16.mxu0 0
      %958 = vmatmul.mubr.bf16.gmra.mrb[0].mxu0 %v516
      %v959 = vpop.f32.mrb[0].mxu0
      %v960 = vadd.f32 %v799, %v959
      %v961 = vpop.f32.mrb[0].mxu0
      %v962 = vpop.f32.mrb[0].mxu0
      %v963 = vadd.f32 %v802, %v962
      %v964 = vpop.f32.mrb[0].mxu0
      %965 = vmatprep.mubr.bf16.mxu0 0
      %966 = vmatmul.mubr.bf16.gmra.mrb[0].mxu0 %v519
      %v967 = vpop.f32.mrb[0].mxu0
      %v968 = vadd.f32 %v807, %v967
      %v969 = vpop.f32.mrb[0].mxu0
      %v970 = vpop.f32.mrb[0].mxu0
      %v971 = vadd.f32 %v810, %v970
      %v972 = vpop.f32.mrb[0].mxu0
      %973 = vmatprep.mubr.bf16.mxu0 0
      %974 = vmatmul.mubr.bf16.gmra.mrb[0].mxu0 %v522
      %v975 = vpop.f32.mrb[0].mxu0
      %v976 = vadd.f32 %v815, %v975
      %v977 = vpop.f32.mrb[0].mxu0
      %v978 = vpop.f32.mrb[0].mxu0
      %v979 = vadd.f32 %v818, %v978
      %v980 = vpop.f32.mrb[0].mxu0
      %981 = vmatprep.mubr.bf16.mxu0 0
      %982 = vmatmul.mubr.bf16.gmra.mrb[0].mxu0 %v525
      %v983 = vpop.f32.mrb[0].mxu0
      %v984 = vadd.f32 %v823, %v983
      %v985 = vpop.f32.mrb[0].mxu0
      %v986 = vpop.f32.mrb[0].mxu0
      %v987 = vadd.f32 %v826, %v986
      %v988 = vpop.f32.mrb[0].mxu0
      %989 = vmatprep.mubr.bf16.mxu0 0
      %990 = vmatmul.mubr.bf16.gmra.mrb[0].mxu0 %v528
      %v991 = vpop.f32.mrb[0].mxu0
      %v992 = vadd.f32 %v831, %v991
      %v993 = vpop.f32.mrb[0].mxu0
      %v994 = vpop.f32.mrb[0].mxu0
      %v995 = vadd.f32 %v834, %v994
      %v996 = vpop.f32.mrb[0].mxu0
      %997 = vmatprep.mubr.bf16.mxu0 0
      %998 = vmatmul.mubr.bf16.gmra.mrb[0].mxu0 %v531
      %v999 = vpop.f32.mrb[0].mxu0
      %v1000 = vadd.f32 %v839, %v999
      %v1001 = vpop.f32.mrb[0].mxu0
      %v1002 = vpop.f32.mrb[0].mxu0
      %v1003 = vadd.f32 %v842, %v1002
      %v1004 = vpop.f32.mrb[0].mxu0
      %1005 = vmatprep.mubr.bf16.mxu0 0
      %1006 = vmatmul.mubr.bf16.gmra.mrb[0].mxu0 %v534
      %v1007 = vpop.f32.mrb[0].mxu0
      %v1008 = vadd.f32 %v847, %v1007
      %v1009 = vpop.f32.mrb[0].mxu0
      %v1010 = vpop.f32.mrb[0].mxu0
      %v1011 = vadd.f32 %v850, %v1010
      %v1012 = vpop.f32.mrb[0].mxu0
      %1013 = vmatprep.mubr.bf16.mxu0 0
      %1014 = vmatmul.mubr.bf16.gmra.mrb[0].mxu0 %v537
      %v1015 = vpop.f32.mrb[0].mxu0
      %v1016 = vadd.f32 %v855, %v1015
      %v1017 = vpop.f32.mrb[0].mxu0
      %v1018 = vpop.f32.mrb[0].mxu0
      %v1019 = vadd.f32 %v858, %v1018
      %v1020 = vpop.f32.mrb[0].mxu0
      %1021 = vmatprep.mubr.bf16.mxu0 0
      %1022 = vmatmul.mubr.bf16.gmra.mrb[0].mxu0 %v540
      %v1023 = vpop.f32.mrb[0].mxu0
      %v1024 = vadd.f32 %v863, %v1023
      %v1025 = vpop.f32.mrb[0].mxu0
      %v1026 = vpop.f32.mrb[0].mxu0
      %v1027 = vadd.f32 %v866, %v1026
      %v1028 = vpop.f32.mrb[0].mxu0
      %1029 = vmatprep.mubr.bf16.mxu0 0
      %1030 = vmatmul.mubr.bf16.gmra.mrb[0].mxu0 %v543
      %v1031 = vpop.f32.mrb[0].mxu0
      %v1032 = vadd.f32 %v871, %v1031
      %v1033 = vpop.f32.mrb[0].mxu0
      %v1034 = vpop.f32.mrb[0].mxu0
      %v1035 = vadd.f32 %v874, %v1034
      %v1036 = vpop.f32.mrb[0].mxu0
      %1037 = vmatprep.mubr.bf16.mxu0 0
      %1038 = vmatmul.mubr.bf16.gmra.mrb[0].mxu0 %v546
      %v1039 = vpop.f32.mrb[0].mxu0
      %v1040 = vadd.f32 %v879, %v1039
      %v1041 = vpop.f32.mrb[0].mxu0
      %v1042 = vpop.f32.mrb[0].mxu0
      %v1043 = vadd.f32 %v882, %v1042
      %v1044 = vpop.f32.mrb[0].mxu0
      %1045 = vmatprep.mubr.bf16.mxu0 0
      %1046 = vmatmul.mubr.bf16.gmra.mrb[0].mxu0 %v549
      %v1047 = vpop.f32.mrb[0].mxu0
      %v1048 = vadd.f32 %v887, %v1047
      %v1049 = vpop.f32.mrb[0].mxu0
      %v1050 = vpop.f32.mrb[0].mxu0
      %v1051 = vadd.f32 %v890, %v1050
      %v1052 = vpop.f32.mrb[0].mxu0
      %1053 = vmatprep.mubr.bf16.mxu0 0
      %1054 = vmatmul.mubr.bf16.gmra.mrb[0].mxu0 %v552
      %v1055 = vpop.f32.mrb[0].mxu0
      %v1056 = vadd.f32 %v895, %v1055
      %v1057 = vpop.f32.mrb[0].mxu0
      %v1058 = vpop.f32.mrb[0].mxu0
      %v1059 = vadd.f32 %v898, %v1058
      %v1060 = vpop.f32.mrb[0].mxu0
      %1061 = vmatprep.mubr.bf16.mxu0 0
      %1062 = vmatmul.mubr.bf16.gmra.mrb[0].mxu0 %v555
      %v1063 = vpop.f32.mrb[0].mxu0
      %v1064 = vadd.f32 %v903, %v1063
      %v1065 = vpop.f32.mrb[0].mxu0
      %v1066 = vpop.f32.mrb[0].mxu0
      %v1067 = vadd.f32 %v906, %v1066
      %v1068 = vpop.f32.mrb[0].mxu0
      %1069 = vdwg.mxu0
      %v1070 = vpack.c.bf16 %v947, %v944
      %v1071 = vpack.c.bf16 %v955, %v952
      %v1072 = vpack.c.bf16 %v963, %v960
      %v1073 = vpack.c.bf16 %v971, %v968
      %v1074 = vpack.c.bf16 %v979, %v976
      %v1075 = vpack.c.bf16 %v987, %v984
      %v1076 = vpack.c.bf16 %v995, %v992
      %v1077 = vpack.c.bf16 %v1003, %v1000
      %v1078 = vpack.c.bf16 %v1011, %v1008
      %v1079 = vpack.c.bf16 %v1019, %v1016
      %v1080 = vpack.c.bf16 %v1027, %v1024
      %v1081 = vpack.c.bf16 %v1035, %v1032
      %v1082 = vpack.c.bf16 %v1043, %v1040
      %v1083 = vpack.c.bf16 %v1051, %v1048
      %v1084 = vpack.c.bf16 %v1059, %v1056
      %v1085 = vpack.c.bf16 %v1067, %v1064
      %v1102 = vunpack.c.l.b16 %v1070
      %v1103 = vunpack.c.h.b16 %v1070
      %v1104 = vunpack.c.l.b16 %v1071
      %v1105 = vunpack.c.h.b16 %v1071
      %v1106 = vunpack.c.l.b16 %v1072
      %v1107 = vunpack.c.h.b16 %v1072
      %v1108 = vunpack.c.l.b16 %v1073
      %v1109 = vunpack.c.h.b16 %v1073
      %v1110 = vunpack.c.l.b16 %v1074
      %v1111 = vunpack.c.h.b16 %v1074
      %v1112 = vunpack.c.l.b16 %v1075
      %v1113 = vunpack.c.h.b16 %v1075
      %v1114 = vunpack.c.l.b16 %v1076
      %v1115 = vunpack.c.h.b16 %v1076
      %v1116 = vunpack.c.l.b16 %v1077
      %v1117 = vunpack.c.h.b16 %v1077
      %v1118 = vunpack.c.l.b16 %v1078
      %v1119 = vunpack.c.h.b16 %v1078
      %v1120 = vunpack.c.l.b16 %v1079
      %v1121 = vunpack.c.h.b16 %v1079
      %v1122 = vunpack.c.l.b16 %v1080
      %v1123 = vunpack.c.h.b16 %v1080
      %v1124 = vunpack.c.l.b16 %v1081
      %v1125 = vunpack.c.h.b16 %v1081
      %v1126 = vunpack.c.l.b16 %v1082
      %v1127 = vunpack.c.h.b16 %v1082
      %v1128 = vunpack.c.l.b16 %v1083
      %v1129 = vunpack.c.h.b16 %v1083
      %v1130 = vunpack.c.l.b16 %v1084
      %v1131 = vunpack.c.h.b16 %v1084
      %v1132 = vunpack.c.l.b16 %v1085
      %v1133 = vunpack.c.h.b16 %v1085
      %v1134 = vpack.c.b16 %v1102, %v1102
      %v1135 = vpack.c.b16 %v1103, %v1103
      %v1136 = vpack.c.b16 %v1104, %v1104
      %v1137 = vpack.c.b16 %v1105, %v1105
      %v1138 = vpack.c.b16 %v1106, %v1106
      %v1139 = vpack.c.b16 %v1107, %v1107
      %v1140 = vpack.c.b16 %v1108, %v1108
      %v1141 = vpack.c.b16 %v1109, %v1109
      %v1142 = vpack.c.b16 %v1110, %v1110
      %v1143 = vpack.c.b16 %v1111, %v1111
      %v1144 = vpack.c.b16 %v1112, %v1112
      %v1145 = vpack.c.b16 %v1113, %v1113
      %v1146 = vpack.c.b16 %v1114, %v1114
      %v1147 = vpack.c.b16 %v1115, %v1115
      %v1148 = vpack.c.b16 %v1116, %v1116
      %v1149 = vpack.c.b16 %v1117, %v1117
      %v1150 = vpack.c.b16 %v1118, %v1118
      %v1151 = vpack.c.b16 %v1119, %v1119
      %v1152 = vpack.c.b16 %v1120, %v1120
      %v1153 = vpack.c.b16 %v1121, %v1121
      %v1154 = vpack.c.b16 %v1122, %v1122
      %v1155 = vpack.c.b16 %v1123, %v1123
      %v1156 = vpack.c.b16 %v1124, %v1124
      %v1157 = vpack.c.b16 %v1125, %v1125
      %v1158 = vpack.c.b16 %v1126, %v1126
      %v1159 = vpack.c.b16 %v1127, %v1127
      %v1160 = vpack.c.b16 %v1128, %v1128
      %v1161 = vpack.c.b16 %v1129, %v1129
      %v1162 = vpack.c.b16 %v1130, %v1130
      %v1163 = vpack.c.b16 %v1131, %v1131
      %v1164 = vpack.c.b16 %v1132, %v1132
      %v1165 = vpack.c.b16 %v1133, %v1133
      %1198 = vst [vmem:[%s226] sm:$0xf] %v1134
      %1199 = vst [vmem:[%s226 + $0x4] sm:$0xf] %v1135
      %1200 = vst [vmem:[%s226 + $0x8] sm:$0xf] %v1136
      %1201 = vst [vmem:[%s226 + $0xc] sm:$0xf] %v1137
      %1202 = vst [vmem:[%s226 + $0x10] sm:$0xf] %v1138
      %1203 = vst [vmem:[%s226 + $0x14] sm:$0xf] %v1139
      %1204 = vst [vmem:[%s226 + $0x18] sm:$0xf] %v1140
      %1205 = vst [vmem:[%s226 + $0x1c] sm:$0xf] %v1141
      %1206 = vst [vmem:[%s226 + $0x20] sm:$0xf] %v1142
      %1207 = vst [vmem:[%s226 + $0x24] sm:$0xf] %v1143
      %1208 = vst [vmem:[%s226 + $0x28] sm:$0xf] %v1144
      %1209 = vst [vmem:[%s226 + $0x2c] sm:$0xf] %v1145
      %1210 = vst [vmem:[%s226 + $0x30] sm:$0xf] %v1146
      %1211 = vst [vmem:[%s226 + $0x34] sm:$0xf] %v1147
      %1212 = vst [vmem:[%s226 + $0x38] sm:$0xf] %v1148
      %1213 = vst [vmem:[%s226 + $0x3c] sm:$0xf] %v1149
      %1214 = vst [vmem:[%s226 + $0x40] sm:$0xf] %v1150
      %1215 = vst [vmem:[%s226 + $0x44] sm:$0xf] %v1151
      %1216 = vst [vmem:[%s226 + $0x48] sm:$0xf] %v1152
      %1217 = vst [vmem:[%s226 + $0x4c] sm:$0xf] %v1153
      %1218 = vst [vmem:[%s226 + $0x50] sm:$0xf] %v1154
      %1219 = vst [vmem:[%s226 + $0x54] sm:$0xf] %v1155
      %1220 = vst [vmem:[%s226 + $0x58] sm:$0xf] %v1156
      %1221 = vst [vmem:[%s226 + $0x5c] sm:$0xf] %v1157
      %1222 = vst [vmem:[%s226 + $0x60] sm:$0xf] %v1158
      %1223 = vst [vmem:[%s226 + $0x64] sm:$0xf] %v1159
      %1224 = vst [vmem:[%s226 + $0x68] sm:$0xf] %v1160
      %1225 = vst [vmem:[%s226 + $0x6c] sm:$0xf] %v1161
      %1226 = vst [vmem:[%s226 + $0x70] sm:$0xf] %v1162
      %1227 = vst [vmem:[%s226 + $0x74] sm:$0xf] %v1163
      %1228 = vst [vmem:[%s226 + $0x78] sm:$0xf] %v1164
      %1229 = vst [vmem:[%s226 + $0x7c] sm:$0xf] %v1165
      %s1230 = smul.u32 32, %s18
      %p1231 = scmp.lt.s32.totalorder %s1230, 63
      %s1232 = scalar_select %p1231, %s1230, 63
      %p1233 = scmp.lt.s32.totalorder %s19, 0
      %s1234 = scalar_select %p1233, %s19, 0
      %s1235 = sadd.s32 %s1234, %s1232
      %s1236 = smul.addr %s1235, 4
      %s1237 = scalar_lea.vmem %s3, %s1236
      // Predicated region
      $region33: #{local_enhancer_forward.13} parent=31 // pred_check
        %p1238 = pneg %p124
      $region34: #{local_enhancer_forward.13} parent=31 // pred_check_branch
        %1240 = sbr.rel (%p1238) target = $region36
      $region35: #{local_enhancer_forward.13} parent=31 // pred_region
        %s1241 = smul.u32 32, %s18
      $region36: #{local_enhancer_forward.13} parent=31 // pred_fallthru
        _
    $region32: #{local_enhancer_forward.13} parent=5 // pred_fallthru
      _
    %p1242 = scmp.le.s32.totalorder 2, %s9
    // Predicated region
    $region37: #{local_enhancer_forward.13} parent=5 // pred_check
      %p1243 = pneg %p1242
    $region38: #{local_enhancer_forward.13} parent=5 // pred_check_branch
      %1245 = sbr.rel (%p1243) target = $region40
    $region39: #{local_enhancer_forward.13} parent=5 // pred_region
      %s1246 = ssub.s32 %s9, 2
      // Predicated region
      $region41: #{local_enhancer_forward.13} parent=39 // pred_check
        %p1247 = pneg %p130
      $region42: #{local_enhancer_forward.13} parent=39 // pred_check_branch
        %1249 = sbr.rel (%p1247) target = $region44
      $region43: #{local_enhancer_forward.13} parent=39 // pred_region
        %s1250 = smul.u32 32, %s20
        %p1251 = scmp.lt.s32.totalorder %s1250, 63
        %s1252 = scalar_select %p1251, %s1250, 63
        %p1253 = scmp.lt.s32.totalorder %s21, 0
        %s1254 = scalar_select %p1253, %s21, 0
        %s1255 = sadd.s32 %s1254, %s1252
        %s1256 = smul.addr %s1255, 4
        %s1257 = scalar_lea.vmem %s3, %s1256
      $region44: #{local_enhancer_forward.13} parent=39 // pred_fallthru
        _
    $region40: #{local_enhancer_forward.13} parent=5 // pred_fallthru
      _
  $region6: #{local_enhancer_forward.13} parent=0 // loop_footer
    %s13 = sadd.s32 1, %s9
  $region7: #{local_enhancer_forward.13} parent=0 // loop_footer_branch
    %8 = sbr.rel target = $region3
  $region8: #{local_enhancer_forward.13} parent=0 // loop_exit
    _

// kernel: local_enhancer_forward.17
$region0: #{local_enhancer_forward.17}
  #allocation0 [shape = 'u32[]', space=smem, size = 0x4, offset = 0x4, fixed_abs, tag = 'smem constant byte address 0x4 - core index']
  #allocation1 [shape = 'u32[144,128]{1,0:T(1,128)}', space=vmem, size = 0x12000, scoped, tag = 'internal scratch']
  %s0 = inlined_call_operand.vmem [shape: bf16[512,128], index: 0, kind: input, shape index: {}]
  %s1 = inlined_call_operand.vmem [shape: bf16[128,128], index: 1, kind: input, shape index: {}]
  %s2 = inlined_call_operand.vmem [shape: f32[1,128], index: 2, kind: input, shape index: {}]
  %s3 = inlined_call_operand.vmem [shape: bf16[512,128], index: 3, kind: output, shape index: {}]
  %s4 = sld [smem:[#allocation0]]
  $region45: #{local_enhancer_forward.17} parent=0
    _
  %s6 = ssub.s32 1, %s4
  %s7 = scalar_select 0, %s6, %s4
  loop: start=0, step=1, limit=4
  $region2: #{local_enhancer_forward.17} parent=0 // loop_pre_header
    _
  $region3: #{local_enhancer_forward.17} parent=0 // loop_header
    %s9 = sphi 0, %s13
    %p10 = scmp.ge.s32.totalorder %s9, 4
    %s16 = sphi 0, %s28
    %s17 = sphi 0, %s24
    %s18 = sphi 0, %s16
    %s19 = sphi 0, %s17
    %s20 = sphi 0, %s18
    %s21 = sphi 0, %s19
    %s31 = sphi 0, %s33
    %s34 = sphi 0, %s31
    %s35 = sphi 0, %s34
    %s51 = sphi 0, %s35
    %s57 = sphi 0, %s59
    %s60 = sphi 0, %s57
    %s61 = sphi 0, %s60
    %s77 = sphi 0, %s61
    %s83 = sphi 0, %s85
    %s86 = sphi 0, %s83
    %s87 = sphi 0, %s86
    %s103 = sphi 0, %s87
    %s111 = sphi 0, %s113
    %s114 = sphi 0, %s111
    %s115 = sphi 0, %s114
    %s131 = sphi 0, %s115
  $region4: #{local_enhancer_forward.17} parent=0 // loop_header_branch
    %12 = sbr.rel (%p10) target = $region8
  $region5: #{local_enhancer_forward.17} parent=0 // loop_body
    %s14 = ssub.s32 %s9, 1
    %s15 = ssub.s32 %s9, 2
    %s22 = sadd.s32 1, %s17
    %p23 = scmp.ge.s32.totalorder %s22, 1
    %s24 = scalar_select %p23, 0, %s22
    %s25 = sadd.s32 1, %s16
    %s26 = scalar_select %p23, %s25, %s16
    %p27 = scmp.ge.s32.totalorder %s26, 2
    %s28 = scalar_select %p27, 0, %s26
    %s29 = ssub.s32 %s16, %s28
    %p30 = scmp.eq.s32.totalorder %s29, 0
    %s32 = sadd.s32 %s31, 1
    %s33 = scalar_select %p30, %s31, %s32
    %p36 = pneg %p30
    %p37 = scmp.eq.s32.totalorder %s9, 1
    %p38 = por %p36, %p37
    %p39 = scmp.ne.s32.totalorder %s31, %s34
    %p40 = scmp.eq.s32.totalorder %s9, 0
    %p41 = por %p39, %p40
    %p42 = scmp.ne.s32.totalorder %s31, %s34
    %p43 = scmp.eq.s32.totalorder %s14, 1
    %p44 = por %p42, %p43
    %p45 = scmp.ne.s32.totalorder %s34, %s35
    %p46 = scmp.eq.s32.totalorder %s14, 0
    %p47 = por %p45, %p46
    %p48 = scmp.ne.s32.totalorder %s34, %s35
    %p49 = scmp.eq.s32.totalorder %s15, 1
    %p50 = por %p48, %p49
    %p52 = scmp.ne.s32.totalorder %s35, %s51
    %p53 = scmp.eq.s32.totalorder %s15, 0
    %p54 = por %p52, %p53
    %s55 = ssub.s32 %s17, %s24
    %p56 = scmp.eq.s32.totalorder %s55, 0
    %s58 = sadd.s32 %s57, 1
    %s59 = scalar_select %p56, %s57, %s58
    %p62 = pneg %p56
    %p63 = scmp.eq.s32.totalorder %s9, 1
    %p64 = por %p62, %p63
    %p65 = scmp.ne.s32.totalorder %s57, %s60
    %p66 = scmp.eq.s32.totalorder %s9, 0
    %p67 = por %p65, %p66
    %p68 = scmp.ne.s32.totalorder %s57, %s60
    %p69 = scmp.eq.s32.totalorder %s14, 1
    %p70 = por %p68, %p69
    %p71 = scmp.ne.s32.totalorder %s60, %s61
    %p72 = scmp.eq.s32.totalorder %s14, 0
    %p73 = por %p71, %p72
    %p74 = scmp.ne.s32.totalorder %s60, %s61
    %p75 = scmp.eq.s32.totalorder %s15, 1
    %p76 = por %p74, %p75
    %p78 = scmp.ne.s32.totalorder %s61, %s77
    %p79 = scmp.eq.s32.totalorder %s15, 0
    %p80 = por %p78, %p79
    %s81 = ssub.s32 %s17, %s24
    %p82 = scmp.eq.s32.totalorder %s81, 0
    %s84 = sadd.s32 %s83, 1
    %s85 = scalar_select %p82, %s83, %s84
    %p88 = pneg %p82
    %p89 = scmp.eq.s32.totalorder %s9, 1
    %p90 = por %p88, %p89
    %p91 = scmp.ne.s32.totalorder %s83, %s86
    %p92 = scmp.eq.s32.totalorder %s9, 0
    %p93 = por %p91, %p92
    %p94 = scmp.ne.s32.totalorder %s83, %s86
    %p95 = scmp.eq.s32.totalorder %s14, 1
    %p96 = por %p94, %p95
    %p97 = scmp.ne.s32.totalorder %s86, %s87
    %p98 = scmp.eq.s32.totalorder %s14, 0
    %p99 = por %p97, %p98
    %p100 = scmp.ne.s32.totalorder %s86, %s87
    %p101 = scmp.eq.s32.totalorder %s15, 1
    %p102 = por %p100, %p101
    %p104 = scmp.ne.s32.totalorder %s87, %s103
    %p105 = scmp.eq.s32.totalorder %s15, 0
    %p106 = por %p104, %p105
    %s107 = ssub.s32 %s16, %s28
    %s108 = ssub.s32 %s17, %s24
    %s109 = sor.u32 %s107, %s108
    %p110 = scmp.eq.s32.totalorder %s109, 0
    %s112 = sadd.s32 %s111, 1
    %s113 = scalar_select %p110, %s111, %s112
    %p116 = pneg %p110
    %p117 = scmp.eq.s32.totalorder %s9, 1
    %p118 = por %p116, %p117
    %p119 = scmp.ne.s32.totalorder %s111, %s114
    %p120 = scmp.eq.s32.totalorder %s9, 0
    %p121 = por %p119, %p120
    %p122 = scmp.ne.s32.totalorder %s111, %s114
    %p123 = scmp.eq.s32.totalorder %s14, 1
    %p124 = por %p122, %p123
    %p125 = scmp.ne.s32.totalorder %s114, %s115
    %p126 = scmp.eq.s32.totalorder %s14, 0
    %p127 = por %p125, %p126
    %p128 = scmp.ne.s32.totalorder %s114, %s115
    %p129 = scmp.eq.s32.totalorder %s15, 1
    %p130 = por %p128, %p129
    %p132 = scmp.ne.s32.totalorder %s115, %s131
    %p133 = scmp.eq.s32.totalorder %s15, 0
    %p134 = por %p132, %p133
    %p135 = scmp.le.s32.totalorder 1, %s9
    %p136 = scmp.lt.s32.totalorder %s9, 3
    %p137 = pnand %p135, %p136
    %p138 = pneg %p137
    // Predicated region
    $region9: #{local_enhancer_forward.17} parent=5 // pred_check
      _
    $region10: #{local_enhancer_forward.17} parent=5 // pred_check_branch
      %140 = sbr.rel (%p137) target = $region12
    $region11: #{local_enhancer_forward.17} parent=5 // pred_region
      %s141 = ssub.s32 %s9, 1
      // Predicated region
      $region13: #{local_enhancer_forward.17} parent=11 // pred_check
        %p142 = pneg %p73
      $region14: #{local_enhancer_forward.17} parent=11 // pred_check_branch
        %144 = sbr.rel (%p142) target = $region16
      $region15: #{local_enhancer_forward.17} parent=11 // pred_region
        %p145 = scmp.lt.s32.totalorder %s19, 0
        %s146 = scalar_select %p145, %s19, 0
        %s147 = smul.addr %s146, 4
        %s148 = scalar_lea.vmem %s1, %s147
      $region16: #{local_enhancer_forward.17} parent=11 // pred_fallthru
        _
      // Predicated region
      $region17: #{local_enhancer_forward.17} parent=11 // pred_check
        %p149 = pneg %p99
      $region18: #{local_enhancer_forward.17} parent=11 // pred_check_branch
        %151 = sbr.rel (%p149) target = $region20
      $region19: #{local_enhancer_forward.17} parent=11 // pred_region
        %p152 = scmp.lt.s32.totalorder %s19, 0
        %s153 = scalar_select %p152, %s19, 0
        %s154 = scalar_lea.vmem %s2, %s153
      $region20: #{local_enhancer_forward.17} parent=11 // pred_fallthru
        _
    $region12: #{local_enhancer_forward.17} parent=5 // pred_fallthru
      _
    %p155 = scmp.lt.s32.totalorder %s9, 2
    // Predicated region
    $region21: #{local_enhancer_forward.17} parent=5 // pred_check
      %p156 = pneg %p155
    $region22: #{local_enhancer_forward.17} parent=5 // pred_check_branch
      %158 = sbr.rel (%p156) target = $region24
    $region23: #{local_enhancer_forward.17} parent=5 // pred_region
      // Predicated region
      $region25: #{local_enhancer_forward.17} parent=23 // pred_check
        %p159 = pneg %p41
      $region26: #{local_enhancer_forward.17} parent=23 // pred_check_branch
        %161 = sbr.rel (%p159) target = $region28
      $region27: #{local_enhancer_forward.17} parent=23 // pred_region
        %s162 = smul.u32 32, %s16
        %p163 = scmp.lt.s32.totalorder %s162, 63
        %s164 = scalar_select %p163, %s162, 63
        %s165 = smul.addr %s164, 4
        %s166 = scalar_lea.vmem %s0, %s165
        %s167 = smul.u32 32, %s16
      $region28: #{local_enhancer_forward.17} parent=23 // pred_fallthru
        _
    $region24: #{local_enhancer_forward.17} parent=5 // pred_fallthru
      _
    %p168 = scmp.le.s32.totalorder 1, %s9
    %p169 = scmp.lt.s32.totalorder %s9, 3
    %p170 = pnand %p168, %p169
    %p171 = pneg %p170
    // Predicated region
    $region29: #{local_enhancer_forward.17} parent=5 // pred_check
      _
    $region30: #{local_enhancer_forward.17} parent=5 // pred_check_branch
      %173 = sbr.rel (%p170) target = $region32
    $region31: #{local_enhancer_forward.17} parent=5 // pred_region
      %s174 = ssub.s32 %s9, 1
      %s175 = smul.u32 32, %s18
      %p176 = scmp.lt.s32.totalorder %s175, 63
      %s177 = scalar_select %p176, %s175, 63
      %s178 = smul.addr %s177, 4
      %s179 = scalar_lea.vmem %s0, %s178
      %p180 = pneg %p47
      %p181 = pneg %p44
      %p182 = scmp.lt.s32.totalorder %s19, 0
      %s183 = scalar_select %p182, %s19, 0
      %s184 = smul.addr %s183, 4
      %s185 = scalar_lea.vmem %s1, %s184
      %p186 = pneg %p73
      %p187 = pneg %p70
      %p188 = scmp.lt.s32.totalorder %s19, 0
      %s189 = scalar_select %p188, %s19, 0
      %s190 = scalar_lea.vmem %s2, %s189
      %p191 = pneg %p99
      %p192 = pneg %p96
      %p193 = pneg %p127
      %p194 = pneg %p124
      %s195 = smul.u32 32, %s18
      %p196 = scmp.lt.s32.totalorder %s195, 63
      %s197 = scalar_select %p196, %s195, 63
      %p198 = scmp.lt.s32.totalorder %s19, 0
      %s199 = scalar_select %p198, %s19, 0
      %s200 = sadd.s32 %s199, %s197
      %s201 = smul.addr %s200, 4
      %s202 = scalar_lea.vmem %s3, %s201
      %s203 = smul.u32 32, %s18
      %p204 = scmp.lt.s32.totalorder %s203, 63
      %s205 = scalar_select %p204, %s203, 63
      %s206 = smul.addr %s205, 4
      %s207 = scalar_lea.vmem %s0, %s206
      %s208 = smul.u32 32, %s18
      %p209 = scmp.lt.s32.totalorder %s19, 0
      %s210 = scalar_select %p209, %s19, 0
      %s211 = smul.addr %s210, 4
      %s212 = scalar_lea.vmem %s1, %s211
      %p213 = scmp.lt.s32.totalorder %s19, 0
      %s214 = scalar_select %p213, %s19, 0
      %s215 = scalar_lea.vmem %s2, %s214
      %s216 = smul.u32 32, %s18
      %p217 = scmp.lt.s32.totalorder %s216, 63
      %s218 = scalar_select %p217, %s216, 63
      %p219 = scmp.lt.s32.totalorder %s19, 0
      %s220 = scalar_select %p219, %s19, 0
      %s221 = sadd.s32 %s220, %s218
      %s222 = smul.addr %s221, 4
      %s223 = scalar_lea.vmem %s3, %s222
      %s224 = smul.u32 32, %s18
      %v226 = vld [vmem:[%s207] sm:$0xf]
      %v227 = vld [vmem:[%s207 + $0x4] sm:$0xf]
      %v228 = vld [vmem:[%s207 + $0x8] sm:$0xf]
      %v229 = vld [vmem:[%s207 + $0xc] sm:$0xf]
      %v230 = vld [vmem:[%s207 + $0x10] sm:$0xf]
      %v231 = vld [vmem:[%s207 + $0x14] sm:$0xf]
      %v232 = vld [vmem:[%s207 + $0x18] sm:$0xf]
      %v233 = vld [vmem:[%s207 + $0x1c] sm:$0xf]
      %v234 = vld [vmem:[%s207 + $0x20] sm:$0xf]
      %v235 = vld [vmem:[%s207 + $0x24] sm:$0xf]
      %v236 = vld [vmem:[%s207 + $0x28] sm:$0xf]
      %v237 = vld [vmem:[%s207 + $0x2c] sm:$0xf]
      %v238 = vld [vmem:[%s207 + $0x30] sm:$0xf]
      %v239 = vld [vmem:[%s207 + $0x34] sm:$0xf]
      %v240 = vld [vmem:[%s207 + $0x38] sm:$0xf]
      %v241 = vld [vmem:[%s207 + $0x3c] sm:$0xf]
      %v242 = vld [vmem:[%s207 + $0x40] sm:$0xf]
      %v243 = vld [vmem:[%s207 + $0x44] sm:$0xf]
      %v244 = vld [vmem:[%s207 + $0x48] sm:$0xf]
      %v245 = vld [vmem:[%s207 + $0x4c] sm:$0xf]
      %v246 = vld [vmem:[%s207 + $0x50] sm:$0xf]
      %v247 = vld [vmem:[%s207 + $0x54] sm:$0xf]
      %v248 = vld [vmem:[%s207 + $0x58] sm:$0xf]
      %v249 = vld [vmem:[%s207 + $0x5c] sm:$0xf]
      %v250 = vld [vmem:[%s207 + $0x60] sm:$0xf]
      %v251 = vld [vmem:[%s207 + $0x64] sm:$0xf]
      %v252 = vld [vmem:[%s207 + $0x68] sm:$0xf]
      %v253 = vld [vmem:[%s207 + $0x6c] sm:$0xf]
      %v254 = vld [vmem:[%s207 + $0x70] sm:$0xf]
      %v255 = vld [vmem:[%s207 + $0x74] sm:$0xf]
      %v256 = vld [vmem:[%s207 + $0x78] sm:$0xf]
      %v257 = vld [vmem:[%s207 + $0x7c] sm:$0xf]
      %v258 = vld [vmem:[%s212] sm:$0xf]
      %v259 = vld [vmem:[%s212 + $0x4] sm:$0xf]
      %v260 = vld [vmem:[%s212 + $0x8] sm:$0xf]
      %v261 = vld [vmem:[%s212 + $0xc] sm:$0xf]
      %v262 = vld [vmem:[%s212 + $0x10] sm:$0xf]
      %v263 = vld [vmem:[%s212 + $0x14] sm:$0xf]
      %v264 = vld [vmem:[%s212 + $0x18] sm:$0xf]
      %v265 = vld [vmem:[%s212 + $0x1c] sm:$0xf]
      %v266 = vld [vmem:[%s212 + $0x20] sm:$0xf]
      %v267 = vld [vmem:[%s212 + $0x24] sm:$0xf]
      %v268 = vld [vmem:[%s212 + $0x28] sm:$0xf]
      %v269 = vld [vmem:[%s212 + $0x2c] sm:$0xf]
      %v270 = vld [vmem:[%s212 + $0x30] sm:$0xf]
      %v271 = vld [vmem:[%s212 + $0x34] sm:$0xf]
      %v272 = vld [vmem:[%s212 + $0x38] sm:$0xf]
      %v273 = vld [vmem:[%s212 + $0x3c] sm:$0xf]
      %v274 = vld [vmem:[%s215] sm:$0x1]
      %v276 = vlaneseq
      %v277 = vshrl.u32 %v276, 7
      %v278 = vsub.s32 0, %v277
      %v279 = vrot.slane %v274, %v278
      %v313 = vunpack.c.l.b16 %v226
      %v314 = vunpack.c.l.b16 %v227
      %v315 = vunpack.c.l.b16 %v228
      %v316 = vunpack.c.l.b16 %v229
      %v317 = vunpack.c.l.b16 %v230
      %v318 = vunpack.c.l.b16 %v231
      %v319 = vunpack.c.l.b16 %v232
      %v320 = vunpack.c.l.b16 %v233
      %v321 = vunpack.c.l.b16 %v234
      %v322 = vunpack.c.l.b16 %v235
      %v323 = vunpack.c.l.b16 %v236
      %v324 = vunpack.c.l.b16 %v237
      %v325 = vunpack.c.l.b16 %v238
      %v326 = vunpack.c.l.b16 %v239
      %v327 = vunpack.c.l.b16 %v240
      %v328 = vunpack.c.l.b16 %v241
      %v329 = vunpack.c.l.b16 %v242
      %v330 = vunpack.c.l.b16 %v243
      %v331 = vunpack.c.l.b16 %v244
      %v332 = vunpack.c.l.b16 %v245
      %v333 = vunpack.c.l.b16 %v246
      %v334 = vunpack.c.l.b16 %v247
      %v335 = vunpack.c.l.b16 %v248
      %v336 = vunpack.c.l.b16 %v249
      %v337 = vunpack.c.l.b16 %v250
      %v338 = vunpack.c.l.b16 %v251
      %v339 = vunpack.c.l.b16 %v252
      %v340 = vunpack.c.l.b16 %v253
      %v341 = vunpack.c.l.b16 %v254
      %v342 = vunpack.c.l.b16 %v255
      %v343 = vunpack.c.l.b16 %v256
      %v344 = vunpack.c.l.b16 %v257
      %v345 = vpack.c.b16 %v314, %v313
      %v346 = vpack.c.b16 %v316, %v315
      %v347 = vpack.c.b16 %v318, %v317
      %v348 = vpack.c.b16 %v320, %v319
      %v349 = vpack.c.b16 %v322, %v321
      %v350 = vpack.c.b16 %v324, %v323
      %v351 = vpack.c.b16 %v326, %v325
      %v352 = vpack.c.b16 %v328, %v327
      %v353 = vpack.c.b16 %v330, %v329
      %v354 = vpack.c.b16 %v332, %v331
      %v355 = vpack.c.b16 %v334, %v333
      %v356 = vpack.c.b16 %v336, %v335
      %v357 = vpack.c.b16 %v338, %v337
      %v358 = vpack.c.b16 %v340, %v339
      %v359 = vpack.c.b16 %v342, %v341
      %v360 = vpack.c.b16 %v344, %v343
      %v393 = vunpack.c.l.b16 %v258
      %v394 = vunpack.c.l.b16 %v259
      %v395 = vunpack.c.l.b16 %v260
      %v396 = vunpack.c.l.b16 %v261
      %v397 = vunpack.c.l.b16 %v262
      %v398 = vunpack.c.l.b16 %v263
      %v399 = vunpack.c.l.b16 %v264
      %v400 = vunpack.c.l.b16 %v265
      %v401 = vunpack.c.l.b16 %v266
      %v402 = vunpack.c.l.b16 %v267
      %v403 = vunpack.c.l.b16 %v268
      %v404 = vunpack.c.l.b16 %v269
      %v405 = vunpack.c.l.b16 %v270
      %v406 = vunpack.c.l.b16 %v271
      %v407 = vunpack.c.l.b16 %v272
      %v408 = vunpack.c.l.b16 %v273
      %v409 = vpack.c.b16 %v394, %v393
      %v410 = vpack.c.b16 %v396, %v395
      %v411 = vpack.c.b16 %v398, %v397
      %v412 = vpack.c.b16 %v400, %v399
      %v413 = vpack.c.b16 %v402, %v401
      %v414 = vpack.c.b16 %v404, %v403
      %v415 = vpack.c.b16 %v406, %v405
      %v416 = vpack.c.b16 %v408, %v407
      %425 = vmatprep.subr.bf16.mxu0 0
      %426 = vmatpush1.bf16.msra.mxu0 %v409
      %427 = vmatprep.subr.bf16.mxu0 0
      %428 = vmatpush1.bf16.msra.mxu0 %v410
      %429 = vmatprep.subr.bf16.mxu0 0
      %430 = vmatpush1.bf16.msra.mxu0 %v411
      %431 = vmatprep.subr.bf16.mxu0 0
      %432 = vmatpush1.bf16.msra.mxu0 %v412
      %433 = vmatprep.subr.bf16.mxu0 0
      %434 = vmatpush1.bf16.msra.mxu0 %v413
      %435 = vmatprep.subr.bf16.mxu0 0
      %436 = vmatpush1.bf16.msra.mxu0 %v414
      %437 = vmatprep.subr.bf16.mxu0 0
      %438 = vmatpush1.bf16.msra.mxu0 %v415
      %439 = vmatprep.subr.bf16.mxu0 0
      %440 = vmatpush1.bf16.msra.mxu0 %v416
      %441 = vmatprep.subr.bf16.mxu0 0
      %442 = vmatpush1.bf16.msra.mxu0 0
      %443 = vmatprep.subr.bf16.mxu0 0
      %444 = vmatpush1.bf16.msra.mxu0 0
      %445 = vmatprep.subr.bf16.mxu0 0
      %446 = vmatpush1.bf16.msra.mxu0 0
      %447 = vmatprep.subr.bf16.mxu0 0
      %448 = vmatpush1.bf16.msra.mxu0 0
      %449 = vmatprep.subr.bf16.mxu0 0
      %450 = vmatpush1.bf16.msra.mxu0 0
      %451 = vmatprep.subr.bf16.mxu0 0
      %452 = vmatpush1.bf16.msra.mxu0 0
      %453 = vmatprep.subr.bf16.mxu0 0
      %454 = vmatpush1.bf16.msra.mxu0 0
      %455 = vmatprep.subr.bf16.mxu0 0
      %456 = vmatpush1.bf16.msra.mxu0 0
      %457 = vmatprep.mubr.bf16.mxu0 0
      %458 = vmatmul.mubr.bf16.gmra.mrb[0].mxu0 %v345
      %v459 = vpop.f32.mrb[0].mxu0
      %v460 = vadd.f32 %v279, %v459
      %v461 = vpop.f32.mrb[0].mxu0
      %v462 = vpop.f32.mrb[0].mxu0
      %v463 = vadd.f32 %v279, %v462
      %v464 = vpop.f32.mrb[0].mxu0
      %465 = vmatprep.mubr.bf16.mxu0 0
      %466 = vmatmul.mubr.bf16.gmra.mrb[0].mxu0 %v346
      %v467 = vpop.f32.mrb[0].mxu0
      %v468 = vadd.f32 %v279, %v467
      %v469 = vpop.f32.mrb[0].mxu0
      %v470 = vpop.f32.mrb[0].mxu0
      %v471 = vadd.f32 %v279, %v470
      %v472 = vpop.f32.mrb[0].mxu0
      %473 = vmatprep.mubr.bf16.mxu0 0
      %474 = vmatmul.mubr.bf16.gmra.mrb[0].mxu0 %v347
      %v475 = vpop.f32.mrb[0].mxu0
      %v476 = vadd.f32 %v279, %v475
      %v477 = vpop.f32.mrb[0].mxu0
      %v478 = vpop.f32.mrb[0].mxu0
      %v479 = vadd.f32 %v279, %v478
      %v480 = vpop.f32.mrb[0].mxu0
      %481 = vmatprep.mubr.bf16.mxu0 0
      %482 = vmatmul.mubr.bf16.gmra.mrb[0].mxu0 %v348
      %v483 = vpop.f32.mrb[0].mxu0
      %v484 = vadd.f32 %v279, %v483
      %v485 = vpop.f32.mrb[0].mxu0
      %v486 = vpop.f32.mrb[0].mxu0
      %v487 = vadd.f32 %v279, %v486
      %v488 = vpop.f32.mrb[0].mxu0
      %489 = vmatprep.mubr.bf16.mxu0 0
      %490 = vmatmul.mubr.bf16.gmra.mrb[0].mxu0 %v349
      %v491 = vpop.f32.mrb[0].mxu0
      %v492 = vadd.f32 %v279, %v491
      %v493 = vpop.f32.mrb[0].mxu0
      %v494 = vpop.f32.mrb[0].mxu0
      %v495 = vadd.f32 %v279, %v494
      %v496 = vpop.f32.mrb[0].mxu0
      %497 = vmatprep.mubr.bf16.mxu0 0
      %498 = vmatmul.mubr.bf16.gmra.mrb[0].mxu0 %v350
      %v499 = vpop.f32.mrb[0].mxu0
      %v500 = vadd.f32 %v279, %v499
      %v501 = vpop.f32.mrb[0].mxu0
      %v502 = vpop.f32.mrb[0].mxu0
      %v503 = vadd.f32 %v279, %v502
      %v504 = vpop.f32.mrb[0].mxu0
      %505 = vmatprep.mubr.bf16.mxu0 0
      %506 = vmatmul.mubr.bf16.gmra.mrb[0].mxu0 %v351
      %v507 = vpop.f32.mrb[0].mxu0
      %v508 = vadd.f32 %v279, %v507
      %v509 = vpop.f32.mrb[0].mxu0
      %v510 = vpop.f32.mrb[0].mxu0
      %v511 = vadd.f32 %v279, %v510
      %v512 = vpop.f32.mrb[0].mxu0
      %513 = vmatprep.mubr.bf16.mxu0 0
      %514 = vmatmul.mubr.bf16.gmra.mrb[0].mxu0 %v352
      %v515 = vpop.f32.mrb[0].mxu0
      %v516 = vadd.f32 %v279, %v515
      %v517 = vpop.f32.mrb[0].mxu0
      %v518 = vpop.f32.mrb[0].mxu0
      %v519 = vadd.f32 %v279, %v518
      %v520 = vpop.f32.mrb[0].mxu0
      %521 = vmatprep.mubr.bf16.mxu0 0
      %522 = vmatmul.mubr.bf16.gmra.mrb[0].mxu0 %v353
      %v523 = vpop.f32.mrb[0].mxu0
      %v524 = vadd.f32 %v279, %v523
      %v525 = vpop.f32.mrb[0].mxu0
      %v526 = vpop.f32.mrb[0].mxu0
      %v527 = vadd.f32 %v279, %v526
      %v528 = vpop.f32.mrb[0].mxu0
      %529 = vmatprep.mubr.bf16.mxu0 0
      %530 = vmatmul.mubr.bf16.gmra.mrb[0].mxu0 %v354
      %v531 = vpop.f32.mrb[0].mxu0
      %v532 = vadd.f32 %v279, %v531
      %v533 = vpop.f32.mrb[0].mxu0
      %v534 = vpop.f32.mrb[0].mxu0
      %v535 = vadd.f32 %v279, %v534
      %v536 = vpop.f32.mrb[0].mxu0
      %537 = vmatprep.mubr.bf16.mxu0 0
      %538 = vmatmul.mubr.bf16.gmra.mrb[0].mxu0 %v355
      %v539 = vpop.f32.mrb[0].mxu0
      %v540 = vadd.f32 %v279, %v539
      %v541 = vpop.f32.mrb[0].mxu0
      %v542 = vpop.f32.mrb[0].mxu0
      %v543 = vadd.f32 %v279, %v542
      %v544 = vpop.f32.mrb[0].mxu0
      %545 = vmatprep.mubr.bf16.mxu0 0
      %546 = vmatmul.mubr.bf16.gmra.mrb[0].mxu0 %v356
      %v547 = vpop.f32.mrb[0].mxu0
      %v548 = vadd.f32 %v279, %v547
      %v549 = vpop.f32.mrb[0].mxu0
      %v550 = vpop.f32.mrb[0].mxu0
      %v551 = vadd.f32 %v279, %v550
      %v552 = vpop.f32.mrb[0].mxu0
      %553 = vmatprep.mubr.bf16.mxu0 0
      %554 = vmatmul.mubr.bf16.gmra.mrb[0].mxu0 %v357
      %v555 = vpop.f32.mrb[0].mxu0
      %v556 = vadd.f32 %v279, %v555
      %v557 = vpop.f32.mrb[0].mxu0
      %v558 = vpop.f32.mrb[0].mxu0
      %v559 = vadd.f32 %v279, %v558
      %v560 = vpop.f32.mrb[0].mxu0
      %561 = vmatprep.mubr.bf16.mxu0 0
      %562 = vmatmul.mubr.bf16.gmra.mrb[0].mxu0 %v358
      %v563 = vpop.f32.mrb[0].mxu0
      %v564 = vadd.f32 %v279, %v563
      %v565 = vpop.f32.mrb[0].mxu0
      %v566 = vpop.f32.mrb[0].mxu0
      %v567 = vadd.f32 %v279, %v566
      %v568 = vpop.f32.mrb[0].mxu0
      %569 = vmatprep.mubr.bf16.mxu0 0
      %570 = vmatmul.mubr.bf16.gmra.mrb[0].mxu0 %v359
      %v571 = vpop.f32.mrb[0].mxu0
      %v572 = vadd.f32 %v279, %v571
      %v573 = vpop.f32.mrb[0].mxu0
      %v574 = vpop.f32.mrb[0].mxu0
      %v575 = vadd.f32 %v279, %v574
      %v576 = vpop.f32.mrb[0].mxu0
      %577 = vmatprep.mubr.bf16.mxu0 0
      %578 = vmatmul.mubr.bf16.gmra.mrb[0].mxu0 %v360
      %v579 = vpop.f32.mrb[0].mxu0
      %v580 = vadd.f32 %v279, %v579
      %v581 = vpop.f32.mrb[0].mxu0
      %v582 = vpop.f32.mrb[0].mxu0
      %v583 = vadd.f32 %v279, %v582
      %v584 = vpop.f32.mrb[0].mxu0
      %585 = vdwg.mxu0
      %v586 = vpack.c.bf16 %v463, %v460
      %v587 = vpack.c.bf16 %v471, %v468
      %v588 = vpack.c.bf16 %v479, %v476
      %v589 = vpack.c.bf16 %v487, %v484
      %v590 = vpack.c.bf16 %v495, %v492
      %v591 = vpack.c.bf16 %v503, %v500
      %v592 = vpack.c.bf16 %v511, %v508
      %v593 = vpack.c.bf16 %v519, %v516
      %v594 = vpack.c.bf16 %v527, %v524
      %v595 = vpack.c.bf16 %v535, %v532
      %v596 = vpack.c.bf16 %v543, %v540
      %v597 = vpack.c.bf16 %v551, %v548
      %v598 = vpack.c.bf16 %v559, %v556
      %v599 = vpack.c.bf16 %v567, %v564
      %v600 = vpack.c.bf16 %v575, %v572
      %v601 = vpack.c.bf16 %v583, %v580
      %v618 = vunpack.c.l.b16 %v586
      %v619 = vunpack.c.h.b16 %v586
      %v620 = vunpack.c.l.b16 %v587
      %v621 = vunpack.c.h.b16 %v587
      %v622 = vunpack.c.l.b16 %v588
      %v623 = vunpack.c.h.b16 %v588
      %v624 = vunpack.c.l.b16 %v589
      %v625 = vunpack.c.h.b16 %v589
      %v626 = vunpack.c.l.b16 %v590
      %v627 = vunpack.c.h.b16 %v590
      %v628 = vunpack.c.l.b16 %v591
      %v629 = vunpack.c.h.b16 %v591
      %v630 = vunpack.c.l.b16 %v592
      %v631 = vunpack.c.h.b16 %v592
      %v632 = vunpack.c.l.b16 %v593
      %v633 = vunpack.c.h.b16 %v593
      %v634 = vunpack.c.l.b16 %v594
      %v635 = vunpack.c.h.b16 %v594
      %v636 = vunpack.c.l.b16 %v595
      %v637 = vunpack.c.h.b16 %v595
      %v638 = vunpack.c.l.b16 %v596
      %v639 = vunpack.c.h.b16 %v596
      %v640 = vunpack.c.l.b16 %v597
      %v641 = vunpack.c.h.b16 %v597
      %v642 = vunpack.c.l.b16 %v598
      %v643 = vunpack.c.h.b16 %v598
      %v644 = vunpack.c.l.b16 %v599
      %v645 = vunpack.c.h.b16 %v599
      %v646 = vunpack.c.l.b16 %v600
      %v647 = vunpack.c.h.b16 %v600
      %v648 = vunpack.c.l.b16 %v601
      %v649 = vunpack.c.h.b16 %v601
      %v650 = vpack.c.b16 %v618, %v618
      %v651 = vpack.c.b16 %v619, %v619
      %v652 = vpack.c.b16 %v620, %v620
      %v653 = vpack.c.b16 %v621, %v621
      %v654 = vpack.c.b16 %v622, %v622
      %v655 = vpack.c.b16 %v623, %v623
      %v656 = vpack.c.b16 %v624, %v624
      %v657 = vpack.c.b16 %v625, %v625
      %v658 = vpack.c.b16 %v626, %v626
      %v659 = vpack.c.b16 %v627, %v627
      %v660 = vpack.c.b16 %v628, %v628
      %v661 = vpack.c.b16 %v629, %v629
      %v662 = vpack.c.b16 %v630, %v630
      %v663 = vpack.c.b16 %v631, %v631
      %v664 = vpack.c.b16 %v632, %v632
      %v665 = vpack.c.b16 %v633, %v633
      %v666 = vpack.c.b16 %v634, %v634
      %v667 = vpack.c.b16 %v635, %v635
      %v668 = vpack.c.b16 %v636, %v636
      %v669 = vpack.c.b16 %v637, %v637
      %v670 = vpack.c.b16 %v638, %v638
      %v671 = vpack.c.b16 %v639, %v639
      %v672 = vpack.c.b16 %v640, %v640
      %v673 = vpack.c.b16 %v641, %v641
      %v674 = vpack.c.b16 %v642, %v642
      %v675 = vpack.c.b16 %v643, %v643
      %v676 = vpack.c.b16 %v644, %v644
      %v677 = vpack.c.b16 %v645, %v645
      %v678 = vpack.c.b16 %v646, %v646
      %v679 = vpack.c.b16 %v647, %v647
      %v680 = vpack.c.b16 %v648, %v648
      %v681 = vpack.c.b16 %v649, %v649
      %714 = vst [vmem:[%s223] sm:$0xf] %v650
      %715 = vst [vmem:[%s223 + $0x4] sm:$0xf] %v651
      %716 = vst [vmem:[%s223 + $0x8] sm:$0xf] %v652
      %717 = vst [vmem:[%s223 + $0xc] sm:$0xf] %v653
      %718 = vst [vmem:[%s223 + $0x10] sm:$0xf] %v654
      %719 = vst [vmem:[%s223 + $0x14] sm:$0xf] %v655
      %720 = vst [vmem:[%s223 + $0x18] sm:$0xf] %v656
      %721 = vst [vmem:[%s223 + $0x1c] sm:$0xf] %v657
      %722 = vst [vmem:[%s223 + $0x20] sm:$0xf] %v658
      %723 = vst [vmem:[%s223 + $0x24] sm:$0xf] %v659
      %724 = vst [vmem:[%s223 + $0x28] sm:$0xf] %v660
      %725 = vst [vmem:[%s223 + $0x2c] sm:$0xf] %v661
      %726 = vst [vmem:[%s223 + $0x30] sm:$0xf] %v662
      %727 = vst [vmem:[%s223 + $0x34] sm:$0xf] %v663
      %728 = vst [vmem:[%s223 + $0x38] sm:$0xf] %v664
      %729 = vst [vmem:[%s223 + $0x3c] sm:$0xf] %v665
      %730 = vst [vmem:[%s223 + $0x40] sm:$0xf] %v666
      %731 = vst [vmem:[%s223 + $0x44] sm:$0xf] %v667
      %732 = vst [vmem:[%s223 + $0x48] sm:$0xf] %v668
      %733 = vst [vmem:[%s223 + $0x4c] sm:$0xf] %v669
      %734 = vst [vmem:[%s223 + $0x50] sm:$0xf] %v670
      %735 = vst [vmem:[%s223 + $0x54] sm:$0xf] %v671
      %736 = vst [vmem:[%s223 + $0x58] sm:$0xf] %v672
      %737 = vst [vmem:[%s223 + $0x5c] sm:$0xf] %v673
      %738 = vst [vmem:[%s223 + $0x60] sm:$0xf] %v674
      %739 = vst [vmem:[%s223 + $0x64] sm:$0xf] %v675
      %740 = vst [vmem:[%s223 + $0x68] sm:$0xf] %v676
      %741 = vst [vmem:[%s223 + $0x6c] sm:$0xf] %v677
      %742 = vst [vmem:[%s223 + $0x70] sm:$0xf] %v678
      %743 = vst [vmem:[%s223 + $0x74] sm:$0xf] %v679
      %744 = vst [vmem:[%s223 + $0x78] sm:$0xf] %v680
      %745 = vst [vmem:[%s223 + $0x7c] sm:$0xf] %v681
      %s746 = smul.u32 32, %s18
      %p747 = scmp.lt.s32.totalorder %s746, 63
      %s748 = scalar_select %p747, %s746, 63
      %p749 = scmp.lt.s32.totalorder %s19, 0
      %s750 = scalar_select %p749, %s19, 0
      %s751 = sadd.s32 %s750, %s748
      %s752 = smul.addr %s751, 4
      %s753 = scalar_lea.vmem %s3, %s752
      // Predicated region
      $region33: #{local_enhancer_forward.17} parent=31 // pred_check
        %p754 = pneg %p124
      $region34: #{local_enhancer_forward.17} parent=31 // pred_check_branch
        %756 = sbr.rel (%p754) target = $region36
      $region35: #{local_enhancer_forward.17} parent=31 // pred_region
        %s757 = smul.u32 32, %s18
      $region36: #{local_enhancer_forward.17} parent=31 // pred_fallthru
        _
    $region32: #{local_enhancer_forward.17} parent=5 // pred_fallthru
      _
    %p758 = scmp.le.s32.totalorder 2, %s9
    // Predicated region
    $region37: #{local_enhancer_forward.17} parent=5 // pred_check
      %p759 = pneg %p758
    $region38: #{local_enhancer_forward.17} parent=5 // pred_check_branch
      %761 = sbr.rel (%p759) target = $region40
    $region39: #{local_enhancer_forward.17} parent=5 // pred_region
      %s762 = ssub.s32 %s9, 2
      // Predicated region
      $region41: #{local_enhancer_forward.17} parent=39 // pred_check
        %p763 = pneg %p130
      $region42: #{local_enhancer_forward.17} parent=39 // pred_check_branch
        %765 = sbr.rel (%p763) target = $region44
      $region43: #{local_enhancer_forward.17} parent=39 // pred_region
        %s766 = smul.u32 32, %s20
        %p767 = scmp.lt.s32.totalorder %s766, 63
        %s768 = scalar_select %p767, %s766, 63
        %p769 = scmp.lt.s32.totalorder %s21, 0
        %s770 = scalar_select %p769, %s21, 0
        %s771 = sadd.s32 %s770, %s768
        %s772 = smul.addr %s771, 4
        %s773 = scalar_lea.vmem %s3, %s772
      $region44: #{local_enhancer_forward.17} parent=39 // pred_fallthru
        _
    $region40: #{local_enhancer_forward.17} parent=5 // pred_fallthru
      _
  $region6: #{local_enhancer_forward.17} parent=0 // loop_footer
    %s13 = sadd.s32 1, %s9
  $region7: #{local_enhancer_forward.17} parent=0 // loop_footer_branch
    %8 = sbr.rel target = $region3
  $region8: #{local_enhancer_forward.17} parent=0 // loop_exit
    _

</llo_original>
